<compile_context>
chip_gen: v7x
topology: tpu7x:2x2x1
jax: 0.10.0
libtpu: 0.0.40
codegen_flags: <defaults>
</compile_context>

<pallas_src>
from functools import partial

import jax
import jax.numpy as jnp
import numpy as np
from jax import lax
from jax.experimental import pallas as pl
from jax.experimental.pallas import tpu as pltpu

LN_EPS = 1e-5                    # torch.nn.LayerNorm default eps
NEG_INF = -1e30                  # finite "-inf": avoids inf-inf NaNs in online softmax
VMEM_LIMIT = 48 * 1024 * 1024    # below v7x's 64 MiB physical VMEM, above 16/32 MiB scoped defaults


def _round_up(n, m):
    return ((n + m - 1) // m) * m


def _default_row_tile():
    """Generation-aware row tile: 128 on v5e (1 vst slot, small scoped VMEM) and
    v7x (64 MiB VMEM -> smaller live MLP intermediates), 256 on v6e/others."""
    kind = ""
    try:
        kind = jax.devices()[0].device_kind.lower()
    except Exception:
        pass
    if "v5 lite" in kind or "v5e" in kind or "v7" in kind:
        return 128
    return 256


def _choose_row_tile(s, max_tile):
    """Pick a row tile from a divisor-friendly set, minimizing padding waste."""
    cands = [c for c in (256, 128, 64, 32, 16, 8) if c <= max_tile] or [8]
    best, best_pad = cands[0], _round_up(s, cands[0]) - s
    for c in cands:  # descending -> ties keep the largest tile
        pad = _round_up(s, c) - s
        if pad < best_pad:
            best, best_pad = c, pad
    return best


def _gelu_tanh(x):
    # GELU(approximate='tanh'), same formula as torch.
    c = 0.7978845608028654  # sqrt(2/pi)
    return 0.5 * x * (1.0 + jnp.tanh(c * (x + 0.044715 * x * x * x)))


def _rotate_half(x, cos, sin):
    # x, cos, sin: (T, dh) f32; rotate-half RoPE (same convention as torch rotary helper).
    half = x.shape[-1] // 2
    rot = jnp.concatenate([-x[:, half:], x[:, :half]], axis=-1)
    return x * cos + rot * sin


def _apply_rope(x, cos, sin):
    # Reference-path RoPE: x (B, H, S, dh); cos/sin (S, dh).
    d = x.shape[-1]
    x1, x2 = x[..., : d // 2], x[..., d // 2:]
    rot = jnp.concatenate([-x2, x1], axis=-1)
    return x * cos[None, None, :, :] + rot * sin[None, None, :, :]


# ---------------------------------------------------------------------------
# Kernel 1: LayerNorm1 + adaLN modulate (folded affine) + QKV projection
#           -> three bf16 outputs q, k, v of shape (B, Lp, D)
# ---------------------------------------------------------------------------

def _ln_mod_qkv_kernel(x_ref, mod_ref, w_ref, q_ref, k_ref, v_ref):
    # x: (TL, D); mod: (2, D) f32 [row0 = eff scale, row1 = eff shift]; w: (D, 3D) bf16
    dim = q_ref.shape[-1]
    x = x_ref[...].astype(jnp.float32)
    mean = jnp.mean(x, axis=-1, keepdims=True)
    xc = x - mean
    var = jnp.mean(xc * xc, axis=-1, keepdims=True)      # centered two-pass variance
    ln = xc * lax.rsqrt(var + LN_EPS)
    mod = ln * mod_ref[0:1, :] + mod_ref[1:2, :]          # folded LN affine + adaLN modulate
    out = jnp.dot(mod.astype(w_ref.dtype), w_ref[...], preferred_element_type=jnp.float32)
    q_ref[...] = out[:, :dim].astype(q_ref.dtype)
    k_ref[...] = out[:, dim:2 * dim].astype(k_ref.dtype)
    v_ref[...] = out[:, 2 * dim:].astype(v_ref.dtype)


def _fused_ln_mod_qkv(x, mod1, w, *, row_tile):
    B, Lp, D = x.shape
    TL = row_tile
    grid = (Lp // TL, B)   # B>=2 (or Lp//TL>=2) gives both v7x TensorCores work

    def row(c):
        return pl.BlockSpec((None, TL, c), lambda l, b: (b, l, 0))

    out_sd = jax.ShapeDtypeStruct((B, Lp, D), jnp.bfloat16)   # bf16 qkv intermediates
    return pl.pallas_call(
        _ln_mod_qkv_kernel,
        out_shape=(out_sd, out_sd, out_sd),
        grid=grid,
        in_specs=[
            row(D),
            pl.BlockSpec((None, 2, D), lambda l, b: (b, 0, 0)),
            pl.BlockSpec((D, 3 * D), lambda l, b: (0, 0),
                         pipeline_mode=pl.Buffered(1)),        # constant weight: single buffer
        ],
        out_specs=(row(D), row(D), row(D)),
        compiler_params=pltpu.CompilerParams(
            dimension_semantics=("parallel", "parallel"),
            vmem_limit_bytes=VMEM_LIMIT),
    )(x, mod1, w)


# ---------------------------------------------------------------------------
# Kernel 2: RoPE + flash attention (online softmax, KV-tiled, lane-dense blocks)
# ---------------------------------------------------------------------------

def _flash_attn_kernel(q_ref, k_ref, v_ref, rope_q_ref, rope_k_ref, o_ref,
                       q_sc, m_sc, l_sc, acc_sc,
                       *, n_heads, dh, scale, tk, s_valid, needs_mask):
    # q: (TQ, D); k/v: (TK, D); rope_*: (T, 2*dh) f32 = [cos | sin]; o: (TQ, D)
    ki = pl.program_id(2)
    nk = pl.num_programs(2)
    f32 = jnp.float32

    @pl.when(ki == 0)
    def _():
        m_sc[...] = jnp.full(m_sc.shape, NEG_INF, dtype=m_sc.dtype)
        l_sc[...] = jnp.zeros(l_sc.shape, dtype=l_sc.dtype)
        acc_sc[...] = jnp.zeros(acc_sc.shape, dtype=acc_sc.dtype)
        # RoPE(q) * softmax scale, computed once per q tile and cached in bf16.
        q = q_ref[...].astype(f32)
        cos_q = rope_q_ref[:, :dh]
        sin_q = rope_q_ref[:, dh:]
        parts = []
        for h in range(n_heads):
            qh = q[:, h * dh:(h + 1) * dh]
            parts.append(_rotate_half(qh, cos_q, sin_q) * scale)
        q_sc[...] = jnp.concatenate(parts, axis=-1).astype(q_sc.dtype)

    k = k_ref[...].astype(f32)
    cos_k = rope_k_ref[:, :dh]
    sin_k = rope_k_ref[:, dh:]
    if needs_mask:
        kpos = ki * tk + lax.broadcasted_iota(jnp.int32, (1, tk), 1)
        kmask = kpos < s_valid                                   # (1, TK)

    for h in range(n_heads):
        lo, hi = h * dh, (h + 1) * dh
        kh = _rotate_half(k[:, lo:hi], cos_k, sin_k).astype(q_sc.dtype)
        s = lax.dot_general(q_sc[:, lo:hi], kh,
                            dimension_numbers=(((1,), (1,)), ((), ())),
                            preferred_element_type=f32)          # (TQ, TK)
        if needs_mask:
            s = jnp.where(kmask, s, NEG_INF)
        m_prev = m_sc[:, h:h + 1]
        m_new = jnp.maximum(m_prev, jnp.max(s, axis=-1, keepdims=True))
        alpha = jnp.exp(m_prev - m_new)
        p = jnp.exp(s - m_new)
        l_sc[:, h:h + 1] = alpha * l_sc[:, h:h + 1] + jnp.sum(p, axis=-1, keepdims=True)
        acc_sc[:, lo:hi] = alpha * acc_sc[:, lo:hi] + jnp.dot(
            p.astype(v_ref.dtype), v_ref[:, lo:hi], preferred_element_type=f32)
        m_sc[:, h:h + 1] = m_new

    @pl.when(ki == nk - 1)
    def _():
        parts = []
        for h in range(n_heads):
            inv = pl.reciprocal(l_sc[:, h:h + 1], approx=True)
            parts.append(acc_sc[:, h * dh:(h + 1) * dh] * inv)
        o_ref[...] = jnp.concatenate(parts, axis=-1).astype(o_ref.dtype)   # lane-dense store


def _flash_attention(q, k, v, rope, s_valid, *, n_heads, row_tile):
    # TODO(synk): flex_attention block_mask / ragged varlen paths are not implemented
    # (this covers block_mask=None, full attention, with tail-padding masked).
    B, Lp, D = q.shape
    dh = D // n_heads
    TQ = TK = row_tile
    nq, nk = Lp // TQ, Lp // TK
    kern = partial(_flash_attn_kernel, n_heads=n_heads, dh=dh,
                   scale=1.0 / float(np.sqrt(dh)), tk=TK,
                   s_valid=s_valid, needs_mask=(Lp != s_valid))
    return pl.pallas_call(
        kern,
        out_shape=jax.ShapeDtypeStruct((B, Lp, D), jnp.bfloat16),
        grid=(B, nq, nk),
        in_specs=[
            pl.BlockSpec((None, TQ, D), lambda b, qi, ki: (b, qi, 0)),
            pl.BlockSpec((None, TK, D), lambda b, qi, ki: (b, ki, 0)),
            pl.BlockSpec((None, TK, D), lambda b, qi, ki: (b, ki, 0)),
            pl.BlockSpec((TQ, 2 * dh), lambda b, qi, ki: (qi, 0)),
            pl.BlockSpec((TK, 2 * dh), lambda b, qi, ki: (ki, 0)),
        ],
        out_specs=pl.BlockSpec((None, TQ, D), lambda b, qi, ki: (b, qi, 0)),
        scratch_shapes=[
            pltpu.VMEM((TQ, D), jnp.bfloat16),          # cached RoPE(q) * scale
            pltpu.VMEM((TQ, n_heads), jnp.float32),     # running max m
            pltpu.VMEM((TQ, n_heads), jnp.float32),     # running denom l
            pltpu.VMEM((TQ, D), jnp.float32),           # output accumulator
        ],
        compiler_params=pltpu.CompilerParams(
            dimension_semantics=("parallel", "parallel", "arbitrary"),
            vmem_limit_bytes=VMEM_LIMIT),
    )(q, k, v, rope, rope)


# ---------------------------------------------------------------------------
# Kernel 3: attn-out proj * (1+gate_msa) + residual -> LN2+modulate (folded) ->
#           MLP (fc1 + GELU-tanh + fc2) * (1+gate_mlp) + residual
# ---------------------------------------------------------------------------

def _attnout_mlp_kernel(a_ref, skip_ref, mod_ref, wo_ref, w1_ref, b1_ref, w2_ref, b2_ref,
                        o_ref):
    # a: (TL, D) bf16; skip: (TL, D); mod: (4, D) f32 rows =
    #   [1+gate_msa, eff ln2 scale, eff ln2 shift, 1+gate_mlp]
    # wo: (D, D) bf16; w1: (D, 4D) bf16; b1: (1, 4D) f32; w2: (4D, D) bf16; b2: (1, D) f32
    proj = jnp.dot(a_ref[...], wo_ref[...], preferred_element_type=jnp.float32)
    # NOTE: dropout is treated as eval-mode identity.
    h = proj * mod_ref[0:1, :] + skip_ref[...].astype(jnp.float32)

    mean = jnp.mean(h, axis=-1, keepdims=True)
    hc = h - mean
    var = jnp.mean(hc * hc, axis=-1, keepdims=True)       # centered two-pass variance
    mod = (hc * lax.rsqrt(var + LN_EPS)) * mod_ref[1:2, :] + mod_ref[2:3, :]

    # TODO(synk): for very large D on v7x, chunk the 4D hidden dim in a fori_loop
    # over w1/w2 column/row slices to bound the live (TL, 4D) f32 intermediate.
    m1 = jnp.dot(mod.astype(w1_ref.dtype), w1_ref[...],
                 preferred_element_type=jnp.float32) + b1_ref[...]
    act = _gelu_tanh(m1)
    y = jnp.dot(act.astype(w2_ref.dtype), w2_ref[...],
                preferred_element_type=jnp.float32) + b2_ref[...]

    o_ref[...] = (y * mod_ref[3:4, :] + h).astype(o_ref.dtype)


def _fused_attnout_mlp(a, skip, mod3, wo, w1, b1, w2, b2, *, row_tile):
    B, Lp, D = skip.shape
    C1 = w1.shape[1]
    TL = row_tile
    grid = (Lp // TL, B)

    def row(c):
        return pl.BlockSpec((None, TL, c), lambda l, b: (b, l, 0))

    def wspec(r, c):
        # constant-index weights/biases -> single buffered (no pipelining benefit)
        return pl.BlockSpec((r, c), lambda l, b: (0, 0), pipeline_mode=pl.Buffered(1))

    return pl.pallas_call(
        _attnout_mlp_kernel,
        out_shape=jax.ShapeDtypeStruct((B, Lp, D), skip.dtype),
        grid=grid,
        in_specs=[
            row(D),                                             # attention tile (bf16)
            row(D),                                             # residual (x) tile
            pl.BlockSpec((None, 4, D), lambda l, b: (b, 0, 0)), # packed per-batch vectors
            wspec(D, D), wspec(D, C1), wspec(1, C1), wspec(C1, D), wspec(1, D),
        ],
        out_specs=row(D),
        compiler_params=pltpu.CompilerParams(
            dimension_semantics=("parallel", "parallel"),
            vmem_limit_bytes=VMEM_LIMIT),
    )(a, skip, mod3, wo, w1, b1, w2, b2)


# ---------------------------------------------------------------------------
# Module forward
# ---------------------------------------------------------------------------

def prepare_params(params):
    """One-time (outside jit) cast/pack: bf16 MXU weights, f32 small params."""
    f32, bf16 = jnp.float32, jnp.bfloat16
    return {
        "ln1_g": params["ln1_g"].astype(f32).reshape(1, -1),
        "ln1_b": params["ln1_b"].astype(f32).reshape(1, -1),
        "ln2_g": params["ln2_g"].astype(f32).reshape(1, -1),
        "ln2_b": params["ln2_b"].astype(f32).reshape(1, -1),
        "qkv_w": params["qkv_w"].astype(bf16),
        "out_w": params["out_w"].astype(bf16),
        "mlp_w1": params["mlp_w1"].astype(bf16),
        "mlp_b1": params["mlp_b1"].astype(f32).reshape(1, -1),
        "mlp_w2": params["mlp_w2"].astype(bf16),
        "mlp_b2": params["mlp_b2"].astype(f32).reshape(1, -1),
        "ada_w": params["ada_w"].astype(f32),
        "ada_b": params["ada_b"].astype(f32).reshape(1, -1),
    }


@partial(jax.jit, static_argnames=("n_heads", "row_tile"))
def ddit_block(params, x, rotary_cos_sin, c, *, n_heads, block_mask=None,
               offsets=None, row_tile=None):
    if offsets is not None or block_mask is not None:
        # TODO(synk): ragged `offsets` path (per-segment modulation + varlen attention)
        # and flex_attention block_mask are not implemented.
        raise NotImplementedError("offsets / block_mask paths not implemented")

    B, S, D = x.shape
    dh = D // n_heads
    f32 = jnp.float32

    if row_tile is None:
        row_tile = _default_row_tile()
    TL = _choose_row_tile(S, row_tile)
    Lp = _round_up(S, TL)
    pad = Lp - S

    # adaLN projection: tiny matmul, left to XLA (no grid=(1,) pallas_call).
    mods = (c.astype(f32) @ params["ada_w"]) + params["ada_b"]
    shift_msa, scale_msa, gate_msa, shift_mlp, scale_mlp, gate_mlp = jnp.split(mods, 6, axis=-1)

    # Fold LayerNorm affine + adaLN modulation into a single per-batch scale/shift,
    # and pack per-batch vectors into one tensor per kernel (one wide DMA per step).
    eff1_s = params["ln1_g"] * (1.0 + scale_msa)
    eff1_b = params["ln1_b"] * (1.0 + scale_msa) + shift_msa
    mod1 = jnp.stack([eff1_s, eff1_b], axis=1)                               # (B, 2, D)
    eff2_s = params["ln2_g"] * (1.0 + scale_mlp)
    eff2_b = params["ln2_b"] * (1.0 + scale_mlp) + shift_mlp
    mod3 = jnp.stack([1.0 + gate_msa, eff2_s, eff2_b, 1.0 + gate_mlp], axis=1)  # (B, 4, D)

    x_p = jnp.pad(x, ((0, 0), (0, pad), (0, 0))) if pad else x

    # --- Kernel 1: LN1 + modulate + QKV projection -> bf16 q/k/v (heads in lanes) ---
    q, k, v = _fused_ln_mod_qkv(x_p, mod1, params["qkv_w"], row_tile=TL)

    # RoPE tables packed [cos | sin] -> one lane-dense (T, 2*dh) tile per row block.
    cos, sin = rotary_cos_sin
    rope = jnp.concatenate([cos.astype(f32), sin.astype(f32)], axis=-1)      # (S, 2*dh)
    if pad:
        rope = jnp.pad(rope, ((0, pad), (0, 0)))

    # --- Kernel 2: RoPE + flash attention (padded keys masked inside the kernel) ---
    attn = _flash_attention(q, k, v, rope, S, n_heads=n_heads, row_tile=TL)

    # --- Kernel 3: out-proj*gate + residual -> LN2+modulate -> MLP*gate + residual ---
    out = _fused_attnout_mlp(attn, x_p, mod3, params["out_w"], params["mlp_w1"],
                             params["mlp_b1"], params["mlp_w2"], params["mlp_b2"],
                             row_tile=TL)
    return out[:, :S] if pad else out


# ---------------------------------------------------------------------------
# Plain-JAX reference (f32)
# ---------------------------------------------------------------------------

def ddit_block_ref(params, x, rotary_cos_sin, c, *, n_heads):
    B, S, D = x.shape
    dh = D // n_heads
    mods = c @ params["ada_w"] + params["ada_b"]
    shift_msa, scale_msa, gate_msa, shift_mlp, scale_mlp, gate_mlp = jnp.split(mods, 6, axis=-1)

    def ln(t, g, b):
        m = t.mean(-1, keepdims=True)
        v = ((t - m) ** 2).mean(-1, keepdims=True)
        return (t - m) / jnp.sqrt(v + LN_EPS) * g + b

    x_skip = x
    h = ln(x, params["ln1_g"], params["ln1_b"])
    h = h * (1.0 + scale_msa[:, None, :]) + shift_msa[:, None, :]
    qkv = (h @ params["qkv_w"]).reshape(B, S, 3, n_heads, dh)
    q = jnp.transpose(qkv[:, :, 0], (0, 2, 1, 3))
    k = jnp.transpose(qkv[:, :, 1], (0, 2, 1, 3))
    v = jnp.transpose(qkv[:, :, 2], (0, 2, 1, 3))
    cos, sin = rotary_cos_sin
    q = _apply_rope(q, cos, sin)
    k = _apply_rope(k, cos, sin)
    s = jnp.einsum("bhqd,bhkd->bhqk", q, k) / np.sqrt(dh)
    p = jax.nn.softmax(s, axis=-1)
    o = jnp.einsum("bhqk,bhkd->bhqd", p, v)
    o = jnp.transpose(o, (0, 2, 1, 3)).reshape(B, S, D)
    h1 = (o @ params["out_w"]) * (1.0 + gate_msa[:, None, :]) + x_skip
    g = ln(h1, params["ln2_g"], params["ln2_b"])
    g = g * (1.0 + scale_mlp[:, None, :]) + shift_mlp[:, None, :]
    y = _gelu_tanh(g @ params["mlp_w1"] + params["mlp_b1"]) @ params["mlp_w2"] + params["mlp_b2"]
    return y * (1.0 + gate_mlp[:, None, :]) + h1


# ---------------------------------------------------------------------------
# Params
# ---------------------------------------------------------------------------

def init_params(key, dim, cond_dim, mlp_ratio=4, dtype=jnp.float32):
    ks = jax.random.split(key, 12)
    hidden = mlp_ratio * dim
    return {
        "ln1_g": 1.0 + 0.1 * jax.random.normal(ks[0], (1, dim), dtype),
        "ln1_b": 0.05 * jax.random.normal(ks[1], (1, dim), dtype),
        "ln2_g": 1.0 + 0.1 * jax.random.normal(ks[2], (1, dim), dtype),
        "ln2_b": 0.05 * jax.random.normal(ks[3], (1, dim), dtype),
        "qkv_w": jax.random.normal(ks[4], (dim, 3 * dim), dtype) / np.sqrt(dim),
        "out_w": jax.random.normal(ks[5], (dim, dim), dtype) / np.sqrt(dim),
        "mlp_w1": jax.random.normal(ks[6], (dim, hidden), dtype) / np.sqrt(dim),
        "mlp_b1": 0.05 * jax.random.normal(ks[7], (1, hidden), dtype),
        "mlp_w2": jax.random.normal(ks[8], (hidden, dim), dtype) / np.sqrt(hidden),
        "mlp_b2": 0.05 * jax.random.normal(ks[9], (1, dim), dtype),
        # NOTE: the torch module zero-inits adaLN_modulation; small random values here
        # so the fused modulation path is actually exercised.
        "ada_w": 0.02 * jax.random.normal(ks[10], (cond_dim, 6 * dim), dtype),
        "ada_b": 0.02 * jax.random.normal(ks[11], (1, 6 * dim), dtype),
    }


if __name__ == "__main__":
    key = jax.random.PRNGKey(0)
    B, S, D, NH, COND = 2, 16, 128, 2, 128   # dim=128 keeps all feature dims lane-dense
    kp, kx, kc = jax.random.split(key, 3)
    params = init_params(kp, D, COND)
    prepared = prepare_params(params)        # one-time bf16 weight cast, outside jit

    x = jax.random.normal(kx, (B, S, D), jnp.float32)
    c = jax.random.normal(kc, (B, COND), jnp.float32)

    dh = D // NH
    pos = jnp.arange(S, dtype=jnp.float32)
    inv_freq = 1.0 / (10000.0 ** (jnp.arange(0, dh, 2, dtype=jnp.float32) / dh))
    fr = jnp.outer(pos, inv_freq)
    cos = jnp.concatenate([jnp.cos(fr), jnp.cos(fr)], axis=-1)   # (S, dh)
    sin = jnp.concatenate([jnp.sin(fr), jnp.sin(fr)], axis=-1)

    out = jax.block_until_ready(ddit_block(prepared, x, (cos, sin), c, n_heads=NH))
    ref = ddit_block_ref(params, x, (cos, sin), c, n_heads=NH)
    # bf16 MXU operands / bf16 qkv intermediates (f32 accumulation) vs. pure-f32
    # reference -> relaxed tolerance.
    np.testing.assert_allclose(np.asarray(out), np.asarray(ref), rtol=5e-2, atol=5e-2)

    print("KERNEL_OK")
</pallas_src>

<mosaic_0001>
module attributes {stable_mosaic.version = 11 : i64} {
  func.func @_ln_mod_qkv_kernel(%arg0: i32, %arg1: i32, %arg2: memref<1x16x128xf32, #tpu.memory_space<vmem>>, %arg3: memref<1x2x128xf32, #tpu.memory_space<vmem>>, %arg4: memref<128x384xbf16, #tpu.memory_space<vmem>>, %arg5: memref<1x16x128xbf16, #tpu.memory_space<vmem>>, %arg6: memref<1x16x128xbf16, #tpu.memory_space<vmem>>, %arg7: memref<1x16x128xbf16, #tpu.memory_space<vmem>>) attributes {dimension_semantics = [#tpu.dimension_semantics<parallel>, #tpu.dimension_semantics<parallel>], iteration_bounds = array<i64: 1, 2>, scalar_prefetch = 0 : i64, scratch_operands = 0 : i64, tpu.core_type = #tpu.core_type<tc>, window_params = [{transform_indices = @transform_0, window_bounds = array<i64: 1, 16, 128>}, {transform_indices = @transform_1, window_bounds = array<i64: 1, 2, 128>}, {pipeline_mode = #tpu.pipeline_mode<synchronous>, transform_indices = @transform_2, window_bounds = array<i64: 128, 384>}, {transform_indices = @transform_3, window_bounds = array<i64: 1, 16, 128>}, {transform_indices = @transform_4, window_bounds = array<i64: 1, 16, 128>}, {transform_indices = @transform_5, window_bounds = array<i64: 1, 16, 128>}]} {
    %c0 = arith.constant 0 : index
    %c0_0 = arith.constant 0 : index
    %c0_1 = arith.constant 0 : index
    %0 = vector.load %arg2[%c0, %c0_0, %c0_1] : memref<1x16x128xf32, #tpu.memory_space<vmem>>, vector<1x16x128xf32>
    %1 = vector.shape_cast %0 : vector<1x16x128xf32> to vector<16x128xf32>
    %cst = arith.constant dense<0.000000e+00> : vector<16xf32>
    %2 = vector.multi_reduction <add>, %1, %cst [1] : vector<16x128xf32> to vector<16xf32>
    %3 = vector.shape_cast %2 : vector<16xf32> to vector<16x1xf32>
    %cst_2 = arith.constant 1.280000e+02 : f32
    %4 = vector.broadcast %cst_2 : f32 to vector<16x1xf32>
    %5 = arith.divf %3, %4 : vector<16x1xf32>
    %6 = vector.broadcast %5 : vector<16x1xf32> to vector<16x128xf32>
    %7 = arith.subf %1, %6 : vector<16x128xf32>
    %8 = arith.mulf %7, %7 : vector<16x128xf32>
    %cst_3 = arith.constant dense<0.000000e+00> : vector<16xf32>
    %9 = vector.multi_reduction <add>, %8, %cst_3 [1] : vector<16x128xf32> to vector<16xf32>
    %10 = vector.shape_cast %9 : vector<16xf32> to vector<16x1xf32>
    %cst_4 = arith.constant 1.280000e+02 : f32
    %11 = vector.broadcast %cst_4 : f32 to vector<16x1xf32>
    %12 = arith.divf %10, %11 : vector<16x1xf32>
    %cst_5 = arith.constant 9.99999974E-6 : f32
    %13 = vector.broadcast %cst_5 : f32 to vector<16x1xf32>
    %14 = arith.addf %12, %13 : vector<16x1xf32>
    %15 = math.rsqrt %14 : vector<16x1xf32>
    %16 = vector.broadcast %15 : vector<16x1xf32> to vector<16x128xf32>
    %17 = arith.mulf %7, %16 : vector<16x128xf32>
    %c0_6 = arith.constant 0 : index
    %c0_7 = arith.constant 0 : index
    %c0_8 = arith.constant 0 : index
    %18 = vector.load %arg3[%c0_6, %c0_7, %c0_8] : memref<1x2x128xf32, #tpu.memory_space<vmem>>, vector<1x1x128xf32>
    %19 = vector.shape_cast %18 : vector<1x1x128xf32> to vector<1x128xf32>
    %20 = vector.broadcast %19 : vector<1x128xf32> to vector<16x128xf32>
    %21 = arith.mulf %17, %20 : vector<16x128xf32>
    %c0_9 = arith.constant 0 : index
    %c1 = arith.constant 1 : index
    %c0_10 = arith.constant 0 : index
    %22 = vector.load %arg3[%c0_9, %c1, %c0_10] : memref<1x2x128xf32, #tpu.memory_space<vmem>>, vector<1x1x128xf32>
    %23 = vector.shape_cast %22 : vector<1x1x128xf32> to vector<1x128xf32>
    %24 = vector.broadcast %23 : vector<1x128xf32> to vector<16x128xf32>
    %25 = arith.addf %21, %24 : vector<16x128xf32>
    %26 = arith.truncf %25 : vector<16x128xf32> to vector<16x128xbf16>
    %c0_11 = arith.constant 0 : index
    %c0_12 = arith.constant 0 : index
    %27 = vector.load %arg4[%c0_11, %c0_12] : memref<128x384xbf16, #tpu.memory_space<vmem>>, vector<128x384xbf16>
    %cst_13 = arith.constant dense<0.000000e+00> : vector<16x384xf32>
    %28 = tpu.matmul %26, %27, %cst_13 {dimension_numbers = #tpu.dot_dimension_numbers<[1], [0], [0], [1], [0, 0, 1, 1], [], []>} : vector<16x128xbf16>, vector<128x384xbf16>, vector<16x384xf32> -> vector<16x384xf32>
    %29 = vector.extract_strided_slice %28 {offsets = [0, 0], sizes = [16, 128], strides = [1, 1]} : vector<16x384xf32> to vector<16x128xf32>
    %30 = arith.truncf %29 : vector<16x128xf32> to vector<16x128xbf16>
    %c0_14 = arith.constant 0 : index
    %c0_15 = arith.constant 0 : index
    %c0_16 = arith.constant 0 : index
    %31 = vector.load %arg5[%c0_14, %c0_15, %c0_16] : memref<1x16x128xbf16, #tpu.memory_space<vmem>>, vector<1x16x128xbf16>
    %32 = vector.shape_cast %31 : vector<1x16x128xbf16> to vector<16x128xbf16>
    %33 = vector.shape_cast %30 : vector<16x128xbf16> to vector<1x16x128xbf16>
    tpu.vector_store %arg5[%c0_14, %c0_15, %c0_16], %33 {strides = array<i32>} : memref<1x16x128xbf16, #tpu.memory_space<vmem>>, vector<1x16x128xbf16>,
    %34 = vector.extract_strided_slice %28 {offsets = [0, 128], sizes = [16, 128], strides = [1, 1]} : vector<16x384xf32> to vector<16x128xf32>
    %35 = arith.truncf %34 : vector<16x128xf32> to vector<16x128xbf16>
    %c0_17 = arith.constant 0 : index
    %c0_18 = arith.constant 0 : index
    %c0_19 = arith.constant 0 : index
    %36 = vector.load %arg6[%c0_17, %c0_18, %c0_19] : memref<1x16x128xbf16, #tpu.memory_space<vmem>>, vector<1x16x128xbf16>
    %37 = vector.shape_cast %36 : vector<1x16x128xbf16> to vector<16x128xbf16>
    %38 = vector.shape_cast %35 : vector<16x128xbf16> to vector<1x16x128xbf16>
    tpu.vector_store %arg6[%c0_17, %c0_18, %c0_19], %38 {strides = array<i32>} : memref<1x16x128xbf16, #tpu.memory_space<vmem>>, vector<1x16x128xbf16>,
    %39 = vector.extract_strided_slice %28 {offsets = [0, 256], sizes = [16, 128], strides = [1, 1]} : vector<16x384xf32> to vector<16x128xf32>
    %40 = arith.truncf %39 : vector<16x128xf32> to vector<16x128xbf16>
    %c0_20 = arith.constant 0 : index
    %c0_21 = arith.constant 0 : index
    %c0_22 = arith.constant 0 : index
    %41 = vector.load %arg7[%c0_20, %c0_21, %c0_22] : memref<1x16x128xbf16, #tpu.memory_space<vmem>>, vector<1x16x128xbf16>
    %42 = vector.shape_cast %41 : vector<1x16x128xbf16> to vector<16x128xbf16>
    %43 = vector.shape_cast %40 : vector<16x128xbf16> to vector<1x16x128xbf16>
    tpu.vector_store %arg7[%c0_20, %c0_21, %c0_22], %43 {strides = array<i32>} : memref<1x16x128xbf16, #tpu.memory_space<vmem>>, vector<1x16x128xbf16>,
    return
  }
  func.func @transform_0(%arg0: i32, %arg1: i32) -> (i32, i32, i32) {
    %c0_i32 = arith.constant 0 : i32
    %c0_i32_0 = arith.constant 0 : i32
    return %arg1, %arg0, %c0_i32 : i32, i32, i32
  }
  func.func @transform_1(%arg0: i32, %arg1: i32) -> (i32, i32, i32) {
    %c0_i32 = arith.constant 0 : i32
    %c0_i32_0 = arith.constant 0 : i32
    %c0_i32_1 = arith.constant 0 : i32
    return %arg1, %c0_i32, %c0_i32_0 : i32, i32, i32
  }
  func.func @transform_2(%arg0: i32, %arg1: i32) -> (i32, i32) {
    %c0_i32 = arith.constant 0 : i32
    %c0_i32_0 = arith.constant 0 : i32
    %c0_i32_1 = arith.constant 0 : i32
    return %c0_i32, %c0_i32_0 : i32, i32
  }
  func.func @transform_3(%arg0: i32, %arg1: i32) -> (i32, i32, i32) {
    %c0_i32 = arith.constant 0 : i32
    %c0_i32_0 = arith.constant 0 : i32
    return %arg1, %arg0, %c0_i32 : i32, i32, i32
  }
  func.func @transform_4(%arg0: i32, %arg1: i32) -> (i32, i32, i32) {
    %c0_i32 = arith.constant 0 : i32
    %c0_i32_0 = arith.constant 0 : i32
    return %arg1, %arg0, %c0_i32 : i32, i32, i32
  }
  func.func @transform_5(%arg0: i32, %arg1: i32) -> (i32, i32, i32) {
    %c0_i32 = arith.constant 0 : i32
    %c0_i32_0 = arith.constant 0 : i32
    return %arg1, %arg0, %c0_i32 : i32, i32, i32
  }
}

module attributes {stable_mosaic.version = 11 : i64} {
  func.func @_attnout_mlp_kernel(%arg0: i32, %arg1: i32, %arg2: memref<1x16x128xbf16, #tpu.memory_space<vmem>>, %arg3: memref<1x16x128xf32, #tpu.memory_space<vmem>>, %arg4: memref<1x4x128xf32, #tpu.memory_space<vmem>>, %arg5: memref<128x128xbf16, #tpu.memory_space<vmem>>, %arg6: memref<128x512xbf16, #tpu.memory_space<vmem>>, %arg7: memref<1x512xf32, #tpu.memory_space<vmem>>, %arg8: memref<512x128xbf16, #tpu.memory_space<vmem>>, %arg9: memref<1x128xf32, #tpu.memory_space<vmem>>, %arg10: memref<1x16x128xf32, #tpu.memory_space<vmem>>) attributes {dimension_semantics = [#tpu.dimension_semantics<parallel>, #tpu.dimension_semantics<parallel>], iteration_bounds = array<i64: 1, 2>, scalar_prefetch = 0 : i64, scratch_operands = 0 : i64, tpu.core_type = #tpu.core_type<tc>, window_params = [{transform_indices = @transform_0, window_bounds = array<i64: 1, 16, 128>}, {transform_indices = @transform_1, window_bounds = array<i64: 1, 16, 128>}, {transform_indices = @transform_2, window_bounds = array<i64: 1, 4, 128>}, {pipeline_mode = #tpu.pipeline_mode<synchronous>, transform_indices = @transform_3, window_bounds = array<i64: 128, 128>}, {pipeline_mode = #tpu.pipeline_mode<synchronous>, transform_indices = @transform_4, window_bounds = array<i64: 128, 512>}, {pipeline_mode = #tpu.pipeline_mode<synchronous>, transform_indices = @transform_5, window_bounds = array<i64: 1, 512>}, {pipeline_mode = #tpu.pipeline_mode<synchronous>, transform_indices = @transform_6, window_bounds = array<i64: 512, 128>}, {pipeline_mode = #tpu.pipeline_mode<synchronous>, transform_indices = @transform_7, window_bounds = array<i64: 1, 128>}, {transform_indices = @transform_8, window_bounds = array<i64: 1, 16, 128>}]} {
    %c0 = arith.constant 0 : index
    %c0_0 = arith.constant 0 : index
    %c0_1 = arith.constant 0 : index
    %0 = vector.load %arg2[%c0, %c0_0, %c0_1] : memref<1x16x128xbf16, #tpu.memory_space<vmem>>, vector<1x16x128xbf16>
    %1 = vector.shape_cast %0 : vector<1x16x128xbf16> to vector<16x128xbf16>
    %c0_2 = arith.constant 0 : index
    %c0_3 = arith.constant 0 : index
    %2 = vector.load %arg5[%c0_2, %c0_3] : memref<128x128xbf16, #tpu.memory_space<vmem>>, vector<128x128xbf16>
    %cst = arith.constant dense<0.000000e+00> : vector<16x128xf32>
    %3 = tpu.matmul %1, %2, %cst {dimension_numbers = #tpu.dot_dimension_numbers<[1], [0], [0], [1], [0, 0, 1, 1], [], []>} : vector<16x128xbf16>, vector<128x128xbf16>, vector<16x128xf32> -> vector<16x128xf32>
    %c0_4 = arith.constant 0 : index
    %c0_5 = arith.constant 0 : index
    %c0_6 = arith.constant 0 : index
    %4 = vector.load %arg4[%c0_4, %c0_5, %c0_6] : memref<1x4x128xf32, #tpu.memory_space<vmem>>, vector<1x1x128xf32>
    %5 = vector.shape_cast %4 : vector<1x1x128xf32> to vector<1x128xf32>
    %6 = vector.broadcast %5 : vector<1x128xf32> to vector<16x128xf32>
    %7 = arith.mulf %3, %6 : vector<16x128xf32>
    %c0_7 = arith.constant 0 : index
    %c0_8 = arith.constant 0 : index
    %c0_9 = arith.constant 0 : index
    %8 = vector.load %arg3[%c0_7, %c0_8, %c0_9] : memref<1x16x128xf32, #tpu.memory_space<vmem>>, vector<1x16x128xf32>
    %9 = vector.shape_cast %8 : vector<1x16x128xf32> to vector<16x128xf32>
    %10 = arith.addf %7, %9 : vector<16x128xf32>
    %cst_10 = arith.constant dense<0.000000e+00> : vector<16xf32>
    %11 = vector.multi_reduction <add>, %10, %cst_10 [1] : vector<16x128xf32> to vector<16xf32>
    %12 = vector.shape_cast %11 : vector<16xf32> to vector<16x1xf32>
    %cst_11 = arith.constant 1.280000e+02 : f32
    %13 = vector.broadcast %cst_11 : f32 to vector<16x1xf32>
    %14 = arith.divf %12, %13 : vector<16x1xf32>
    %15 = vector.broadcast %14 : vector<16x1xf32> to vector<16x128xf32>
    %16 = arith.subf %10, %15 : vector<16x128xf32>
    %17 = arith.mulf %16, %16 : vector<16x128xf32>
    %cst_12 = arith.constant dense<0.000000e+00> : vector<16xf32>
    %18 = vector.multi_reduction <add>, %17, %cst_12 [1] : vector<16x128xf32> to vector<16xf32>
    %19 = vector.shape_cast %18 : vector<16xf32> to vector<16x1xf32>
    %cst_13 = arith.constant 1.280000e+02 : f32
    %20 = vector.broadcast %cst_13 : f32 to vector<16x1xf32>
    %21 = arith.divf %19, %20 : vector<16x1xf32>
    %cst_14 = arith.constant 9.99999974E-6 : f32
    %22 = vector.broadcast %cst_14 : f32 to vector<16x1xf32>
    %23 = arith.addf %21, %22 : vector<16x1xf32>
    %24 = math.rsqrt %23 : vector<16x1xf32>
    %25 = vector.broadcast %24 : vector<16x1xf32> to vector<16x128xf32>
    %26 = arith.mulf %16, %25 : vector<16x128xf32>
    %c0_15 = arith.constant 0 : index
    %c1 = arith.constant 1 : index
    %c0_16 = arith.constant 0 : index
    %27 = vector.load %arg4[%c0_15, %c1, %c0_16] : memref<1x4x128xf32, #tpu.memory_space<vmem>>, vector<1x1x128xf32>
    %28 = vector.shape_cast %27 : vector<1x1x128xf32> to vector<1x128xf32>
    %29 = vector.broadcast %28 : vector<1x128xf32> to vector<16x128xf32>
    %30 = arith.mulf %26, %29 : vector<16x128xf32>
    %c0_17 = arith.constant 0 : index
    %c2 = arith.constant 2 : index
    %c0_18 = arith.constant 0 : index
    %31 = vector.load %arg4[%c0_17, %c2, %c0_18] : memref<1x4x128xf32, #tpu.memory_space<vmem>>, vector<1x1x128xf32>
    %32 = vector.shape_cast %31 : vector<1x1x128xf32> to vector<1x128xf32>
    %33 = vector.broadcast %32 : vector<1x128xf32> to vector<16x128xf32>
    %34 = arith.addf %30, %33 : vector<16x128xf32>
    %35 = arith.truncf %34 : vector<16x128xf32> to vector<16x128xbf16>
    %c0_19 = arith.constant 0 : index
    %c0_20 = arith.constant 0 : index
    %36 = vector.load %arg6[%c0_19, %c0_20] : memref<128x512xbf16, #tpu.memory_space<vmem>>, vector<128x512xbf16>
    %cst_21 = arith.constant dense<0.000000e+00> : vector<16x512xf32>
    %37 = tpu.matmul %35, %36, %cst_21 {dimension_numbers = #tpu.dot_dimension_numbers<[1], [0], [0], [1], [0, 0, 1, 1], [], []>} : vector<16x128xbf16>, vector<128x512xbf16>, vector<16x512xf32> -> vector<16x512xf32>
    %c0_22 = arith.constant 0 : index
    %c0_23 = arith.constant 0 : index
    %38 = vector.load %arg7[%c0_22, %c0_23] : memref<1x512xf32, #tpu.memory_space<vmem>>, vector<1x512xf32>
    %39 = vector.broadcast %38 : vector<1x512xf32> to vector<16x512xf32>
    %40 = arith.addf %37, %39 : vector<16x512xf32>
    %cst_24 = arith.constant 5.000000e-01 : f32
    %41 = vector.broadcast %cst_24 : f32 to vector<16x512xf32>
    %42 = arith.mulf %41, %40 : vector<16x512xf32>
    %cst_25 = arith.constant 4.471500e-02 : f32
    %43 = vector.broadcast %cst_25 : f32 to vector<16x512xf32>
    %44 = arith.mulf %43, %40 : vector<16x512xf32>
    %45 = arith.mulf %44, %40 : vector<16x512xf32>
    %46 = arith.mulf %45, %40 : vector<16x512xf32>
    %47 = arith.addf %40, %46 : vector<16x512xf32>
    %cst_26 = arith.constant 0.797884583 : f32
    %48 = vector.broadcast %cst_26 : f32 to vector<16x512xf32>
    %49 = arith.mulf %48, %47 : vector<16x512xf32>
    %50 = math.tanh %49 : vector<16x512xf32>
    %cst_27 = arith.constant 1.000000e+00 : f32
    %51 = vector.broadcast %cst_27 : f32 to vector<16x512xf32>
    %52 = arith.addf %51, %50 : vector<16x512xf32>
    %53 = arith.mulf %42, %52 : vector<16x512xf32>
    %54 = arith.truncf %53 : vector<16x512xf32> to vector<16x512xbf16>
    %c0_28 = arith.constant 0 : index
    %c0_29 = arith.constant 0 : index
    %55 = vector.load %arg8[%c0_28, %c0_29] : memref<512x128xbf16, #tpu.memory_space<vmem>>, vector<512x128xbf16>
    %cst_30 = arith.constant dense<0.000000e+00> : vector<16x128xf32>
    %56 = tpu.matmul %54, %55, %cst_30 {dimension_numbers = #tpu.dot_dimension_numbers<[1], [0], [0], [1], [0, 0, 1, 1], [], []>} : vector<16x512xbf16>, vector<512x128xbf16>, vector<16x128xf32> -> vector<16x128xf32>
    %c0_31 = arith.constant 0 : index
    %c0_32 = arith.constant 0 : index
    %57 = vector.load %arg9[%c0_31, %c0_32] : memref<1x128xf32, #tpu.memory_space<vmem>>, vector<1x128xf32>
    %58 = vector.broadcast %57 : vector<1x128xf32> to vector<16x128xf32>
    %59 = arith.addf %56, %58 : vector<16x128xf32>
    %c0_33 = arith.constant 0 : index
    %c3 = arith.constant 3 : index
    %c0_34 = arith.constant 0 : index
    %60 = vector.load %arg4[%c0_33, %c3, %c0_34] : memref<1x4x128xf32, #tpu.memory_space<vmem>>, vector<1x1x128xf32>
    %61 = vector.shape_cast %60 : vector<1x1x128xf32> to vector<1x128xf32>
    %62 = vector.broadcast %61 : vector<1x128xf32> to vector<16x128xf32>
    %63 = arith.mulf %59, %62 : vector<16x128xf32>
    %64 = arith.addf %63, %10 : vector<16x128xf32>
    %c0_35 = arith.constant 0 : index
    %c0_36 = arith.constant 0 : index
    %c0_37 = arith.constant 0 : index
    %65 = vector.load %arg10[%c0_35, %c0_36, %c0_37] : memref<1x16x128xf32, #tpu.memory_space<vmem>>, vector<1x16x128xf32>
    %66 = vector.shape_cast %65 : vector<1x16x128xf32> to vector<16x128xf32>
    %67 = vector.shape_cast %64 : vector<16x128xf32> to vector<1x16x128xf32>
    tpu.vector_store %arg10[%c0_35, %c0_36, %c0_37], %67 {strides = array<i32>} : memref<1x16x128xf32, #tpu.memory_space<vmem>>, vector<1x16x128xf32>,
    return
  }
  func.func @transform_0(%arg0: i32, %arg1: i32) -> (i32, i32, i32) {
    %c0_i32 = arith.constant 0 : i32
    %c0_i32_0 = arith.constant 0 : i32
    return %arg1, %arg0, %c0_i32 : i32, i32, i32
  }
  func.func @transform_1(%arg0: i32, %arg1: i32) -> (i32, i32, i32) {
    %c0_i32 = arith.constant 0 : i32
    %c0_i32_0 = arith.constant 0 : i32
    return %arg1, %arg0, %c0_i32 : i32, i32, i32
  }
  func.func @transform_2(%arg0: i32, %arg1: i32) -> (i32, i32, i32) {
    %c0_i32 = arith.constant 0 : i32
    %c0_i32_0 = arith.constant 0 : i32
    %c0_i32_1 = arith.constant 0 : i32
    return %arg1, %c0_i32, %c0_i32_0 : i32, i32, i32
  }
  func.func @transform_3(%arg0: i32, %arg1: i32) -> (i32, i32) {
    %c0_i32 = arith.constant 0 : i32
    %c0_i32_0 = arith.constant 0 : i32
    %c0_i32_1 = arith.constant 0 : i32
    return %c0_i32, %c0_i32_0 : i32, i32
  }
  func.func @transform_4(%arg0: i32, %arg1: i32) -> (i32, i32) {
    %c0_i32 = arith.constant 0 : i32
    %c0_i32_0 = arith.constant 0 : i32
    %c0_i32_1 = arith.constant 0 : i32
    return %c0_i32, %c0_i32_0 : i32, i32
  }
  func.func @transform_5(%arg0: i32, %arg1: i32) -> (i32, i32) {
    %c0_i32 = arith.constant 0 : i32
    %c0_i32_0 = arith.constant 0 : i32
    %c0_i32_1 = arith.constant 0 : i32
    return %c0_i32, %c0_i32_0 : i32, i32
  }
  func.func @transform_6(%arg0: i32, %arg1: i32) -> (i32, i32) {
    %c0_i32 = arith.constant 0 : i32
    %c0_i32_0 = arith.constant 0 : i32
    %c0_i32_1 = arith.constant 0 : i32
    return %c0_i32, %c0_i32_0 : i32, i32
  }
  func.func @transform_7(%arg0: i32, %arg1: i32) -> (i32, i32) {
    %c0_i32 = arith.constant 0 : i32
    %c0_i32_0 = arith.constant 0 : i32
    %c0_i32_1 = arith.constant 0 : i32
    return %c0_i32, %c0_i32_0 : i32, i32
  }
  func.func @transform_8(%arg0: i32, %arg1: i32) -> (i32, i32, i32) {
    %c0_i32 = arith.constant 0 : i32
    %c0_i32_0 = arith.constant 0 : i32
    return %arg1, %arg0, %c0_i32 : i32, i32, i32
  }
}

module attributes {stable_mosaic.version = 11 : i64} {
  func.func @_flash_attn_kernel(%arg0: i32, %arg1: i32, %arg2: i32, %arg3: memref<1x16x128xbf16, #tpu.memory_space<vmem>>, %arg4: memref<1x16x128xbf16, #tpu.memory_space<vmem>>, %arg5: memref<1x16x128xbf16, #tpu.memory_space<vmem>>, %arg6: memref<16x128xf32, #tpu.memory_space<vmem>>, %arg7: memref<16x128xf32, #tpu.memory_space<vmem>>, %arg8: memref<1x16x128xbf16, #tpu.memory_space<vmem>>, %arg9: memref<16x128xbf16, #tpu.memory_space<vmem>>, %arg10: memref<16x2xf32, #tpu.memory_space<vmem>>, %arg11: memref<16x2xf32, #tpu.memory_space<vmem>>, %arg12: memref<16x128xf32, #tpu.memory_space<vmem>>) attributes {dimension_semantics = [#tpu.dimension_semantics<parallel>, #tpu.dimension_semantics<parallel>, #tpu.dimension_semantics<arbitrary>], iteration_bounds = array<i64: 2, 1, 1>, scalar_prefetch = 0 : i64, scratch_operands = 4 : i64, tpu.core_type = #tpu.core_type<tc>, window_params = [{transform_indices = @transform_0, window_bounds = array<i64: 1, 16, 128>}, {transform_indices = @transform_1, window_bounds = array<i64: 1, 16, 128>}, {transform_indices = @transform_2, window_bounds = array<i64: 1, 16, 128>}, {transform_indices = @transform_3, window_bounds = array<i64: 16, 128>}, {transform_indices = @transform_4, window_bounds = array<i64: 16, 128>}, {transform_indices = @transform_5, window_bounds = array<i64: 1, 16, 128>}]} {
    %c0_i32 = arith.constant 0 : i32
    %0 = arith.cmpi eq, %arg2, %c0_i32 : i32
    %1 = arith.extui %0 : i1 to i32
    %c0_i32_0 = arith.constant 0 : i32
    %2 = arith.cmpi ne, %1, %c0_i32_0 : i32
    scf.if %2 {
      %cst_50 = arith.constant -1.000000e+30 : f32
      %85 = vector.broadcast %cst_50 : f32 to vector<16x2xf32>
      %c0_51 = arith.constant 0 : index
      %c0_52 = arith.constant 0 : index
      %86 = vector.load %arg10[%c0_51, %c0_52] : memref<16x2xf32, #tpu.memory_space<vmem>>, vector<16x2xf32>
      tpu.vector_store %arg10[%c0_51, %c0_52], %85 {strides = array<i32>} : memref<16x2xf32, #tpu.memory_space<vmem>>, vector<16x2xf32>,
      %cst_53 = arith.constant 0.000000e+00 : f32
      %87 = vector.broadcast %cst_53 : f32 to vector<16x2xf32>
      %c0_54 = arith.constant 0 : index
      %c0_55 = arith.constant 0 : index
      %88 = vector.load %arg11[%c0_54, %c0_55] : memref<16x2xf32, #tpu.memory_space<vmem>>, vector<16x2xf32>
      tpu.vector_store %arg11[%c0_54, %c0_55], %87 {strides = array<i32>} : memref<16x2xf32, #tpu.memory_space<vmem>>, vector<16x2xf32>,
      %cst_56 = arith.constant 0.000000e+00 : f32
      %89 = vector.broadcast %cst_56 : f32 to vector<16x128xf32>
      %c0_57 = arith.constant 0 : index
      %c0_58 = arith.constant 0 : index
      %90 = vector.load %arg12[%c0_57, %c0_58] : memref<16x128xf32, #tpu.memory_space<vmem>>, vector<16x128xf32>
      tpu.vector_store %arg12[%c0_57, %c0_58], %89 {strides = array<i32>} : memref<16x128xf32, #tpu.memory_space<vmem>>, vector<16x128xf32>,
      %c0_59 = arith.constant 0 : index
      %c0_60 = arith.constant 0 : index
      %c0_61 = arith.constant 0 : index
      %91 = vector.load %arg3[%c0_59, %c0_60, %c0_61] : memref<1x16x128xbf16, #tpu.memory_space<vmem>>, vector<1x16x128xbf16>
      %92 = vector.shape_cast %91 : vector<1x16x128xbf16> to vector<16x128xbf16>
      %93 = arith.extf %92 : vector<16x128xbf16> to vector<16x128xf32>
      %c0_62 = arith.constant 0 : index
      %c0_63 = arith.constant 0 : index
      %94 = vector.load %arg6[%c0_62, %c0_63] : memref<16x128xf32, #tpu.memory_space<vmem>>, vector<16x64xf32>
      %c0_64 = arith.constant 0 : index
      %c64_65 = arith.constant 64 : index
      %95 = vector.load %arg6[%c0_64, %c64_65] : memref<16x128xf32, #tpu.memory_space<vmem>>, vector<16x64xf32>
      %96 = vector.extract_strided_slice %93 {offsets = [0, 0], sizes = [16, 64], strides = [1, 1]} : vector<16x128xf32> to vector<16x64xf32>
      %97 = vector.extract_strided_slice %96 {offsets = [0, 32], sizes = [16, 32], strides = [1, 1]} : vector<16x64xf32> to vector<16x32xf32>
      %cst_66 = arith.constant 0.000000e+00 : f32
      %98 = vector.broadcast %cst_66 : f32 to vector<16x32xf32>
      %99 = arith.subf %98, %97 : vector<16x32xf32>
      %100 = vector.extract_strided_slice %96 {offsets = [0, 0], sizes = [16, 32], strides = [1, 1]} : vector<16x64xf32> to vector<16x32xf32>
      %101 = tpu.concatenate %99, %100 in 1 : vector<16x32xf32>, vector<16x32xf32> -> vector<16x64xf32>
      %102 = arith.mulf %96, %94 : vector<16x64xf32>
      %103 = arith.mulf %101, %95 : vector<16x64xf32>
      %104 = arith.addf %102, %103 : vector<16x64xf32>
      %cst_67 = arith.constant 1.250000e-01 : f32
      %105 = vector.broadcast %cst_67 : f32 to vector<16x64xf32>
      %106 = arith.mulf %104, %105 : vector<16x64xf32>
      %107 = vector.extract_strided_slice %93 {offsets = [0, 64], sizes = [16, 64], strides = [1, 1]} : vector<16x128xf32> to vector<16x64xf32>
      %108 = vector.extract_strided_slice %107 {offsets = [0, 32], sizes = [16, 32], strides = [1, 1]} : vector<16x64xf32> to vector<16x32xf32>
      %cst_68 = arith.constant 0.000000e+00 : f32
      %109 = vector.broadcast %cst_68 : f32 to vector<16x32xf32>
      %110 = arith.subf %109, %108 : vector<16x32xf32>
      %111 = vector.extract_strided_slice %107 {offsets = [0, 0], sizes = [16, 32], strides = [1, 1]} : vector<16x64xf32> to vector<16x32xf32>
      %112 = tpu.concatenate %110, %111 in 1 : vector<16x32xf32>, vector<16x32xf32> -> vector<16x64xf32>
      %113 = arith.mulf %107, %94 : vector<16x64xf32>
      %114 = arith.mulf %112, %95 : vector<16x64xf32>
      %115 = arith.addf %113, %114 : vector<16x64xf32>
      %cst_69 = arith.constant 1.250000e-01 : f32
      %116 = vector.broadcast %cst_69 : f32 to vector<16x64xf32>
      %117 = arith.mulf %115, %116 : vector<16x64xf32>
      %118 = tpu.concatenate %106, %117 in 1 : vector<16x64xf32>, vector<16x64xf32> -> vector<16x128xf32>
      %119 = arith.truncf %118 : vector<16x128xf32> to vector<16x128xbf16>
      %c0_70 = arith.constant 0 : index
      %c0_71 = arith.constant 0 : index
      %120 = vector.load %arg9[%c0_70, %c0_71] : memref<16x128xbf16, #tpu.memory_space<vmem>>, vector<16x128xbf16>
      tpu.vector_store %arg9[%c0_70, %c0_71], %119 {strides = array<i32>} : memref<16x128xbf16, #tpu.memory_space<vmem>>, vector<16x128xbf16>,
    } else {
    }
    %c0 = arith.constant 0 : index
    %c0_1 = arith.constant 0 : index
    %c0_2 = arith.constant 0 : index
    %3 = vector.load %arg4[%c0, %c0_1, %c0_2] : memref<1x16x128xbf16, #tpu.memory_space<vmem>>, vector<1x16x128xbf16>
    %4 = vector.shape_cast %3 : vector<1x16x128xbf16> to vector<16x128xbf16>
    %5 = arith.extf %4 : vector<16x128xbf16> to vector<16x128xf32>
    %c0_3 = arith.constant 0 : index
    %c0_4 = arith.constant 0 : index
    %6 = vector.load %arg7[%c0_3, %c0_4] : memref<16x128xf32, #tpu.memory_space<vmem>>, vector<16x64xf32>
    %c0_5 = arith.constant 0 : index
    %c64 = arith.constant 64 : index
    %7 = vector.load %arg7[%c0_5, %c64] : memref<16x128xf32, #tpu.memory_space<vmem>>, vector<16x64xf32>
    %8 = vector.extract_strided_slice %5 {offsets = [0, 0], sizes = [16, 64], strides = [1, 1]} : vector<16x128xf32> to vector<16x64xf32>
    %9 = vector.extract_strided_slice %8 {offsets = [0, 32], sizes = [16, 32], strides = [1, 1]} : vector<16x64xf32> to vector<16x32xf32>
    %cst = arith.constant 0.000000e+00 : f32
    %10 = vector.broadcast %cst : f32 to vector<16x32xf32>
    %11 = arith.subf %10, %9 : vector<16x32xf32>
    %12 = vector.extract_strided_slice %8 {offsets = [0, 0], sizes = [16, 32], strides = [1, 1]} : vector<16x64xf32> to vector<16x32xf32>
    %13 = tpu.concatenate %11, %12 in 1 : vector<16x32xf32>, vector<16x32xf32> -> vector<16x64xf32>
    %14 = arith.mulf %8, %6 : vector<16x64xf32>
    %15 = arith.mulf %13, %7 : vector<16x64xf32>
    %16 = arith.addf %14, %15 : vector<16x64xf32>
    %17 = arith.truncf %16 : vector<16x64xf32> to vector<16x64xbf16>
    %c0_6 = arith.constant 0 : index
    %c0_7 = arith.constant 0 : index
    %18 = vector.load %arg9[%c0_6, %c0_7] : memref<16x128xbf16, #tpu.memory_space<vmem>>, vector<16x64xbf16>
    %cst_8 = arith.constant dense<0.000000e+00> : vector<16x16xf32>
    %19 = tpu.matmul %18, %17, %cst_8 {dimension_numbers = #tpu.dot_dimension_numbers<[1], [1], [0], [0], [0, 0, 1, 0], [], []>} : vector<16x64xbf16>, vector<16x64xbf16>, vector<16x16xf32> -> vector<16x16xf32>
    %c0_9 = arith.constant 0 : index
    %c0_10 = arith.constant 0 : index
    %20 = vector.load %arg10[%c0_9, %c0_10] : memref<16x2xf32, #tpu.memory_space<vmem>>, vector<16x1xf32>
    %cst_11 = arith.constant dense<0xFF800000> : vector<16xf32>
    %21 = vector.multi_reduction <maximumf>, %19, %cst_11 [1] : vector<16x16xf32> to vector<16xf32>
    %22 = vector.shape_cast %21 : vector<16xf32> to vector<16x1xf32>
    %23 = arith.maximumf %20, %22 : vector<16x1xf32>
    %24 = arith.subf %20, %23 : vector<16x1xf32>
    %25 = math.exp %24 : vector<16x1xf32>
    %26 = vector.broadcast %23 : vector<16x1xf32> to vector<16x16xf32>
    %27 = arith.subf %19, %26 : vector<16x16xf32>
    %28 = math.exp %27 : vector<16x16xf32>
    %c0_12 = arith.constant 0 : index
    %c0_13 = arith.constant 0 : index
    %29 = vector.load %arg11[%c0_12, %c0_13] : memref<16x2xf32, #tpu.memory_space<vmem>>, vector<16x1xf32>
    %30 = arith.mulf %25, %29 : vector<16x1xf32>
    %cst_14 = arith.constant dense<0.000000e+00> : vector<16xf32>
    %31 = vector.multi_reduction <add>, %28, %cst_14 [1] : vector<16x16xf32> to vector<16xf32>
    %32 = vector.shape_cast %31 : vector<16xf32> to vector<16x1xf32>
    %33 = arith.addf %30, %32 : vector<16x1xf32>
    %c0_15 = arith.constant 0 : index
    %c0_16 = arith.constant 0 : index
    %34 = vector.load %arg11[%c0_15, %c0_16] : memref<16x2xf32, #tpu.memory_space<vmem>>, vector<16x1xf32>
    tpu.vector_store %arg11[%c0_15, %c0_16], %33 {strides = array<i32>} : memref<16x2xf32, #tpu.memory_space<vmem>>, vector<16x1xf32>,
    %c0_17 = arith.constant 0 : index
    %c0_18 = arith.constant 0 : index
    %35 = vector.load %arg12[%c0_17, %c0_18] : memref<16x128xf32, #tpu.memory_space<vmem>>, vector<16x64xf32>
    %36 = vector.broadcast %25 : vector<16x1xf32> to vector<16x64xf32>
    %37 = arith.mulf %36, %35 : vector<16x64xf32>
    %38 = arith.truncf %28 : vector<16x16xf32> to vector<16x16xbf16>
    %c0_19 = arith.constant 0 : index
    %c0_20 = arith.constant 0 : index
    %c0_21 = arith.constant 0 : index
    %39 = vector.load %arg5[%c0_19, %c0_20, %c0_21] : memref<1x16x128xbf16, #tpu.memory_space<vmem>>, vector<1x16x64xbf16>
    %40 = vector.shape_cast %39 : vector<1x16x64xbf16> to vector<16x64xbf16>
    %cst_22 = arith.constant dense<0.000000e+00> : vector<16x64xf32>
    %41 = tpu.matmul %38, %40, %cst_22 {dimension_numbers = #tpu.dot_dimension_numbers<[1], [0], [0], [1], [0, 0, 1, 1], [], []>} : vector<16x16xbf16>, vector<16x64xbf16>, vector<16x64xf32> -> vector<16x64xf32>
    %42 = arith.addf %37, %41 : vector<16x64xf32>
    %c0_23 = arith.constant 0 : index
    %c0_24 = arith.constant 0 : index
    %43 = vector.load %arg12[%c0_23, %c0_24] : memref<16x128xf32, #tpu.memory_space<vmem>>, vector<16x64xf32>
    tpu.vector_store %arg12[%c0_23, %c0_24], %42 {strides = array<i32>} : memref<16x128xf32, #tpu.memory_space<vmem>>, vector<16x64xf32>,
    %c0_25 = arith.constant 0 : index
    %c0_26 = arith.constant 0 : index
    %44 = vector.load %arg10[%c0_25, %c0_26] : memref<16x2xf32, #tpu.memory_space<vmem>>, vector<16x1xf32>
    tpu.vector_store %arg10[%c0_25, %c0_26], %23 {strides = array<i32>} : memref<16x2xf32, #tpu.memory_space<vmem>>, vector<16x1xf32>,
    %45 = vector.extract_strided_slice %5 {offsets = [0, 64], sizes = [16, 64], strides = [1, 1]} : vector<16x128xf32> to vector<16x64xf32>
    %46 = vector.extract_strided_slice %45 {offsets = [0, 32], sizes = [16, 32], strides = [1, 1]} : vector<16x64xf32> to vector<16x32xf32>
    %cst_27 = arith.constant 0.000000e+00 : f32
    %47 = vector.broadcast %cst_27 : f32 to vector<16x32xf32>
    %48 = arith.subf %47, %46 : vector<16x32xf32>
    %49 = vector.extract_strided_slice %45 {offsets = [0, 0], sizes = [16, 32], strides = [1, 1]} : vector<16x64xf32> to vector<16x32xf32>
    %50 = tpu.concatenate %48, %49 in 1 : vector<16x32xf32>, vector<16x32xf32> -> vector<16x64xf32>
    %51 = arith.mulf %45, %6 : vector<16x64xf32>
    %52 = arith.mulf %50, %7 : vector<16x64xf32>
    %53 = arith.addf %51, %52 : vector<16x64xf32>
    %54 = arith.truncf %53 : vector<16x64xf32> to vector<16x64xbf16>
    %c0_28 = arith.constant 0 : index
    %c64_29 = arith.constant 64 : index
    %55 = vector.load %arg9[%c0_28, %c64_29] : memref<16x128xbf16, #tpu.memory_space<vmem>>, vector<16x64xbf16>
    %cst_30 = arith.constant dense<0.000000e+00> : vector<16x16xf32>
    %56 = tpu.matmul %55, %54, %cst_30 {dimension_numbers = #tpu.dot_dimension_numbers<[1], [1], [0], [0], [0, 0, 1, 0], [], []>} : vector<16x64xbf16>, vector<16x64xbf16>, vector<16x16xf32> -> vector<16x16xf32>
    %c0_31 = arith.constant 0 : index
    %c1 = arith.constant 1 : index
    %57 = vector.load %arg10[%c0_31, %c1] : memref<16x2xf32, #tpu.memory_space<vmem>>, vector<16x1xf32>
    %cst_32 = arith.constant dense<0xFF800000> : vector<16xf32>
    %58 = vector.multi_reduction <maximumf>, %56, %cst_32 [1] : vector<16x16xf32> to vector<16xf32>
    %59 = vector.shape_cast %58 : vector<16xf32> to vector<16x1xf32>
    %60 = arith.maximumf %57, %59 : vector<16x1xf32>
    %61 = arith.subf %57, %60 : vector<16x1xf32>
    %62 = math.exp %61 : vector<16x1xf32>
    %63 = vector.broadcast %60 : vector<16x1xf32> to vector<16x16xf32>
    %64 = arith.subf %56, %63 : vector<16x16xf32>
    %65 = math.exp %64 : vector<16x16xf32>
    %c0_33 = arith.constant 0 : index
    %c1_34 = arith.constant 1 : index
    %66 = vector.load %arg11[%c0_33, %c1_34] : memref<16x2xf32, #tpu.memory_space<vmem>>, vector<16x1xf32>
    %67 = arith.mulf %62, %66 : vector<16x1xf32>
    %cst_35 = arith.constant dense<0.000000e+00> : vector<16xf32>
    %68 = vector.multi_reduction <add>, %65, %cst_35 [1] : vector<16x16xf32> to vector<16xf32>
    %69 = vector.shape_cast %68 : vector<16xf32> to vector<16x1xf32>
    %70 = arith.addf %67, %69 : vector<16x1xf32>
    %c0_36 = arith.constant 0 : index
    %c1_37 = arith.constant 1 : index
    %71 = vector.load %arg11[%c0_36, %c1_37] : memref<16x2xf32, #tpu.memory_space<vmem>>, vector<16x1xf32>
    tpu.vector_store %arg11[%c0_36, %c1_37], %70 {strides = array<i32>} : memref<16x2xf32, #tpu.memory_space<vmem>>, vector<16x1xf32>,
    %c0_38 = arith.constant 0 : index
    %c64_39 = arith.constant 64 : index
    %72 = vector.load %arg12[%c0_38, %c64_39] : memref<16x128xf32, #tpu.memory_space<vmem>>, vector<16x64xf32>
    %73 = vector.broadcast %62 : vector<16x1xf32> to vector<16x64xf32>
    %74 = arith.mulf %73, %72 : vector<16x64xf32>
    %75 = arith.truncf %65 : vector<16x16xf32> to vector<16x16xbf16>
    %c0_40 = arith.constant 0 : index
    %c0_41 = arith.constant 0 : index
    %c64_42 = arith.constant 64 : index
    %76 = vector.load %arg5[%c0_40, %c0_41, %c64_42] : memref<1x16x128xbf16, #tpu.memory_space<vmem>>, vector<1x16x64xbf16>
    %77 = vector.shape_cast %76 : vector<1x16x64xbf16> to vector<16x64xbf16>
    %cst_43 = arith.constant dense<0.000000e+00> : vector<16x64xf32>
    %78 = tpu.matmul %75, %77, %cst_43 {dimension_numbers = #tpu.dot_dimension_numbers<[1], [0], [0], [1], [0, 0, 1, 1], [], []>} : vector<16x16xbf16>, vector<16x64xbf16>, vector<16x64xf32> -> vector<16x64xf32>
    %79 = arith.addf %74, %78 : vector<16x64xf32>
    %c0_44 = arith.constant 0 : index
    %c64_45 = arith.constant 64 : index
    %80 = vector.load %arg12[%c0_44, %c64_45] : memref<16x128xf32, #tpu.memory_space<vmem>>, vector<16x64xf32>
    tpu.vector_store %arg12[%c0_44, %c64_45], %79 {strides = array<i32>} : memref<16x128xf32, #tpu.memory_space<vmem>>, vector<16x64xf32>,
    %c0_46 = arith.constant 0 : index
    %c1_47 = arith.constant 1 : index
    %81 = vector.load %arg10[%c0_46, %c1_47] : memref<16x2xf32, #tpu.memory_space<vmem>>, vector<16x1xf32>
    tpu.vector_store %arg10[%c0_46, %c1_47], %60 {strides = array<i32>} : memref<16x2xf32, #tpu.memory_space<vmem>>, vector<16x1xf32>,
    %c0_i32_48 = arith.constant 0 : i32
    %82 = arith.cmpi eq, %arg2, %c0_i32_48 : i32
    %83 = arith.extui %82 : i1 to i32
    %c0_i32_49 = arith.constant 0 : i32
    %84 = arith.cmpi ne, %83, %c0_i32_49 : i32
    scf.if %84 {
      %c0_50 = arith.constant 0 : index
      %c0_51 = arith.constant 0 : index
      %85 = vector.load %arg11[%c0_50, %c0_51] : memref<16x2xf32, #tpu.memory_space<vmem>>, vector<16x1xf32>
      %86 = tpu.reciprocal %85 {approx = true} : vector<16x1xf32> -> vector<16x1xf32>
      %c0_52 = arith.constant 0 : index
      %c0_53 = arith.constant 0 : index
      %87 = vector.load %arg12[%c0_52, %c0_53] : memref<16x128xf32, #tpu.memory_space<vmem>>, vector<16x64xf32>
      %88 = vector.broadcast %86 : vector<16x1xf32> to vector<16x64xf32>
      %89 = arith.mulf %87, %88 : vector<16x64xf32>
      %c0_54 = arith.constant 0 : index
      %c1_55 = arith.constant 1 : index
      %90 = vector.load %arg11[%c0_54, %c1_55] : memref<16x2xf32, #tpu.memory_space<vmem>>, vector<16x1xf32>
      %91 = tpu.reciprocal %90 {approx = true} : vector<16x1xf32> -> vector<16x1xf32>
      %c0_56 = arith.constant 0 : index
      %c64_57 = arith.constant 64 : index
      %92 = vector.load %arg12[%c0_56, %c64_57] : memref<16x128xf32, #tpu.memory_space<vmem>>, vector<16x64xf32>
      %93 = vector.broadcast %91 : vector<16x1xf32> to vector<16x64xf32>
      %94 = arith.mulf %92, %93 : vector<16x64xf32>
      %95 = tpu.concatenate %89, %94 in 1 : vector<16x64xf32>, vector<16x64xf32> -> vector<16x128xf32>
      %96 = arith.truncf %95 : vector<16x128xf32> to vector<16x128xbf16>
      %c0_58 = arith.constant 0 : index
      %c0_59 = arith.constant 0 : index
      %c0_60 = arith.constant 0 : index
      %97 = vector.load %arg8[%c0_58, %c0_59, %c0_60] : memref<1x16x128xbf16, #tpu.memory_space<vmem>>, vector<1x16x128xbf16>
      %98 = vector.shape_cast %97 : vector<1x16x128xbf16> to vector<16x128xbf16>
      %99 = vector.shape_cast %96 : vector<16x128xbf16> to vector<1x16x128xbf16>
      tpu.vector_store %arg8[%c0_58, %c0_59, %c0_60], %99 {strides = array<i32>} : memref<1x16x128xbf16, #tpu.memory_space<vmem>>, vector<1x16x128xbf16>,
    } else {
    }
    return
  }
  func.func @transform_0(%arg0: i32, %arg1: i32, %arg2: i32) -> (i32, i32, i32) {
    %c0_i32 = arith.constant 0 : i32
    %c0_i32_0 = arith.constant 0 : i32
    return %arg0, %arg1, %c0_i32 : i32, i32, i32
  }
  func.func @transform_1(%arg0: i32, %arg1: i32, %arg2: i32) -> (i32, i32, i32) {
    %c0_i32 = arith.constant 0 : i32
    %c0_i32_0 = arith.constant 0 : i32
    return %arg0, %arg2, %c0_i32 : i32, i32, i32
  }
  func.func @transform_2(%arg0: i32, %arg1: i32, %arg2: i32) -> (i32, i32, i32) {
    %c0_i32 = arith.constant 0 : i32
    %c0_i32_0 = arith.constant 0 : i32
    return %arg0, %arg2, %c0_i32 : i32, i32, i32
  }
  func.func @transform_3(%arg0: i32, %arg1: i32, %arg2: i32) -> (i32, i32) {
    %c0_i32 = arith.constant 0 : i32
    %c0_i32_0 = arith.constant 0 : i32
    return %arg1, %c0_i32 : i32, i32
  }
  func.func @transform_4(%arg0: i32, %arg1: i32, %arg2: i32) -> (i32, i32) {
    %c0_i32 = arith.constant 0 : i32
    %c0_i32_0 = arith.constant 0 : i32
    return %arg2, %c0_i32 : i32, i32
  }
  func.func @transform_5(%arg0: i32, %arg1: i32, %arg2: i32) -> (i32, i32, i32) {
    %c0_i32 = arith.constant 0 : i32
    %c0_i32_0 = arith.constant 0 : i32
    return %arg0, %arg1, %c0_i32 : i32, i32, i32
  }
}

</mosaic_0001>

<llo_original>
// kernel: ddit_block.3
$region0: #{ddit_block.3}
  #allocation0 [shape = 'u32[]', space=smem, size = 0x4, offset = 0x4, fixed_abs, tag = 'smem constant byte address 0x4 - core index']
  #allocation1 [shape = 'u32[144,128]{1,0:T(1,128)}', space=vmem, size = 0x12000, scoped, tag = 'internal scratch']
  %s0 = inlined_call_operand.vmem [shape: f32[2,16,128], index: 0, kind: input, shape index: {}]
  %s1 = inlined_call_operand.vmem [shape: f32[2,2,128], index: 1, kind: input, shape index: {}]
  %s2 = inlined_call_operand.vmem [shape: bf16[128,384], index: 2, kind: input, shape index: {}]
  %s3 = inlined_call_operand.vmem [shape: bf16[2,16,128], index: 3, kind: output, shape index: {0}]
  %s4 = inlined_call_operand.vmem [shape: bf16[2,16,128], index: 4, kind: output, shape index: {1}]
  %s5 = inlined_call_operand.vmem [shape: bf16[2,16,128], index: 5, kind: output, shape index: {2}]
  %6 = xla_tuple %s3, %s4, %s5
  %s7 = sld [smem:[#allocation0]]
  $region61: #{ddit_block.3} parent=0
    _
  %s9 = ssub.s32 1, %s7
  %s10 = scalar_select 0, %s9, %s7
  loop: start=0, step=1, limit=4
  $region2: #{ddit_block.3} parent=0 // loop_pre_header
    _
  $region3: #{ddit_block.3} parent=0 // loop_header
    %s12 = sphi 0, %s16
    %p13 = scmp.ge.s32.totalorder %s12, 4
    %s19 = sphi 0, %s31
    %s20 = sphi 0, %s27
    %s21 = sphi 0, %s19
    %s22 = sphi 0, %s20
    %s23 = sphi 0, %s21
    %s24 = sphi 0, %s22
    %s36 = sphi 0, %s38
    %s39 = sphi 0, %s36
    %s40 = sphi 0, %s39
    %s56 = sphi 0, %s40
    %s62 = sphi 0, %s64
    %s65 = sphi 0, %s62
    %s66 = sphi 0, %s65
    %s82 = sphi 0, %s66
    %s86 = sphi 0, %s86
    %s88 = sphi 0, %s86
    %s89 = sphi 0, %s88
    %s103 = sphi 0, %s89
    %s111 = sphi 0, %s113
    %s114 = sphi 0, %s111
    %s115 = sphi 0, %s114
    %s131 = sphi 0, %s115
    %s139 = sphi 0, %s141
    %s142 = sphi 0, %s139
    %s143 = sphi 0, %s142
    %s159 = sphi 0, %s143
    %s167 = sphi 0, %s169
    %s170 = sphi 0, %s167
    %s171 = sphi 0, %s170
    %s187 = sphi 0, %s171
  $region4: #{ddit_block.3} parent=0 // loop_header_branch
    %15 = sbr.rel (%p13) target = $region8
  $region5: #{ddit_block.3} parent=0 // loop_body
    %s17 = ssub.s32 %s12, 1
    %s18 = ssub.s32 %s12, 2
    %s25 = sadd.s32 1, %s20
    %p26 = scmp.ge.s32.totalorder %s25, 2
    %s27 = scalar_select %p26, 0, %s25
    %s28 = sadd.s32 1, %s19
    %s29 = scalar_select %p26, %s28, %s19
    %p30 = scmp.ge.s32.totalorder %s29, 1
    %s31 = scalar_select %p30, 0, %s29
    %s32 = ssub.s32 %s20, %s27
    %s33 = ssub.s32 %s19, %s31
    %s34 = sor.u32 %s32, %s33
    %p35 = scmp.eq.s32.totalorder %s34, 0
    %s37 = sadd.s32 %s36, 1
    %s38 = scalar_select %p35, %s36, %s37
    %p41 = pneg %p35
    %p42 = scmp.eq.s32.totalorder %s12, 1
    %p43 = por %p41, %p42
    %p44 = scmp.ne.s32.totalorder %s36, %s39
    %p45 = scmp.eq.s32.totalorder %s12, 0
    %p46 = por %p44, %p45
    %p47 = scmp.ne.s32.totalorder %s36, %s39
    %p48 = scmp.eq.s32.totalorder %s17, 1
    %p49 = por %p47, %p48
    %p50 = scmp.ne.s32.totalorder %s39, %s40
    %p51 = scmp.eq.s32.totalorder %s17, 0
    %p52 = por %p50, %p51
    %p53 = scmp.ne.s32.totalorder %s39, %s40
    %p54 = scmp.eq.s32.totalorder %s18, 1
    %p55 = por %p53, %p54
    %p57 = scmp.ne.s32.totalorder %s40, %s56
    %p58 = scmp.eq.s32.totalorder %s18, 0
    %p59 = por %p57, %p58
    %s60 = ssub.s32 %s20, %s27
    %p61 = scmp.eq.s32.totalorder %s60, 0
    %s63 = sadd.s32 %s62, 1
    %s64 = scalar_select %p61, %s62, %s63
    %p67 = pneg %p61
    %p68 = scmp.eq.s32.totalorder %s12, 1
    %p69 = por %p67, %p68
    %p70 = scmp.ne.s32.totalorder %s62, %s65
    %p71 = scmp.eq.s32.totalorder %s12, 0
    %p72 = por %p70, %p71
    %p73 = scmp.ne.s32.totalorder %s62, %s65
    %p74 = scmp.eq.s32.totalorder %s17, 1
    %p75 = por %p73, %p74
    %p76 = scmp.ne.s32.totalorder %s65, %s66
    %p77 = scmp.eq.s32.totalorder %s17, 0
    %p78 = por %p76, %p77
    %p79 = scmp.ne.s32.totalorder %s65, %s66
    %p80 = scmp.eq.s32.totalorder %s18, 1
    %p81 = por %p79, %p80
    %p83 = scmp.ne.s32.totalorder %s66, %s82
    %p84 = scmp.eq.s32.totalorder %s18, 0
    %p85 = por %p83, %p84
    %s87 = sadd.s32 %s86, 1
    %p90 = scmp.eq.s32.totalorder %s12, 1
    %p91 = scmp.ne.s32.totalorder %s86, %s88
    %p92 = scmp.eq.s32.totalorder %s12, 0
    %p93 = por %p91, %p92
    %p94 = scmp.ne.s32.totalorder %s86, %s88
    %p95 = scmp.eq.s32.totalorder %s17, 1
    %p96 = por %p94, %p95
    %p97 = scmp.ne.s32.totalorder %s88, %s89
    %p98 = scmp.eq.s32.totalorder %s17, 0
    %p99 = por %p97, %p98
    %p100 = scmp.ne.s32.totalorder %s88, %s89
    %p101 = scmp.eq.s32.totalorder %s18, 1
    %p102 = por %p100, %p101
    %p104 = scmp.ne.s32.totalorder %s89, %s103
    %p105 = scmp.eq.s32.totalorder %s18, 0
    %p106 = por %p104, %p105
    %s107 = ssub.s32 %s20, %s27
    %s108 = ssub.s32 %s19, %s31
    %s109 = sor.u32 %s107, %s108
    %p110 = scmp.eq.s32.totalorder %s109, 0
    %s112 = sadd.s32 %s111, 1
    %s113 = scalar_select %p110, %s111, %s112
    %p116 = pneg %p110
    %p117 = scmp.eq.s32.totalorder %s12, 1
    %p118 = por %p116, %p117
    %p119 = scmp.ne.s32.totalorder %s111, %s114
    %p120 = scmp.eq.s32.totalorder %s12, 0
    %p121 = por %p119, %p120
    %p122 = scmp.ne.s32.totalorder %s111, %s114
    %p123 = scmp.eq.s32.totalorder %s17, 1
    %p124 = por %p122, %p123
    %p125 = scmp.ne.s32.totalorder %s114, %s115
    %p126 = scmp.eq.s32.totalorder %s17, 0
    %p127 = por %p125, %p126
    %p128 = scmp.ne.s32.totalorder %s114, %s115
    %p129 = scmp.eq.s32.totalorder %s18, 1
    %p130 = por %p128, %p129
    %p132 = scmp.ne.s32.totalorder %s115, %s131
    %p133 = scmp.eq.s32.totalorder %s18, 0
    %p134 = por %p132, %p133
    %s135 = ssub.s32 %s20, %s27
    %s136 = ssub.s32 %s19, %s31
    %s137 = sor.u32 %s135, %s136
    %p138 = scmp.eq.s32.totalorder %s137, 0
    %s140 = sadd.s32 %s139, 1
    %s141 = scalar_select %p138, %s139, %s140
    %p144 = pneg %p138
    %p145 = scmp.eq.s32.totalorder %s12, 1
    %p146 = por %p144, %p145
    %p147 = scmp.ne.s32.totalorder %s139, %s142
    %p148 = scmp.eq.s32.totalorder %s12, 0
    %p149 = por %p147, %p148
    %p150 = scmp.ne.s32.totalorder %s139, %s142
    %p151 = scmp.eq.s32.totalorder %s17, 1
    %p152 = por %p150, %p151
    %p153 = scmp.ne.s32.totalorder %s142, %s143
    %p154 = scmp.eq.s32.totalorder %s17, 0
    %p155 = por %p153, %p154
    %p156 = scmp.ne.s32.totalorder %s142, %s143
    %p157 = scmp.eq.s32.totalorder %s18, 1
    %p158 = por %p156, %p157
    %p160 = scmp.ne.s32.totalorder %s143, %s159
    %p161 = scmp.eq.s32.totalorder %s18, 0
    %p162 = por %p160, %p161
    %s163 = ssub.s32 %s20, %s27
    %s164 = ssub.s32 %s19, %s31
    %s165 = sor.u32 %s163, %s164
    %p166 = scmp.eq.s32.totalorder %s165, 0
    %s168 = sadd.s32 %s167, 1
    %s169 = scalar_select %p166, %s167, %s168
    %p172 = pneg %p166
    %p173 = scmp.eq.s32.totalorder %s12, 1
    %p174 = por %p172, %p173
    %p175 = scmp.ne.s32.totalorder %s167, %s170
    %p176 = scmp.eq.s32.totalorder %s12, 0
    %p177 = por %p175, %p176
    %p178 = scmp.ne.s32.totalorder %s167, %s170
    %p179 = scmp.eq.s32.totalorder %s17, 1
    %p180 = por %p178, %p179
    %p181 = scmp.ne.s32.totalorder %s170, %s171
    %p182 = scmp.eq.s32.totalorder %s17, 0
    %p183 = por %p181, %p182
    %p184 = scmp.ne.s32.totalorder %s170, %s171
    %p185 = scmp.eq.s32.totalorder %s18, 1
    %p186 = por %p184, %p185
    %p188 = scmp.ne.s32.totalorder %s171, %s187
    %p189 = scmp.eq.s32.totalorder %s18, 0
    %p190 = por %p188, %p189
    %p191 = scmp.le.s32.totalorder 1, %s12
    %p192 = scmp.lt.s32.totalorder %s12, 3
    %p193 = pnand %p191, %p192
    %p194 = pneg %p193
    // Predicated region
    $region9: #{ddit_block.3} parent=5 // pred_check
      _
    $region10: #{ddit_block.3} parent=5 // pred_check_branch
      %196 = sbr.rel (%p193) target = $region12
    $region11: #{ddit_block.3} parent=5 // pred_region
      %s197 = ssub.s32 %s12, 1
      // Predicated region
      $region13: #{ddit_block.3} parent=11 // pred_check
        %p198 = pneg %p99
      $region14: #{ddit_block.3} parent=11 // pred_check_branch
        %200 = sbr.rel (%p198) target = $region16
      $region15: #{ddit_block.3} parent=11 // pred_region
        _
      $region16: #{ddit_block.3} parent=11 // pred_fallthru
        _
    $region12: #{ddit_block.3} parent=5 // pred_fallthru
      _
    %p201 = scmp.lt.s32.totalorder %s12, 2
    // Predicated region
    $region17: #{ddit_block.3} parent=5 // pred_check
      %p202 = pneg %p201
    $region18: #{ddit_block.3} parent=5 // pred_check_branch
      %204 = sbr.rel (%p202) target = $region20
    $region19: #{ddit_block.3} parent=5 // pred_region
      // Predicated region
      $region21: #{ddit_block.3} parent=19 // pred_check
        %p205 = pneg %p46
      $region22: #{ddit_block.3} parent=19 // pred_check_branch
        %207 = sbr.rel (%p205) target = $region24
      $region23: #{ddit_block.3} parent=19 // pred_region
        %s208 = smul.u32 2, %s19
        %p209 = scmp.lt.s32.totalorder %s20, 1
        %s210 = scalar_select %p209, %s20, 1
        %p211 = scmp.lt.s32.totalorder %s208, 1
        %s212 = scalar_select %p211, %s208, 1
        %s213 = smul.addr %s210, 2
        %s214 = sadd.s32 %s212, %s213
        %s215 = smul.addr %s214, 8
        %s216 = scalar_lea.vmem %s0, %s215
        %s217 = smul.u32 2, %s19
      $region24: #{ddit_block.3} parent=19 // pred_fallthru
        _
      // Predicated region
      $region25: #{ddit_block.3} parent=19 // pred_check
        %p218 = pneg %p72
      $region26: #{ddit_block.3} parent=19 // pred_check_branch
        %220 = sbr.rel (%p218) target = $region28
      $region27: #{ddit_block.3} parent=19 // pred_region
        %p221 = scmp.lt.s32.totalorder %s20, 1
        %s222 = scalar_select %p221, %s20, 1
        %s223 = smul.addr %s222, 2
        %s224 = scalar_lea.vmem %s1, %s223
      $region28: #{ddit_block.3} parent=19 // pred_fallthru
        _
    $region20: #{ddit_block.3} parent=5 // pred_fallthru
      _
    %p225 = scmp.le.s32.totalorder 1, %s12
    %p226 = scmp.lt.s32.totalorder %s12, 3
    %p227 = pnand %p225, %p226
    %p228 = pneg %p227
    // Predicated region
    $region29: #{ddit_block.3} parent=5 // pred_check
      _
    $region30: #{ddit_block.3} parent=5 // pred_check_branch
      %230 = sbr.rel (%p227) target = $region32
    $region31: #{ddit_block.3} parent=5 // pred_region
      %s231 = ssub.s32 %s12, 1
      %s232 = smul.u32 2, %s21
      %p233 = scmp.lt.s32.totalorder %s22, 1
      %s234 = scalar_select %p233, %s22, 1
      %p235 = scmp.lt.s32.totalorder %s232, 1
      %s236 = scalar_select %p235, %s232, 1
      %s237 = smul.addr %s234, 2
      %s238 = sadd.s32 %s236, %s237
      %s239 = smul.addr %s238, 8
      %s240 = scalar_lea.vmem %s0, %s239
      %p241 = pneg %p52
      %p242 = pneg %p49
      %p243 = scmp.lt.s32.totalorder %s22, 1
      %s244 = scalar_select %p243, %s22, 1
      %s245 = smul.addr %s244, 2
      %s246 = scalar_lea.vmem %s1, %s245
      %p247 = pneg %p78
      %p248 = pneg %p75
      %p249 = pneg %p99
      %p250 = pneg %p96
      %p251 = pneg %p127
      %p252 = pneg %p124
      %s253 = smul.u32 2, %s21
      %p254 = scmp.lt.s32.totalorder %s22, 1
      %s255 = scalar_select %p254, %s22, 1
      %p256 = scmp.lt.s32.totalorder %s253, 1
      %s257 = scalar_select %p256, %s253, 1
      %s258 = smul.addr %s255, 2
      %s259 = sadd.s32 %s257, %s258
      %s260 = smul.addr %s259, 4
      %s261 = scalar_lea.vmem %s3, %s260
      %p262 = pneg %p155
      %p263 = pneg %p152
      %s264 = smul.u32 2, %s21
      %p265 = scmp.lt.s32.totalorder %s22, 1
      %s266 = scalar_select %p265, %s22, 1
      %p267 = scmp.lt.s32.totalorder %s264, 1
      %s268 = scalar_select %p267, %s264, 1
      %s269 = smul.addr %s266, 2
      %s270 = sadd.s32 %s268, %s269
      %s271 = smul.addr %s270, 4
      %s272 = scalar_lea.vmem %s4, %s271
      %p273 = pneg %p183
      %p274 = pneg %p180
      %s275 = smul.u32 2, %s21
      %p276 = scmp.lt.s32.totalorder %s22, 1
      %s277 = scalar_select %p276, %s22, 1
      %p278 = scmp.lt.s32.totalorder %s275, 1
      %s279 = scalar_select %p278, %s275, 1
      %s280 = smul.addr %s277, 2
      %s281 = sadd.s32 %s279, %s280
      %s282 = smul.addr %s281, 4
      %s283 = scalar_lea.vmem %s5, %s282
      %s284 = smul.u32 2, %s21
      %p285 = scmp.lt.s32.totalorder %s22, 1
      %s286 = scalar_select %p285, %s22, 1
      %p287 = scmp.lt.s32.totalorder %s284, 1
      %s288 = scalar_select %p287, %s284, 1
      %s289 = smul.addr %s286, 2
      %s290 = sadd.s32 %s288, %s289
      %s291 = smul.addr %s290, 8
      %s292 = scalar_lea.vmem %s0, %s291
      %s293 = smul.u32 2, %s21
      %p294 = scmp.lt.s32.totalorder %s22, 1
      %s295 = scalar_select %p294, %s22, 1
      %s296 = smul.addr %s295, 2
      %s297 = scalar_lea.vmem %s1, %s296
      %s298 = smul.u32 2, %s21
      %p299 = scmp.lt.s32.totalorder %s22, 1
      %s300 = scalar_select %p299, %s22, 1
      %p301 = scmp.lt.s32.totalorder %s298, 1
      %s302 = scalar_select %p301, %s298, 1
      %s303 = smul.addr %s300, 2
      %s304 = sadd.s32 %s302, %s303
      %s305 = smul.addr %s304, 4
      %s306 = scalar_lea.vmem %s3, %s305
      %s307 = smul.u32 2, %s21
      %s308 = smul.u32 2, %s21
      %p309 = scmp.lt.s32.totalorder %s22, 1
      %s310 = scalar_select %p309, %s22, 1
      %p311 = scmp.lt.s32.totalorder %s308, 1
      %s312 = scalar_select %p311, %s308, 1
      %s313 = smul.addr %s310, 2
      %s314 = sadd.s32 %s312, %s313
      %s315 = smul.addr %s314, 4
      %s316 = scalar_lea.vmem %s4, %s315
      %s317 = smul.u32 2, %s21
      %s318 = smul.u32 2, %s21
      %p319 = scmp.lt.s32.totalorder %s22, 1
      %s320 = scalar_select %p319, %s22, 1
      %p321 = scmp.lt.s32.totalorder %s318, 1
      %s322 = scalar_select %p321, %s318, 1
      %s323 = smul.addr %s320, 2
      %s324 = sadd.s32 %s322, %s323
      %s325 = smul.addr %s324, 4
      %s326 = scalar_lea.vmem %s5, %s325
      %s327 = smul.u32 2, %s21
      %v329 = vld [vmem:[%s292] sm:$0xff]
      %v330 = vld [vmem:[%s292 + $0x8] sm:$0xff]
      %331 = vadd.xlane.f32.xlu0 %v329
      %v332 = vpop.xlane.xlu0 %331
      %333 = vadd.xlane.f32.xlu0 %v330
      %v334 = vpop.xlane.xlu0 %333
      %v335 = vrcp.pop 128.0
      %v336 = vmul.f32 %v332, %v335
      %v337 = vmul.f32 %v334, %v335
      %v338 = vsub.f32 %v329, %v336
      %v339 = vsub.f32 %v330, %v337
      %v340 = vmul.f32 %v338, %v338
      %v341 = vmul.f32 %v339, %v339
      %342 = vadd.xlane.f32.xlu0 %v340
      %v343 = vpop.xlane.xlu0 %342
      %344 = vadd.xlane.f32.xlu0 %v341
      %v345 = vpop.xlane.xlu0 %344
      %v346 = vmul.f32 %v343, %v335
      %v347 = vmul.f32 %v345, %v335
      %v348 = vadd.f32 %v346, 1e-05
      %v349 = vadd.f32 %v347, 1e-05
      %v350 = vrsqrt.pop %v348
      %v351 = vrsqrt.pop %v349
      %v352 = vmul.f32 %v338, %v350
      %v353 = vmul.f32 %v339, %v351
      %v354 = vld [vmem:[%s297] sm:$0x1]
      %v355 = vlaneseq
      %v356 = vshrl.u32 %v355, 7
      %v357 = vsub.s32 0, %v356
      %v358 = vrot.slane %v354, %v357
      %v359 = vmul.f32 %v352, %v358
      %v360 = vmul.f32 %v353, %v358
      %v361 = vld [vmem:[%s297 + $0x1] sm:$0x1]
      %v362 = vlaneseq
      %v363 = vshrl.u32 %v362, 7
      %v364 = vsub.s32 0, %v363
      %v365 = vrot.slane %v361, %v364
      %v366 = vadd.f32 %v359, %v365
      %v367 = vadd.f32 %v360, %v365
      %v368 = vpack.c.bf16 %v367, %v366
      %v369 = vld [vmem:[%s2] sm:$0xff]
      %v370 = vld [vmem:[%s2 + $0x8] sm:$0xf]
      %v371 = vld [vmem:[%s2 + $0xc] sm:$0xff]
      %v372 = vld [vmem:[%s2 + $0x14] sm:$0xf]
      %v373 = vld [vmem:[%s2 + $0x18] sm:$0xff]
      %v374 = vld [vmem:[%s2 + $0x20] sm:$0xf]
      %v375 = vld [vmem:[%s2 + $0x24] sm:$0xff]
      %v376 = vld [vmem:[%s2 + $0x2c] sm:$0xf]
      %v377 = vld [vmem:[%s2 + $0x30] sm:$0xff]
      %v378 = vld [vmem:[%s2 + $0x38] sm:$0xf]
      %v379 = vld [vmem:[%s2 + $0x3c] sm:$0xff]
      %v380 = vld [vmem:[%s2 + $0x44] sm:$0xf]
      %v381 = vld [vmem:[%s2 + $0x48] sm:$0xff]
      %v382 = vld [vmem:[%s2 + $0x50] sm:$0xf]
      %v383 = vld [vmem:[%s2 + $0x54] sm:$0xff]
      %v384 = vld [vmem:[%s2 + $0x5c] sm:$0xf]
      %v385 = vld [vmem:[%s2 + $0x60] sm:$0xff]
      %v386 = vld [vmem:[%s2 + $0x68] sm:$0xf]
      %v387 = vld [vmem:[%s2 + $0x6c] sm:$0xff]
      %v388 = vld [vmem:[%s2 + $0x74] sm:$0xf]
      %v389 = vld [vmem:[%s2 + $0x78] sm:$0xff]
      %v390 = vld [vmem:[%s2 + $0x80] sm:$0xf]
      %v391 = vld [vmem:[%s2 + $0x84] sm:$0xff]
      %v392 = vld [vmem:[%s2 + $0x8c] sm:$0xf]
      %v393 = vld [vmem:[%s2 + $0x90] sm:$0xff]
      %v394 = vld [vmem:[%s2 + $0x98] sm:$0xf]
      %v395 = vld [vmem:[%s2 + $0x9c] sm:$0xff]
      %v396 = vld [vmem:[%s2 + $0xa4] sm:$0xf]
      %v397 = vld [vmem:[%s2 + $0xa8] sm:$0xff]
      %v398 = vld [vmem:[%s2 + $0xb0] sm:$0xf]
      %v399 = vld [vmem:[%s2 + $0xb4] sm:$0xff]
      %v400 = vld [vmem:[%s2 + $0xbc] sm:$0xf]
      %v433 = vunpack.c.l.b16 %v369
      %v434 = vunpack.c.h.b16 %v369
      %v435 = vunpack.c.l.b16 %v370
      %v436 = vunpack.c.l.b16 %v371
      %v437 = vunpack.c.h.b16 %v371
      %v438 = vunpack.c.l.b16 %v372
      %v439 = vunpack.c.l.b16 %v373
      %v440 = vunpack.c.h.b16 %v373
      %v441 = vunpack.c.l.b16 %v374
      %v442 = vunpack.c.l.b16 %v375
      %v443 = vunpack.c.h.b16 %v375
      %v444 = vunpack.c.l.b16 %v376
      %v445 = vunpack.c.l.b16 %v377
      %v446 = vunpack.c.h.b16 %v377
      %v447 = vunpack.c.l.b16 %v378
      %v448 = vunpack.c.l.b16 %v379
      %v449 = vunpack.c.h.b16 %v379
      %v450 = vunpack.c.l.b16 %v380
      %v451 = vunpack.c.l.b16 %v381
      %v452 = vunpack.c.h.b16 %v381
      %v453 = vunpack.c.l.b16 %v382
      %v454 = vunpack.c.l.b16 %v383
      %v455 = vunpack.c.h.b16 %v383
      %v456 = vunpack.c.l.b16 %v384
      %v457 = vunpack.c.l.b16 %v385
      %v458 = vunpack.c.h.b16 %v385
      %v459 = vunpack.c.l.b16 %v386
      %v460 = vunpack.c.l.b16 %v387
      %v461 = vunpack.c.h.b16 %v387
      %v462 = vunpack.c.l.b16 %v388
      %v463 = vunpack.c.l.b16 %v389
      %v464 = vunpack.c.h.b16 %v389
      %v465 = vunpack.c.l.b16 %v390
      %v466 = vunpack.c.l.b16 %v391
      %v467 = vunpack.c.h.b16 %v391
      %v468 = vunpack.c.l.b16 %v392
      %v469 = vunpack.c.l.b16 %v393
      %v470 = vunpack.c.h.b16 %v393
      %v471 = vunpack.c.l.b16 %v394
      %v472 = vunpack.c.l.b16 %v395
      %v473 = vunpack.c.h.b16 %v395
      %v474 = vunpack.c.l.b16 %v396
      %v475 = vunpack.c.l.b16 %v397
      %v476 = vunpack.c.h.b16 %v397
      %v477 = vunpack.c.l.b16 %v398
      %v478 = vunpack.c.l.b16 %v399
      %v479 = vunpack.c.h.b16 %v399
      %v480 = vunpack.c.l.b16 %v400
      %v481 = vpack.c.b16 %v436, %v433
      %v482 = vpack.c.b16 %v437, %v434
      %v483 = vpack.c.b16 %v438, %v435
      %v484 = vpack.c.b16 %v442, %v439
      %v485 = vpack.c.b16 %v443, %v440
      %v486 = vpack.c.b16 %v444, %v441
      %v487 = vpack.c.b16 %v448, %v445
      %v488 = vpack.c.b16 %v449, %v446
      %v489 = vpack.c.b16 %v450, %v447
      %v490 = vpack.c.b16 %v454, %v451
      %v491 = vpack.c.b16 %v455, %v452
      %v492 = vpack.c.b16 %v456, %v453
      %v493 = vpack.c.b16 %v460, %v457
      %v494 = vpack.c.b16 %v461, %v458
      %v495 = vpack.c.b16 %v462, %v459
      %v496 = vpack.c.b16 %v466, %v463
      %v497 = vpack.c.b16 %v467, %v464
      %v498 = vpack.c.b16 %v468, %v465
      %v499 = vpack.c.b16 %v472, %v469
      %v500 = vpack.c.b16 %v473, %v470
      %v501 = vpack.c.b16 %v474, %v471
      %v502 = vpack.c.b16 %v478, %v475
      %v503 = vpack.c.b16 %v479, %v476
      %v504 = vpack.c.b16 %v480, %v477
      %529 = vmatprep.subr.bf16.mxu0 %v482
      %530 = vmatpush1.bf16.msra.mxu0 %v481
      %531 = vmatprep.subr.bf16.mxu0 %v485
      %532 = vmatpush1.bf16.msra.mxu0 %v484
      %533 = vmatprep.subr.bf16.mxu0 %v488
      %534 = vmatpush1.bf16.msra.mxu0 %v487
      %535 = vmatprep.subr.bf16.mxu0 %v491
      %536 = vmatpush1.bf16.msra.mxu0 %v490
      %537 = vmatprep.subr.bf16.mxu0 %v494
      %538 = vmatpush1.bf16.msra.mxu0 %v493
      %539 = vmatprep.subr.bf16.mxu0 %v497
      %540 = vmatpush1.bf16.msra.mxu0 %v496
      %541 = vmatprep.subr.bf16.mxu0 %v500
      %542 = vmatpush1.bf16.msra.mxu0 %v499
      %543 = vmatprep.subr.bf16.mxu0 %v503
      %544 = vmatpush1.bf16.msra.mxu0 %v502
      %545 = vmatprep.subr.bf16.mxu0 0
      %546 = vmatpush1.bf16.msra.mxu0 0
      %547 = vmatprep.subr.bf16.mxu0 0
      %548 = vmatpush1.bf16.msra.mxu0 0
      %549 = vmatprep.subr.bf16.mxu0 0
      %550 = vmatpush1.bf16.msra.mxu0 0
      %551 = vmatprep.subr.bf16.mxu0 0
      %552 = vmatpush1.bf16.msra.mxu0 0
      %553 = vmatprep.subr.bf16.mxu0 0
      %554 = vmatpush1.bf16.msra.mxu0 0
      %555 = vmatprep.subr.bf16.mxu0 0
      %556 = vmatpush1.bf16.msra.mxu0 0
      %557 = vmatprep.subr.bf16.mxu0 0
      %558 = vmatpush1.bf16.msra.mxu0 0
      %559 = vmatprep.subr.bf16.mxu0 0
      %560 = vmatpush1.bf16.msra.mxu0 0
      %561 = vmatprep.mubr.bf16.mxu0 0
      %562 = vmatmul.mubr.bf16.gmra.mrb[0].mxu0 %v368
      %v563 = vpop.f32.mrb[0].mxu0
      %v564 = vadd.f32 0.0, %v563
      %v565 = vpop.f32.mrb[0].mxu0
      %v566 = vadd.f32 0.0, %v565
      %v567 = vpop.f32.mrb[0].mxu0
      %v568 = vadd.f32 0.0, %v567
      %v569 = vpop.f32.mrb[0].mxu0
      %v570 = vadd.f32 0.0, %v569
      %571 = vdwg.mxu0
      %572 = vmatprep.subr.bf16.mxu0 0
      %573 = vmatpush1.bf16.msra.mxu0 %v483
      %574 = vmatprep.subr.bf16.mxu0 0
      %575 = vmatpush1.bf16.msra.mxu0 %v486
      %576 = vmatprep.subr.bf16.mxu0 0
      %577 = vmatpush1.bf16.msra.mxu0 %v489
      %578 = vmatprep.subr.bf16.mxu0 0
      %579 = vmatpush1.bf16.msra.mxu0 %v492
      %580 = vmatprep.subr.bf16.mxu0 0
      %581 = vmatpush1.bf16.msra.mxu0 %v495
      %582 = vmatprep.subr.bf16.mxu0 0
      %583 = vmatpush1.bf16.msra.mxu0 %v498
      %584 = vmatprep.subr.bf16.mxu0 0
      %585 = vmatpush1.bf16.msra.mxu0 %v501
      %586 = vmatprep.subr.bf16.mxu0 0
      %587 = vmatpush1.bf16.msra.mxu0 %v504
      %588 = vmatprep.subr.bf16.mxu0 0
      %589 = vmatpush1.bf16.msra.mxu0 0
      %590 = vmatprep.subr.bf16.mxu0 0
      %591 = vmatpush1.bf16.msra.mxu0 0
      %592 = vmatprep.subr.bf16.mxu0 0
      %593 = vmatpush1.bf16.msra.mxu0 0
      %594 = vmatprep.subr.bf16.mxu0 0
      %595 = vmatpush1.bf16.msra.mxu0 0
      %596 = vmatprep.subr.bf16.mxu0 0
      %597 = vmatpush1.bf16.msra.mxu0 0
      %598 = vmatprep.subr.bf16.mxu0 0
      %599 = vmatpush1.bf16.msra.mxu0 0
      %600 = vmatprep.subr.bf16.mxu0 0
      %601 = vmatpush1.bf16.msra.mxu0 0
      %602 = vmatprep.subr.bf16.mxu0 0
      %603 = vmatpush1.bf16.msra.mxu0 0
      %604 = vmatprep.mubr.bf16.mxu0 0
      %605 = vmatmul.mubr.bf16.gmra.mrb[0].mxu0 %v368
      %v606 = vpop.f32.mrb[0].mxu0
      %v607 = vadd.f32 0.0, %v606
      %v608 = vpop.f32.mrb[0].mxu0
      %v609 = vpop.f32.mrb[0].mxu0
      %v610 = vadd.f32 0.0, %v609
      %v611 = vpop.f32.mrb[0].mxu0
      %612 = vdwg.mxu0
      %v613 = vpack.c.bf16 %v568, %v564
      %v615 = vunpack.c.l.b16 %v613
      %v616 = vunpack.c.h.b16 %v613
      %v617 = vpack.c.b16 %v615, %v615
      %v618 = vpack.c.b16 %v616, %v616
      %621 = vst [vmem:[%s306] sm:$0xf] %v617
      %622 = vst [vmem:[%s306 + $0x4] sm:$0xf] %v618
      %v623 = vpack.c.bf16 %v570, %v566
      %v625 = vunpack.c.l.b16 %v623
      %v626 = vunpack.c.h.b16 %v623
      %v627 = vpack.c.b16 %v625, %v625
      %v628 = vpack.c.b16 %v626, %v626
      %631 = vst [vmem:[%s316] sm:$0xf] %v627
      %632 = vst [vmem:[%s316 + $0x4] sm:$0xf] %v628
      %v633 = vpack.c.bf16 %v610, %v607
      %v635 = vunpack.c.l.b16 %v633
      %v636 = vunpack.c.h.b16 %v633
      %v637 = vpack.c.b16 %v635, %v635
      %v638 = vpack.c.b16 %v636, %v636
      %641 = vst [vmem:[%s326] sm:$0xf] %v637
      %642 = vst [vmem:[%s326 + $0x4] sm:$0xf] %v638
      %s643 = smul.u32 2, %s21
      %p644 = scmp.lt.s32.totalorder %s22, 1
      %s645 = scalar_select %p644, %s22, 1
      %p646 = scmp.lt.s32.totalorder %s643, 1
      %s647 = scalar_select %p646, %s643, 1
      %s648 = smul.addr %s645, 2
      %s649 = sadd.s32 %s647, %s648
      %s650 = smul.addr %s649, 4
      %s651 = scalar_lea.vmem %s3, %s650
      %s652 = smul.u32 2, %s21
      %p653 = scmp.lt.s32.totalorder %s22, 1
      %s654 = scalar_select %p653, %s22, 1
      %p655 = scmp.lt.s32.totalorder %s652, 1
      %s656 = scalar_select %p655, %s652, 1
      %s657 = smul.addr %s654, 2
      %s658 = sadd.s32 %s656, %s657
      %s659 = smul.addr %s658, 4
      %s660 = scalar_lea.vmem %s4, %s659
      %s661 = smul.u32 2, %s21
      %p662 = scmp.lt.s32.totalorder %s22, 1
      %s663 = scalar_select %p662, %s22, 1
      %p664 = scmp.lt.s32.totalorder %s661, 1
      %s665 = scalar_select %p664, %s661, 1
      %s666 = smul.addr %s663, 2
      %s667 = sadd.s32 %s665, %s666
      %s668 = smul.addr %s667, 4
      %s669 = scalar_lea.vmem %s5, %s668
      // Predicated region
      $region33: #{ddit_block.3} parent=31 // pred_check
        %p670 = pneg %p124
      $region34: #{ddit_block.3} parent=31 // pred_check_branch
        %672 = sbr.rel (%p670) target = $region36
      $region35: #{ddit_block.3} parent=31 // pred_region
        %s673 = smul.u32 2, %s21
      $region36: #{ddit_block.3} parent=31 // pred_fallthru
        _
      // Predicated region
      $region37: #{ddit_block.3} parent=31 // pred_check
        %p674 = pneg %p152
      $region38: #{ddit_block.3} parent=31 // pred_check_branch
        %676 = sbr.rel (%p674) target = $region40
      $region39: #{ddit_block.3} parent=31 // pred_region
        %s677 = smul.u32 2, %s21
      $region40: #{ddit_block.3} parent=31 // pred_fallthru
        _
      // Predicated region
      $region41: #{ddit_block.3} parent=31 // pred_check
        %p678 = pneg %p180
      $region42: #{ddit_block.3} parent=31 // pred_check_branch
        %680 = sbr.rel (%p678) target = $region44
      $region43: #{ddit_block.3} parent=31 // pred_region
        %s681 = smul.u32 2, %s21
      $region44: #{ddit_block.3} parent=31 // pred_fallthru
        _
    $region32: #{ddit_block.3} parent=5 // pred_fallthru
      _
    %p682 = scmp.le.s32.totalorder 2, %s12
    // Predicated region
    $region45: #{ddit_block.3} parent=5 // pred_check
      %p683 = pneg %p682
    $region46: #{ddit_block.3} parent=5 // pred_check_branch
      %685 = sbr.rel (%p683) target = $region48
    $region47: #{ddit_block.3} parent=5 // pred_region
      %s686 = ssub.s32 %s12, 2
      // Predicated region
      $region49: #{ddit_block.3} parent=47 // pred_check
        %p687 = pneg %p130
      $region50: #{ddit_block.3} parent=47 // pred_check_branch
        %689 = sbr.rel (%p687) target = $region52
      $region51: #{ddit_block.3} parent=47 // pred_region
        %s690 = smul.u32 2, %s23
        %p691 = scmp.lt.s32.totalorder %s24, 1
        %s692 = scalar_select %p691, %s24, 1
        %p693 = scmp.lt.s32.totalorder %s690, 1
        %s694 = scalar_select %p693, %s690, 1
        %s695 = smul.addr %s692, 2
        %s696 = sadd.s32 %s694, %s695
        %s697 = smul.addr %s696, 4
        %s698 = scalar_lea.vmem %s3, %s697
      $region52: #{ddit_block.3} parent=47 // pred_fallthru
        _
      // Predicated region
      $region53: #{ddit_block.3} parent=47 // pred_check
        %p699 = pneg %p158
      $region54: #{ddit_block.3} parent=47 // pred_check_branch
        %701 = sbr.rel (%p699) target = $region56
      $region55: #{ddit_block.3} parent=47 // pred_region
        %s702 = smul.u32 2, %s23
        %p703 = scmp.lt.s32.totalorder %s24, 1
        %s704 = scalar_select %p703, %s24, 1
        %p705 = scmp.lt.s32.totalorder %s702, 1
        %s706 = scalar_select %p705, %s702, 1
        %s707 = smul.addr %s704, 2
        %s708 = sadd.s32 %s706, %s707
        %s709 = smul.addr %s708, 4
        %s710 = scalar_lea.vmem %s4, %s709
      $region56: #{ddit_block.3} parent=47 // pred_fallthru
        _
      // Predicated region
      $region57: #{ddit_block.3} parent=47 // pred_check
        %p711 = pneg %p186
      $region58: #{ddit_block.3} parent=47 // pred_check_branch
        %713 = sbr.rel (%p711) target = $region60
      $region59: #{ddit_block.3} parent=47 // pred_region
        %s714 = smul.u32 2, %s23
        %p715 = scmp.lt.s32.totalorder %s24, 1
        %s716 = scalar_select %p715, %s24, 1
        %p717 = scmp.lt.s32.totalorder %s714, 1
        %s718 = scalar_select %p717, %s714, 1
        %s719 = smul.addr %s716, 2
        %s720 = sadd.s32 %s718, %s719
        %s721 = smul.addr %s720, 4
        %s722 = scalar_lea.vmem %s5, %s721
      $region60: #{ddit_block.3} parent=47 // pred_fallthru
        _
    $region48: #{ddit_block.3} parent=5 // pred_fallthru
      _
  $region6: #{ddit_block.3} parent=0 // loop_footer
    %s16 = sadd.s32 1, %s12
  $region7: #{ddit_block.3} parent=0 // loop_footer_branch
    %11 = sbr.rel target = $region3
  $region8: #{ddit_block.3} parent=0 // loop_exit
    _

// kernel: ddit_block.4
$region0: #{ddit_block.4}
  #allocation0 [shape = 'u32[]', space=smem, size = 0x4, offset = 0x4, fixed_abs, tag = 'smem constant byte address 0x4 - core index']
  #allocation1 [shape = 'u32[144,128]{1,0:T(1,128)}', space=vmem, size = 0x12000, scoped, tag = 'internal scratch']
  #allocation2 [shape = 'bf16[16,128]{1,0:T(16,128)(2,1)}', space=vmem, size = 0x1000, scoped, tag = 'scratch operand']
  #allocation3 [shape = 'f32[16,2]{1,0:T(8,128)}', space=vmem, size = 0x2000, scoped, tag = 'scratch operand']
  #allocation4 [shape = 'f32[16,2]{1,0:T(8,128)}', space=vmem, size = 0x2000, scoped, tag = 'scratch operand']
  #allocation5 [shape = 'f32[16,128]{1,0:T(8,128)}', space=vmem, size = 0x2000, scoped, tag = 'scratch operand']
  %s0 = inlined_call_operand.vmem [shape: bf16[2,16,128], index: 0, kind: input, shape index: {}]
  %s1 = inlined_call_operand.vmem [shape: bf16[2,16,128], index: 1, kind: input, shape index: {}]
  %s2 = inlined_call_operand.vmem [shape: bf16[2,16,128], index: 2, kind: input, shape index: {}]
  %s3 = inlined_call_operand.vmem [shape: f32[16,128], index: 3, kind: input, shape index: {}, may-alias: {3,4}]
  %s4 = inlined_call_operand.vmem [shape: f32[16,128], index: 4, kind: input, shape index: {}, may-alias: {3,4}]
  %s5 = inlined_call_operand.vmem [shape: bf16[2,16,128], index: 5, kind: output, shape index: {}]
  %s6 = sld [smem:[#allocation0]]
  $region61: #{ddit_block.4} parent=0
    _
  %s8 = ssub.s32 1, %s6
  %s9 = scalar_select 0, %s8, %s6
  loop: start=0, step=1, limit=4
  $region2: #{ddit_block.4} parent=0 // loop_pre_header
    _
  $region3: #{ddit_block.4} parent=0 // loop_header
    %s11 = sphi 0, %s15
    %p12 = scmp.ge.s32.totalorder %s11, 4
    %s18 = sphi 0, %s37
    %s19 = sphi 0, %s33
    %s20 = sphi 0, %s29
    %s21 = sphi 0, %s18
    %s22 = sphi 0, %s19
    %s23 = sphi 0, %s20
    %s24 = sphi 0, %s21
    %s25 = sphi 0, %s22
    %s26 = sphi 0, %s23
    %s42 = sphi 0, %s44
    %s45 = sphi 0, %s42
    %s46 = sphi 0, %s45
    %s62 = sphi 0, %s46
    %s70 = sphi 0, %s72
    %s73 = sphi 0, %s70
    %s74 = sphi 0, %s73
    %s90 = sphi 0, %s74
    %s98 = sphi 0, %s100
    %s101 = sphi 0, %s98
    %s102 = sphi 0, %s101
    %s118 = sphi 0, %s102
    %s124 = sphi 0, %s126
    %s127 = sphi 0, %s124
    %s128 = sphi 0, %s127
    %s144 = sphi 0, %s128
    %s150 = sphi 0, %s152
    %s153 = sphi 0, %s150
    %s154 = sphi 0, %s153
    %s170 = sphi 0, %s154
    %s178 = sphi 0, %s180
    %s181 = sphi 0, %s178
    %s182 = sphi 0, %s181
    %s198 = sphi 0, %s182
  $region4: #{ddit_block.4} parent=0 // loop_header_branch
    %14 = sbr.rel (%p12) target = $region8
  $region5: #{ddit_block.4} parent=0 // loop_body
    %s16 = ssub.s32 %s11, 1
    %s17 = ssub.s32 %s11, 2
    %s27 = sadd.s32 1, %s20
    %p28 = scmp.ge.s32.totalorder %s27, 1
    %s29 = scalar_select %p28, 0, %s27
    %s30 = sadd.s32 1, %s19
    %s31 = scalar_select %p28, %s30, %s19
    %p32 = scmp.ge.s32.totalorder %s31, 1
    %s33 = scalar_select %p32, 0, %s31
    %s34 = sadd.s32 1, %s18
    %s35 = scalar_select %p32, %s34, %s18
    %p36 = scmp.ge.s32.totalorder %s35, 2
    %s37 = scalar_select %p36, 0, %s35
    %s38 = ssub.s32 %s18, %s37
    %s39 = ssub.s32 %s19, %s33
    %s40 = sor.u32 %s38, %s39
    %p41 = scmp.eq.s32.totalorder %s40, 0
    %s43 = sadd.s32 %s42, 1
    %s44 = scalar_select %p41, %s42, %s43
    %p47 = pneg %p41
    %p48 = scmp.eq.s32.totalorder %s11, 1
    %p49 = por %p47, %p48
    %p50 = scmp.ne.s32.totalorder %s42, %s45
    %p51 = scmp.eq.s32.totalorder %s11, 0
    %p52 = por %p50, %p51
    %p53 = scmp.ne.s32.totalorder %s42, %s45
    %p54 = scmp.eq.s32.totalorder %s16, 1
    %p55 = por %p53, %p54
    %p56 = scmp.ne.s32.totalorder %s45, %s46
    %p57 = scmp.eq.s32.totalorder %s16, 0
    %p58 = por %p56, %p57
    %p59 = scmp.ne.s32.totalorder %s45, %s46
    %p60 = scmp.eq.s32.totalorder %s17, 1
    %p61 = por %p59, %p60
    %p63 = scmp.ne.s32.totalorder %s46, %s62
    %p64 = scmp.eq.s32.totalorder %s17, 0
    %p65 = por %p63, %p64
    %s66 = ssub.s32 %s18, %s37
    %s67 = ssub.s32 %s20, %s29
    %s68 = sor.u32 %s66, %s67
    %p69 = scmp.eq.s32.totalorder %s68, 0
    %s71 = sadd.s32 %s70, 1
    %s72 = scalar_select %p69, %s70, %s71
    %p75 = pneg %p69
    %p76 = scmp.eq.s32.totalorder %s11, 1
    %p77 = por %p75, %p76
    %p78 = scmp.ne.s32.totalorder %s70, %s73
    %p79 = scmp.eq.s32.totalorder %s11, 0
    %p80 = por %p78, %p79
    %p81 = scmp.ne.s32.totalorder %s70, %s73
    %p82 = scmp.eq.s32.totalorder %s16, 1
    %p83 = por %p81, %p82
    %p84 = scmp.ne.s32.totalorder %s73, %s74
    %p85 = scmp.eq.s32.totalorder %s16, 0
    %p86 = por %p84, %p85
    %p87 = scmp.ne.s32.totalorder %s73, %s74
    %p88 = scmp.eq.s32.totalorder %s17, 1
    %p89 = por %p87, %p88
    %p91 = scmp.ne.s32.totalorder %s74, %s90
    %p92 = scmp.eq.s32.totalorder %s17, 0
    %p93 = por %p91, %p92
    %s94 = ssub.s32 %s18, %s37
    %s95 = ssub.s32 %s20, %s29
    %s96 = sor.u32 %s94, %s95
    %p97 = scmp.eq.s32.totalorder %s96, 0
    %s99 = sadd.s32 %s98, 1
    %s100 = scalar_select %p97, %s98, %s99
    %p103 = pneg %p97
    %p104 = scmp.eq.s32.totalorder %s11, 1
    %p105 = por %p103, %p104
    %p106 = scmp.ne.s32.totalorder %s98, %s101
    %p107 = scmp.eq.s32.totalorder %s11, 0
    %p108 = por %p106, %p107
    %p109 = scmp.ne.s32.totalorder %s98, %s101
    %p110 = scmp.eq.s32.totalorder %s16, 1
    %p111 = por %p109, %p110
    %p112 = scmp.ne.s32.totalorder %s101, %s102
    %p113 = scmp.eq.s32.totalorder %s16, 0
    %p114 = por %p112, %p113
    %p115 = scmp.ne.s32.totalorder %s101, %s102
    %p116 = scmp.eq.s32.totalorder %s17, 1
    %p117 = por %p115, %p116
    %p119 = scmp.ne.s32.totalorder %s102, %s118
    %p120 = scmp.eq.s32.totalorder %s17, 0
    %p121 = por %p119, %p120
    %s122 = ssub.s32 %s19, %s33
    %p123 = scmp.eq.s32.totalorder %s122, 0
    %s125 = sadd.s32 %s124, 1
    %s126 = scalar_select %p123, %s124, %s125
    %p129 = pneg %p123
    %p130 = scmp.eq.s32.totalorder %s11, 1
    %p131 = por %p129, %p130
    %p132 = scmp.ne.s32.totalorder %s124, %s127
    %p133 = scmp.eq.s32.totalorder %s11, 0
    %p134 = por %p132, %p133
    %p135 = scmp.ne.s32.totalorder %s124, %s127
    %p136 = scmp.eq.s32.totalorder %s16, 1
    %p137 = por %p135, %p136
    %p138 = scmp.ne.s32.totalorder %s127, %s128
    %p139 = scmp.eq.s32.totalorder %s16, 0
    %p140 = por %p138, %p139
    %p141 = scmp.ne.s32.totalorder %s127, %s128
    %p142 = scmp.eq.s32.totalorder %s17, 1
    %p143 = por %p141, %p142
    %p145 = scmp.ne.s32.totalorder %s128, %s144
    %p146 = scmp.eq.s32.totalorder %s17, 0
    %p147 = por %p145, %p146
    %s148 = ssub.s32 %s20, %s29
    %p149 = scmp.eq.s32.totalorder %s148, 0
    %s151 = sadd.s32 %s150, 1
    %s152 = scalar_select %p149, %s150, %s151
    %p155 = pneg %p149
    %p156 = scmp.eq.s32.totalorder %s11, 1
    %p157 = por %p155, %p156
    %p158 = scmp.ne.s32.totalorder %s150, %s153
    %p159 = scmp.eq.s32.totalorder %s11, 0
    %p160 = por %p158, %p159
    %p161 = scmp.ne.s32.totalorder %s150, %s153
    %p162 = scmp.eq.s32.totalorder %s16, 1
    %p163 = por %p161, %p162
    %p164 = scmp.ne.s32.totalorder %s153, %s154
    %p165 = scmp.eq.s32.totalorder %s16, 0
    %p166 = por %p164, %p165
    %p167 = scmp.ne.s32.totalorder %s153, %s154
    %p168 = scmp.eq.s32.totalorder %s17, 1
    %p169 = por %p167, %p168
    %p171 = scmp.ne.s32.totalorder %s154, %s170
    %p172 = scmp.eq.s32.totalorder %s17, 0
    %p173 = por %p171, %p172
    %s174 = ssub.s32 %s18, %s37
    %s175 = ssub.s32 %s19, %s33
    %s176 = sor.u32 %s174, %s175
    %p177 = scmp.eq.s32.totalorder %s176, 0
    %s179 = sadd.s32 %s178, 1
    %s180 = scalar_select %p177, %s178, %s179
    %p183 = pneg %p177
    %p184 = scmp.eq.s32.totalorder %s11, 1
    %p185 = por %p183, %p184
    %p186 = scmp.ne.s32.totalorder %s178, %s181
    %p187 = scmp.eq.s32.totalorder %s11, 0
    %p188 = por %p186, %p187
    %p189 = scmp.ne.s32.totalorder %s178, %s181
    %p190 = scmp.eq.s32.totalorder %s16, 1
    %p191 = por %p189, %p190
    %p192 = scmp.ne.s32.totalorder %s181, %s182
    %p193 = scmp.eq.s32.totalorder %s16, 0
    %p194 = por %p192, %p193
    %p195 = scmp.ne.s32.totalorder %s181, %s182
    %p196 = scmp.eq.s32.totalorder %s17, 1
    %p197 = por %p195, %p196
    %p199 = scmp.ne.s32.totalorder %s182, %s198
    %p200 = scmp.eq.s32.totalorder %s17, 0
    %p201 = por %p199, %p200
    %p202 = scmp.le.s32.totalorder 1, %s11
    %p203 = scmp.lt.s32.totalorder %s11, 3
    %p204 = pnand %p202, %p203
    %p205 = pneg %p204
    // Predicated region
    $region9: #{ddit_block.4} parent=5 // pred_check
      _
    $region10: #{ddit_block.4} parent=5 // pred_check_branch
      %207 = sbr.rel (%p204) target = $region12
    $region11: #{ddit_block.4} parent=5 // pred_region
      %s208 = ssub.s32 %s11, 1
      // Predicated region
      $region13: #{ddit_block.4} parent=11 // pred_check
        %p209 = pneg %p140
      $region14: #{ddit_block.4} parent=11 // pred_check_branch
        %211 = sbr.rel (%p209) target = $region16
      $region15: #{ddit_block.4} parent=11 // pred_region
        %s212 = smul.u32 2, %s22
        %p213 = scmp.lt.s32.totalorder %s212, 1
        %s214 = scalar_select %p213, %s212, 1
        %s215 = smul.addr %s214, 8
        %s216 = scalar_lea.vmem %s3, %s215
        %s217 = smul.u32 2, %s22
      $region16: #{ddit_block.4} parent=11 // pred_fallthru
        _
      // Predicated region
      $region17: #{ddit_block.4} parent=11 // pred_check
        %p218 = pneg %p166
      $region18: #{ddit_block.4} parent=11 // pred_check_branch
        %220 = sbr.rel (%p218) target = $region20
      $region19: #{ddit_block.4} parent=11 // pred_region
        %s221 = smul.u32 2, %s23
        %p222 = scmp.lt.s32.totalorder %s221, 1
        %s223 = scalar_select %p222, %s221, 1
        %s224 = smul.addr %s223, 8
        %s225 = scalar_lea.vmem %s4, %s224
        %s226 = smul.u32 2, %s23
      $region20: #{ddit_block.4} parent=11 // pred_fallthru
        _
    $region12: #{ddit_block.4} parent=5 // pred_fallthru
      _
    %p227 = scmp.lt.s32.totalorder %s11, 2
    // Predicated region
    $region21: #{ddit_block.4} parent=5 // pred_check
      %p228 = pneg %p227
    $region22: #{ddit_block.4} parent=5 // pred_check_branch
      %230 = sbr.rel (%p228) target = $region24
    $region23: #{ddit_block.4} parent=5 // pred_region
      // Predicated region
      $region25: #{ddit_block.4} parent=23 // pred_check
        %p231 = pneg %p52
      $region26: #{ddit_block.4} parent=23 // pred_check_branch
        %233 = sbr.rel (%p231) target = $region28
      $region27: #{ddit_block.4} parent=23 // pred_region
        %s234 = smul.u32 2, %s19
        %p235 = scmp.lt.s32.totalorder %s18, 1
        %s236 = scalar_select %p235, %s18, 1
        %p237 = scmp.lt.s32.totalorder %s234, 1
        %s238 = scalar_select %p237, %s234, 1
        %s239 = smul.addr %s236, 2
        %s240 = sadd.s32 %s238, %s239
        %s241 = smul.addr %s240, 4
        %s242 = scalar_lea.vmem %s0, %s241
        %s243 = smul.u32 2, %s19
      $region28: #{ddit_block.4} parent=23 // pred_fallthru
        _
      // Predicated region
      $region29: #{ddit_block.4} parent=23 // pred_check
        %p244 = pneg %p80
      $region30: #{ddit_block.4} parent=23 // pred_check_branch
        %246 = sbr.rel (%p244) target = $region32
      $region31: #{ddit_block.4} parent=23 // pred_region
        %s247 = smul.u32 2, %s20
        %p248 = scmp.lt.s32.totalorder %s18, 1
        %s249 = scalar_select %p248, %s18, 1
        %p250 = scmp.lt.s32.totalorder %s247, 1
        %s251 = scalar_select %p250, %s247, 1
        %s252 = smul.addr %s249, 2
        %s253 = sadd.s32 %s251, %s252
        %s254 = smul.addr %s253, 4
        %s255 = scalar_lea.vmem %s1, %s254
        %s256 = smul.u32 2, %s20
      $region32: #{ddit_block.4} parent=23 // pred_fallthru
        _
      // Predicated region
      $region33: #{ddit_block.4} parent=23 // pred_check
        %p257 = pneg %p108
      $region34: #{ddit_block.4} parent=23 // pred_check_branch
        %259 = sbr.rel (%p257) target = $region36
      $region35: #{ddit_block.4} parent=23 // pred_region
        %s260 = smul.u32 2, %s20
        %p261 = scmp.lt.s32.totalorder %s18, 1
        %s262 = scalar_select %p261, %s18, 1
        %p263 = scmp.lt.s32.totalorder %s260, 1
        %s264 = scalar_select %p263, %s260, 1
        %s265 = smul.addr %s262, 2
        %s266 = sadd.s32 %s264, %s265
        %s267 = smul.addr %s266, 4
        %s268 = scalar_lea.vmem %s2, %s267
        %s269 = smul.u32 2, %s20
      $region36: #{ddit_block.4} parent=23 // pred_fallthru
        _
    $region24: #{ddit_block.4} parent=5 // pred_fallthru
      _
    %p270 = scmp.le.s32.totalorder 1, %s11
    %p271 = scmp.lt.s32.totalorder %s11, 3
    %p272 = pnand %p270, %p271
    %p273 = pneg %p272
    // Predicated region
    $region37: #{ddit_block.4} parent=5 // pred_check
      _
    $region38: #{ddit_block.4} parent=5 // pred_check_branch
      %275 = sbr.rel (%p272) target = $region40
    $region39: #{ddit_block.4} parent=5 // pred_region
      %s276 = ssub.s32 %s11, 1
      %s277 = smul.u32 2, %s22
      %p278 = scmp.lt.s32.totalorder %s21, 1
      %s279 = scalar_select %p278, %s21, 1
      %p280 = scmp.lt.s32.totalorder %s277, 1
      %s281 = scalar_select %p280, %s277, 1
      %s282 = smul.addr %s279, 2
      %s283 = sadd.s32 %s281, %s282
      %s284 = smul.addr %s283, 4
      %s285 = scalar_lea.vmem %s0, %s284
      %p286 = pneg %p58
      %p287 = pneg %p55
      %s288 = smul.u32 2, %s23
      %p289 = scmp.lt.s32.totalorder %s21, 1
      %s290 = scalar_select %p289, %s21, 1
      %p291 = scmp.lt.s32.totalorder %s288, 1
      %s292 = scalar_select %p291, %s288, 1
      %s293 = smul.addr %s290, 2
      %s294 = sadd.s32 %s292, %s293
      %s295 = smul.addr %s294, 4
      %s296 = scalar_lea.vmem %s1, %s295
      %p297 = pneg %p86
      %p298 = pneg %p83
      %s299 = smul.u32 2, %s23
      %p300 = scmp.lt.s32.totalorder %s21, 1
      %s301 = scalar_select %p300, %s21, 1
      %p302 = scmp.lt.s32.totalorder %s299, 1
      %s303 = scalar_select %p302, %s299, 1
      %s304 = smul.addr %s301, 2
      %s305 = sadd.s32 %s303, %s304
      %s306 = smul.addr %s305, 4
      %s307 = scalar_lea.vmem %s2, %s306
      %p308 = pneg %p114
      %p309 = pneg %p111
      %s310 = smul.u32 2, %s22
      %p311 = scmp.lt.s32.totalorder %s310, 1
      %s312 = scalar_select %p311, %s310, 1
      %s313 = smul.addr %s312, 8
      %s314 = scalar_lea.vmem %s3, %s313
      %p315 = pneg %p140
      %p316 = pneg %p137
      %s317 = smul.u32 2, %s23
      %p318 = scmp.lt.s32.totalorder %s317, 1
      %s319 = scalar_select %p318, %s317, 1
      %s320 = smul.addr %s319, 8
      %s321 = scalar_lea.vmem %s4, %s320
      %p322 = pneg %p166
      %p323 = pneg %p163
      %p324 = pneg %p194
      %p325 = pneg %p191
      %s326 = smul.u32 2, %s22
      %p327 = scmp.lt.s32.totalorder %s21, 1
      %s328 = scalar_select %p327, %s21, 1
      %p329 = scmp.lt.s32.totalorder %s326, 1
      %s330 = scalar_select %p329, %s326, 1
      %s331 = smul.addr %s328, 2
      %s332 = sadd.s32 %s330, %s331
      %s333 = smul.addr %s332, 4
      %s334 = scalar_lea.vmem %s5, %s333
      %s335 = smul.u32 2, %s22
      %p336 = scmp.lt.s32.totalorder %s21, 1
      %s337 = scalar_select %p336, %s21, 1
      %p338 = scmp.lt.s32.totalorder %s335, 1
      %s339 = scalar_select %p338, %s335, 1
      %s340 = smul.addr %s337, 2
      %s341 = sadd.s32 %s339, %s340
      %s342 = smul.addr %s341, 4
      %s343 = scalar_lea.vmem %s0, %s342
      %s344 = smul.u32 2, %s22
      %s345 = smul.u32 2, %s23
      %p346 = scmp.lt.s32.totalorder %s21, 1
      %s347 = scalar_select %p346, %s21, 1
      %p348 = scmp.lt.s32.totalorder %s345, 1
      %s349 = scalar_select %p348, %s345, 1
      %s350 = smul.addr %s347, 2
      %s351 = sadd.s32 %s349, %s350
      %s352 = smul.addr %s351, 4
      %s353 = scalar_lea.vmem %s1, %s352
      %s354 = smul.u32 2, %s23
      %s355 = smul.u32 2, %s23
      %p356 = scmp.lt.s32.totalorder %s21, 1
      %s357 = scalar_select %p356, %s21, 1
      %p358 = scmp.lt.s32.totalorder %s355, 1
      %s359 = scalar_select %p358, %s355, 1
      %s360 = smul.addr %s357, 2
      %s361 = sadd.s32 %s359, %s360
      %s362 = smul.addr %s361, 4
      %s363 = scalar_lea.vmem %s2, %s362
      %s364 = smul.u32 2, %s23
      %s365 = smul.u32 2, %s22
      %p366 = scmp.lt.s32.totalorder %s365, 1
      %s367 = scalar_select %p366, %s365, 1
      %s368 = smul.addr %s367, 8
      %s369 = scalar_lea.vmem %s3, %s368
      %s370 = smul.u32 2, %s22
      %s371 = smul.u32 2, %s23
      %p372 = scmp.lt.s32.totalorder %s371, 1
      %s373 = scalar_select %p372, %s371, 1
      %s374 = smul.addr %s373, 8
      %s375 = scalar_lea.vmem %s4, %s374
      %s376 = smul.u32 2, %s23
      %s377 = smul.u32 2, %s22
      %p378 = scmp.lt.s32.totalorder %s21, 1
      %s379 = scalar_select %p378, %s21, 1
      %p380 = scmp.lt.s32.totalorder %s377, 1
      %s381 = scalar_select %p380, %s377, 1
      %s382 = smul.addr %s379, 2
      %s383 = sadd.s32 %s381, %s382
      %s384 = smul.addr %s383, 4
      %s385 = scalar_lea.vmem %s5, %s384
      %s386 = smul.u32 2, %s22
      %p388 = scmp.eq.s32.totalorder %s23, 0
      // Predicated region
      $region41: #{ddit_block.4} parent=39 // pred_check
        %p389 = pneg %p388
      $region42: #{ddit_block.4} parent=39 // pred_check_branch
        %391 = sbr.rel (%p389) target = $region44
      $region43: #{ddit_block.4} parent=39 // pred_region
        %vm392 = vcmask 15360
        %393 = vst.msk [vmem:[#allocation3] sm:$0xff] %vm392, -1e+30
        %394 = vst.msk [vmem:[#allocation3 + $0x8] sm:$0xff] %vm392, -1e+30
        %395 = vst.msk [vmem:[#allocation4] sm:$0xff] %vm392, 0.0
        %396 = vst.msk [vmem:[#allocation4 + $0x8] sm:$0xff] %vm392, 0.0
        %397 = vst [vmem:[#allocation5] sm:$0xff] 0.0
        %398 = vst [vmem:[#allocation5 + $0x8] sm:$0xff] 0.0
        %v399 = vld [vmem:[%s343] sm:$0xf]
        %v400 = vld [vmem:[%s343 + $0x4] sm:$0xf]
        %v401 = vunpack.c.l.bf16 %v399
        %v402 = vunpack.c.l.bf16 %v400
        %v403 = vld [vmem:[%s369] sm:$0xff]
        %v404 = vld [vmem:[%s369 + $0x8] sm:$0xff]
        %v405 = vsub.f32 0.0, %v401
        %v406 = vsub.f32 0.0, %v402
        %409 = vrot.lane.b32.xlu0 %v405, 96
        %v410 = vpop.permute.xlu0 %409
        %411 = vrot.lane.b32.xlu0 %v406, 96
        %v412 = vpop.permute.xlu0 %411
        %417 = vrot.lane.b32.xlu0 %v401, 32
        %v418 = vpop.permute.xlu0 %417
        %419 = vrot.lane.b32.xlu0 %v402, 32
        %v420 = vpop.permute.xlu0 %419
        %vm423 = vcmask 261120
        %v424 = vsel %vm423, %v410, %v418
        %v425 = vsel %vm423, %v412, %v420
        %v426 = vmul.f32 %v401, %v403
        %v427 = vmul.f32 %v402, %v404
        %430 = vrot.lane.b32.xlu0 %v403, 64
        %v431 = vpop.permute.xlu0 %430
        %432 = vrot.lane.b32.xlu0 %v404, 64
        %v433 = vpop.permute.xlu0 %432
        %v436 = vmul.f32 %v424, %v431
        %v437 = vmul.f32 %v425, %v433
        %v438 = vadd.f32 %v426, %v436
        %v439 = vadd.f32 %v427, %v437
        %v440 = vmul.f32 %v438, 0.125
        %v441 = vmul.f32 %v439, 0.125
        %442 = vrot.lane.b32.xlu0 %v405, 32
        %v443 = vpop.permute.xlu0 %442
        %444 = vrot.lane.b32.xlu0 %v406, 32
        %v445 = vpop.permute.xlu0 %444
        %448 = vrot.lane.b32.xlu0 %v401, 96
        %v449 = vpop.permute.xlu0 %448
        %450 = vrot.lane.b32.xlu0 %v402, 96
        %v451 = vpop.permute.xlu0 %450
        %v454 = vsel %vm423, %v443, %v449
        %v455 = vsel %vm423, %v445, %v451
        %v456 = vmul.f32 %v401, %v431
        %v457 = vmul.f32 %v402, %v433
        %v458 = vmul.f32 %v454, %v431
        %v459 = vmul.f32 %v455, %v433
        %462 = vrot.lane.b32.xlu0 %v458, 64
        %v463 = vpop.permute.xlu0 %462
        %464 = vrot.lane.b32.xlu0 %v459, 64
        %v465 = vpop.permute.xlu0 %464
        %v468 = vadd.f32 %v456, %v463
        %v469 = vadd.f32 %v457, %v465
        %v470 = vmul.f32 %v468, 0.125
        %v471 = vmul.f32 %v469, 0.125
        %vm472 = vcmask 523264
        %v473 = vsel %vm472, %v440, %v470
        %v474 = vsel %vm472, %v441, %v471
        %v475 = vpack.c.bf16 %v474, %v473
        %476 = vst [vmem:[#allocation2] sm:$0xff] %v475
      $region44: #{ddit_block.4} parent=39 // pred_fallthru
        _
      %v477 = vld [vmem:[%s353] sm:$0xf]
      %v478 = vld [vmem:[%s353 + $0x4] sm:$0xf]
      %v479 = vunpack.c.l.bf16 %v477
      %v480 = vunpack.c.l.bf16 %v478
      %v481 = vld [vmem:[%s375] sm:$0xff]
      %v482 = vld [vmem:[%s375 + $0x8] sm:$0xff]
      %v483 = vsub.f32 0.0, %v479
      %v484 = vsub.f32 0.0, %v480
      %487 = vrot.lane.b32.xlu0 %v483, 96
      %v488 = vpop.permute.xlu0 %487
      %489 = vrot.lane.b32.xlu0 %v484, 96
      %v490 = vpop.permute.xlu0 %489
      %495 = vrot.lane.b32.xlu0 %v479, 32
      %v496 = vpop.permute.xlu0 %495
      %497 = vrot.lane.b32.xlu0 %v480, 32
      %v498 = vpop.permute.xlu0 %497
      %vm501 = vcmask 261120
      %v502 = vsel %vm501, %v488, %v496
      %v503 = vsel %vm501, %v490, %v498
      %v504 = vmul.f32 %v479, %v481
      %v505 = vmul.f32 %v480, %v482
      %508 = vrot.lane.b32.xlu0 %v481, 64
      %v509 = vpop.permute.xlu0 %508
      %510 = vrot.lane.b32.xlu0 %v482, 64
      %v511 = vpop.permute.xlu0 %510
      %v514 = vmul.f32 %v502, %v509
      %v515 = vmul.f32 %v503, %v511
      %v516 = vadd.f32 %v504, %v514
      %v517 = vadd.f32 %v505, %v515
      %v518 = vpack.c.bf16 %v517, %v516
      %v519 = vld [vmem:[#allocation2] sm:$0xff]
      %vm520 = vcmask 523264
      %v522 = vsel %vm520, %v519, 0
      %v525 = vsel %vm520, %v518, 0
      %527 = vmatprep.subr.bf16.mxu0 0
      %528 = vmatpush1.bf16.xpose.msra.mxu0 %v525
      %529 = vmatprep.subr.bf16.mxu0 0
      %530 = vmatpush1.bf16.xpose.msra.mxu0 0
      %531 = vmatprep.subr.bf16.mxu0 0
      %532 = vmatpush1.bf16.xpose.msra.mxu0 0
      %533 = vmatprep.subr.bf16.mxu0 0
      %534 = vmatpush1.bf16.xpose.msra.mxu0 0
      %535 = vmatprep.subr.bf16.mxu0 0
      %536 = vmatpush1.bf16.xpose.msra.mxu0 0
      %537 = vmatprep.subr.bf16.mxu0 0
      %538 = vmatpush1.bf16.xpose.msra.mxu0 0
      %539 = vmatprep.subr.bf16.mxu0 0
      %540 = vmatpush1.bf16.xpose.msra.mxu0 0
      %541 = vmatprep.subr.bf16.mxu0 0
      %542 = vmatpush1.bf16.xpose.msra.mxu0 0
      %543 = vmatprep.subr.bf16.mxu0 0
      %544 = vmatpush1.bf16.xpose.msra.mxu0 0
      %545 = vmatprep.subr.bf16.mxu0 0
      %546 = vmatpush1.bf16.xpose.msra.mxu0 0
      %547 = vmatprep.subr.bf16.mxu0 0
      %548 = vmatpush1.bf16.xpose.msra.mxu0 0
      %549 = vmatprep.subr.bf16.mxu0 0
      %550 = vmatpush1.bf16.xpose.msra.mxu0 0
      %551 = vmatprep.subr.bf16.mxu0 0
      %552 = vmatpush1.bf16.xpose.msra.mxu0 0
      %553 = vmatprep.subr.bf16.mxu0 0
      %554 = vmatpush1.bf16.xpose.msra.mxu0 0
      %555 = vmatprep.subr.bf16.mxu0 0
      %556 = vmatpush1.bf16.xpose.msra.mxu0 0
      %557 = vmatprep.subr.bf16.mxu0 0
      %558 = vmatpush1.bf16.xpose.msra.mxu0 0
      %559 = vmatprep.mubr.bf16.mxu0 0
      %560 = vmatmul.mubr.bf16.gmra.mrb[0].mxu0 %v522
      %v561 = vpop.f32.mrb[0].mxu0
      %v562 = vadd.f32 0.0, %v561
      %v563 = vpop.f32.mrb[0].mxu0
      %v564 = vpop.f32.mrb[0].mxu0
      %v565 = vadd.f32 0.0, %v564
      %v566 = vpop.f32.mrb[0].mxu0
      %567 = vdwg.mxu0
      %v568 = vld [vmem:[#allocation3] sm:$0xff]
      %v569 = vld [vmem:[#allocation3 + $0x8] sm:$0xff]
      %vm570 = vcmask 130048
      %v571 = vsel %vm570, %v562, -inf
      %572 = vmax.xlane.f32.xlu0 %v571
      %v573 = vpop.xlane.xlu0 %572
      %v574 = vsel %vm570, %v565, -inf
      %575 = vmax.xlane.f32.xlu0 %v574
      %v576 = vpop.xlane.xlu0 %575
      %v577 = vmax.f32 %v568, %v573
      %v578 = vmax.f32 %v569, %v576
      %v579 = vsub.f32 %v568, %v577
      %v580 = vsub.f32 %v569, %v578
      %v581 = vmul.f32 %v579, 1.442695
      %v582 = vpow.pop %v581
      %v583 = vmul.f32 %v580, 1.442695
      %v584 = vpow.pop %v583
      %586 = vset.pattern.permute.xlu0 0
      %587 = vperm.xlu0 %586, %v577
      %v588 = vpop.permute.xlu0 %587
      %591 = vset.pattern.permute.xlu0 0
      %592 = vperm.xlu0 %591, %v578
      %v593 = vpop.permute.xlu0 %592
      %v595 = vsub.f32 %v562, %v588
      %v596 = vsub.f32 %v565, %v593
      %v597 = vmul.f32 %v595, 1.442695
      %v598 = vpow.pop %v597
      %v599 = vmul.f32 %v596, 1.442695
      %v600 = vpow.pop %v599
      %v601 = vld [vmem:[#allocation4] sm:$0xff]
      %v602 = vld [vmem:[#allocation4 + $0x8] sm:$0xff]
      %v603 = vmul.f32 %v582, %v601
      %v604 = vmul.f32 %v584, %v602
      %v605 = vsel %vm570, %v598, 0.0
      %606 = vadd.xlane.f32.xlu0 %v605
      %v607 = vpop.xlane.xlu0 %606
      %v608 = vsel %vm570, %v600, 0.0
      %609 = vadd.xlane.f32.xlu0 %v608
      %v610 = vpop.xlane.xlu0 %609
      %v611 = vadd.f32 %v603, %v607
      %v612 = vadd.f32 %v604, %v610
      %vm613 = vcmask 7168
      %614 = vst.msk [vmem:[#allocation4] sm:$0xff] %vm613, %v611
      %615 = vst.msk [vmem:[#allocation4 + $0x8] sm:$0xff] %vm613, %v612
      %v616 = vld [vmem:[#allocation5] sm:$0xff]
      %v617 = vld [vmem:[#allocation5 + $0x8] sm:$0xff]
      %619 = vset.pattern.permute.xlu0 0
      %620 = vperm.xlu0 %619, %v582
      %v621 = vpop.permute.xlu0 %620
      %624 = vset.pattern.permute.xlu0 0
      %625 = vperm.xlu0 %624, %v584
      %v626 = vpop.permute.xlu0 %625
      %v628 = vmul.f32 %v621, %v616
      %v629 = vmul.f32 %v626, %v617
      %v630 = vpack.c.bf16 %v600, %v598
      %v631 = vld [vmem:[%s363] sm:$0xf]
      %v632 = vld [vmem:[%s363 + $0x4] sm:$0xf]
      %v635 = vunpack.c.l.b16 %v631
      %v636 = vunpack.c.l.b16 %v632
      %v637 = vpack.c.b16 %v636, %v635
      %v640 = vsel %vm570, %v630, 0
      %642 = vmatprep.subr.bf16.mxu0 0
      %643 = vmatpush1.bf16.msra.mxu0 %v637
      %644 = vmatprep.subr.bf16.mxu0 0
      %645 = vmatpush1.bf16.msra.mxu0 0
      %646 = vmatprep.subr.bf16.mxu0 0
      %647 = vmatpush1.bf16.msra.mxu0 0
      %648 = vmatprep.subr.bf16.mxu0 0
      %649 = vmatpush1.bf16.msra.mxu0 0
      %650 = vmatprep.subr.bf16.mxu0 0
      %651 = vmatpush1.bf16.msra.mxu0 0
      %652 = vmatprep.subr.bf16.mxu0 0
      %653 = vmatpush1.bf16.msra.mxu0 0
      %654 = vmatprep.subr.bf16.mxu0 0
      %655 = vmatpush1.bf16.msra.mxu0 0
      %656 = vmatprep.subr.bf16.mxu0 0
      %657 = vmatpush1.bf16.msra.mxu0 0
      %658 = vmatprep.subr.bf16.mxu0 0
      %659 = vmatpush1.bf16.msra.mxu0 0
      %660 = vmatprep.subr.bf16.mxu0 0
      %661 = vmatpush1.bf16.msra.mxu0 0
      %662 = vmatprep.subr.bf16.mxu0 0
      %663 = vmatpush1.bf16.msra.mxu0 0
      %664 = vmatprep.subr.bf16.mxu0 0
      %665 = vmatpush1.bf16.msra.mxu0 0
      %666 = vmatprep.subr.bf16.mxu0 0
      %667 = vmatpush1.bf16.msra.mxu0 0
      %668 = vmatprep.subr.bf16.mxu0 0
      %669 = vmatpush1.bf16.msra.mxu0 0
      %670 = vmatprep.subr.bf16.mxu0 0
      %671 = vmatpush1.bf16.msra.mxu0 0
      %672 = vmatprep.subr.bf16.mxu0 0
      %673 = vmatpush1.bf16.msra.mxu0 0
      %674 = vmatprep.mubr.bf16.mxu0 0
      %675 = vmatmul.mubr.bf16.gmra.mrb[0].mxu0 %v640
      %v676 = vpop.f32.mrb[0].mxu0
      %v677 = vadd.f32 0.0, %v676
      %v678 = vpop.f32.mrb[0].mxu0
      %v679 = vpop.f32.mrb[0].mxu0
      %v680 = vadd.f32 0.0, %v679
      %v681 = vpop.f32.mrb[0].mxu0
      %682 = vdwg.mxu0
      %v683 = vadd.f32 %v628, %v677
      %v684 = vadd.f32 %v629, %v680
      %685 = vst.msk [vmem:[#allocation5] sm:$0xff] %vm520, %v683
      %686 = vst.msk [vmem:[#allocation5 + $0x8] sm:$0xff] %vm520, %v684
      %687 = vst.msk [vmem:[#allocation3] sm:$0xff] %vm613, %v577
      %688 = vst.msk [vmem:[#allocation3 + $0x8] sm:$0xff] %vm613, %v578
      %689 = vrot.lane.b32.xlu0 %v483, 32
      %v690 = vpop.permute.xlu0 %689
      %691 = vrot.lane.b32.xlu0 %v484, 32
      %v692 = vpop.permute.xlu0 %691
      %695 = vrot.lane.b32.xlu0 %v479, 96
      %v696 = vpop.permute.xlu0 %695
      %697 = vrot.lane.b32.xlu0 %v480, 96
      %v698 = vpop.permute.xlu0 %697
      %v701 = vsel %vm501, %v690, %v696
      %v702 = vsel %vm501, %v692, %v698
      %v703 = vmul.f32 %v479, %v509
      %v704 = vmul.f32 %v480, %v511
      %v705 = vmul.f32 %v701, %v509
      %v706 = vmul.f32 %v702, %v511
      %709 = vrot.lane.b32.xlu0 %v705, 64
      %v710 = vpop.permute.xlu0 %709
      %711 = vrot.lane.b32.xlu0 %v706, 64
      %v712 = vpop.permute.xlu0 %711
      %v715 = vadd.f32 %v703, %v710
      %v716 = vadd.f32 %v704, %v712
      %v717 = vpack.c.bf16 %v716, %v715
      %v718 = vld [vmem:[#allocation2] sm:$0xff]
      %720 = vrot.lane.b32.xlu0 %v718, 64
      %v721 = vpop.permute.xlu0 %720
      %723 = vrot.lane.b32.xlu0 %v717, 64
      %v724 = vpop.permute.xlu0 %723
      %v726 = vsel %vm520, %v721, 0
      %v729 = vsel %vm520, %v724, 0
      %731 = vmatprep.subr.bf16.mxu0 0
      %732 = vmatpush1.bf16.xpose.msra.mxu0 %v729
      %733 = vmatprep.subr.bf16.mxu0 0
      %734 = vmatpush1.bf16.xpose.msra.mxu0 0
      %735 = vmatprep.subr.bf16.mxu0 0
      %736 = vmatpush1.bf16.xpose.msra.mxu0 0
      %737 = vmatprep.subr.bf16.mxu0 0
      %738 = vmatpush1.bf16.xpose.msra.mxu0 0
      %739 = vmatprep.subr.bf16.mxu0 0
      %740 = vmatpush1.bf16.xpose.msra.mxu0 0
      %741 = vmatprep.subr.bf16.mxu0 0
      %742 = vmatpush1.bf16.xpose.msra.mxu0 0
      %743 = vmatprep.subr.bf16.mxu0 0
      %744 = vmatpush1.bf16.xpose.msra.mxu0 0
      %745 = vmatprep.subr.bf16.mxu0 0
      %746 = vmatpush1.bf16.xpose.msra.mxu0 0
      %747 = vmatprep.subr.bf16.mxu0 0
      %748 = vmatpush1.bf16.xpose.msra.mxu0 0
      %749 = vmatprep.subr.bf16.mxu0 0
      %750 = vmatpush1.bf16.xpose.msra.mxu0 0
      %751 = vmatprep.subr.bf16.mxu0 0
      %752 = vmatpush1.bf16.xpose.msra.mxu0 0
      %753 = vmatprep.subr.bf16.mxu0 0
      %754 = vmatpush1.bf16.xpose.msra.mxu0 0
      %755 = vmatprep.subr.bf16.mxu0 0
      %756 = vmatpush1.bf16.xpose.msra.mxu0 0
      %757 = vmatprep.subr.bf16.mxu0 0
      %758 = vmatpush1.bf16.xpose.msra.mxu0 0
      %759 = vmatprep.subr.bf16.mxu0 0
      %760 = vmatpush1.bf16.xpose.msra.mxu0 0
      %761 = vmatprep.subr.bf16.mxu0 0
      %762 = vmatpush1.bf16.xpose.msra.mxu0 0
      %763 = vmatprep.mubr.bf16.mxu0 0
      %764 = vmatmul.mubr.bf16.gmra.mrb[0].mxu0 %v726
      %v765 = vpop.f32.mrb[0].mxu0
      %v766 = vadd.f32 0.0, %v765
      %v767 = vpop.f32.mrb[0].mxu0
      %v768 = vpop.f32.mrb[0].mxu0
      %v769 = vadd.f32 0.0, %v768
      %v770 = vpop.f32.mrb[0].mxu0
      %771 = vdwg.mxu0
      %v772 = vld [vmem:[#allocation3] sm:$0xff]
      %v773 = vld [vmem:[#allocation3 + $0x8] sm:$0xff]
      %v774 = vsel %vm570, %v766, -inf
      %775 = vmax.xlane.f32.xlu0 %v774
      %v776 = vpop.xlane.xlu0 %775
      %v777 = vsel %vm570, %v769, -inf
      %778 = vmax.xlane.f32.xlu0 %v777
      %v779 = vpop.xlane.xlu0 %778
      %v780 = vmax.f32 %v772, %v776
      %v781 = vmax.f32 %v773, %v779
      %v782 = vsub.f32 %v772, %v780
      %v783 = vsub.f32 %v773, %v781
      %v784 = vmul.f32 %v782, 1.442695
      %v785 = vpow.pop %v784
      %v786 = vmul.f32 %v783, 1.442695
      %v787 = vpow.pop %v786
      %789 = vset.pattern.permute.xlu0 1
      %790 = vperm.xlu0 %789, %v780
      %v791 = vpop.permute.xlu0 %790
      %794 = vset.pattern.permute.xlu0 1
      %795 = vperm.xlu0 %794, %v781
      %v796 = vpop.permute.xlu0 %795
      %v798 = vsub.f32 %v766, %v791
      %v799 = vsub.f32 %v769, %v796
      %v800 = vmul.f32 %v798, 1.442695
      %v801 = vpow.pop %v800
      %v802 = vmul.f32 %v799, 1.442695
      %v803 = vpow.pop %v802
      %v804 = vld [vmem:[#allocation4] sm:$0xff]
      %v805 = vld [vmem:[#allocation4 + $0x8] sm:$0xff]
      %v806 = vmul.f32 %v785, %v804
      %v807 = vmul.f32 %v787, %v805
      %v808 = vsel %vm570, %v801, 0.0
      %809 = vadd.xlane.f32.xlu0 %v808
      %v810 = vpop.xlane.xlu0 %809
      %v811 = vsel %vm570, %v803, 0.0
      %812 = vadd.xlane.f32.xlu0 %v811
      %v813 = vpop.xlane.xlu0 %812
      %v814 = vadd.f32 %v806, %v810
      %v815 = vadd.f32 %v807, %v813
      %vm816 = vcmask 15368
      %817 = vst.msk [vmem:[#allocation4] sm:$0xff] %vm816, %v814
      %818 = vst.msk [vmem:[#allocation4 + $0x8] sm:$0xff] %vm816, %v815
      %v819 = vld [vmem:[#allocation5] sm:$0xff]
      %v820 = vld [vmem:[#allocation5 + $0x8] sm:$0xff]
      %822 = vset.pattern.permute.xlu0 1
      %823 = vperm.xlu0 %822, %v785
      %v824 = vpop.permute.xlu0 %823
      %827 = vset.pattern.permute.xlu0 1
      %828 = vperm.xlu0 %827, %v787
      %v829 = vpop.permute.xlu0 %828
      %v831 = vmul.f32 %v824, %v819
      %v832 = vmul.f32 %v829, %v820
      %v833 = vpack.c.bf16 %v803, %v801
      %v834 = vld [vmem:[%s363] sm:$0xf]
      %v835 = vld [vmem:[%s363 + $0x4] sm:$0xf]
      %v838 = vunpack.c.l.b16 %v834
      %v839 = vunpack.c.l.b16 %v835
      %v840 = vpack.c.b16 %v839, %v838
      %841 = vrot.lane.b32.xlu0 %v840, 64
      %v842 = vpop.permute.xlu0 %841
      %v845 = vsel %vm570, %v833, 0
      %847 = vmatprep.subr.bf16.mxu0 0
      %848 = vmatpush1.bf16.msra.mxu0 %v842
      %849 = vmatprep.subr.bf16.mxu0 0
      %850 = vmatpush1.bf16.msra.mxu0 0
      %851 = vmatprep.subr.bf16.mxu0 0
      %852 = vmatpush1.bf16.msra.mxu0 0
      %853 = vmatprep.subr.bf16.mxu0 0
      %854 = vmatpush1.bf16.msra.mxu0 0
      %855 = vmatprep.subr.bf16.mxu0 0
      %856 = vmatpush1.bf16.msra.mxu0 0
      %857 = vmatprep.subr.bf16.mxu0 0
      %858 = vmatpush1.bf16.msra.mxu0 0
      %859 = vmatprep.subr.bf16.mxu0 0
      %860 = vmatpush1.bf16.msra.mxu0 0
      %861 = vmatprep.subr.bf16.mxu0 0
      %862 = vmatpush1.bf16.msra.mxu0 0
      %863 = vmatprep.subr.bf16.mxu0 0
      %864 = vmatpush1.bf16.msra.mxu0 0
      %865 = vmatprep.subr.bf16.mxu0 0
      %866 = vmatpush1.bf16.msra.mxu0 0
      %867 = vmatprep.subr.bf16.mxu0 0
      %868 = vmatpush1.bf16.msra.mxu0 0
      %869 = vmatprep.subr.bf16.mxu0 0
      %870 = vmatpush1.bf16.msra.mxu0 0
      %871 = vmatprep.subr.bf16.mxu0 0
      %872 = vmatpush1.bf16.msra.mxu0 0
      %873 = vmatprep.subr.bf16.mxu0 0
      %874 = vmatpush1.bf16.msra.mxu0 0
      %875 = vmatprep.subr.bf16.mxu0 0
      %876 = vmatpush1.bf16.msra.mxu0 0
      %877 = vmatprep.subr.bf16.mxu0 0
      %878 = vmatpush1.bf16.msra.mxu0 0
      %879 = vmatprep.mubr.bf16.mxu0 0
      %880 = vmatmul.mubr.bf16.gmra.mrb[0].mxu0 %v845
      %v881 = vpop.f32.mrb[0].mxu0
      %v882 = vadd.f32 0.0, %v881
      %v883 = vpop.f32.mrb[0].mxu0
      %v884 = vpop.f32.mrb[0].mxu0
      %v885 = vadd.f32 0.0, %v884
      %v886 = vpop.f32.mrb[0].mxu0
      %887 = vdwg.mxu0
      %890 = vrot.lane.b32.xlu0 %v882, 64
      %v891 = vpop.permute.xlu0 %890
      %892 = vrot.lane.b32.xlu0 %v885, 64
      %v893 = vpop.permute.xlu0 %892
      %v896 = vadd.f32 %v831, %v891
      %v897 = vadd.f32 %v832, %v893
      %vm898 = vcmask 1048064
      %899 = vst.msk [vmem:[#allocation5] sm:$0xff] %vm898, %v896
      %900 = vst.msk [vmem:[#allocation5 + $0x8] sm:$0xff] %vm898, %v897
      %901 = vst.msk [vmem:[#allocation3] sm:$0xff] %vm816, %v780
      %902 = vst.msk [vmem:[#allocation3 + $0x8] sm:$0xff] %vm816, %v781
      // Predicated region
      $region45: #{ddit_block.4} parent=39 // pred_check
        %p903 = pneg %p388
      $region46: #{ddit_block.4} parent=39 // pred_check_branch
        %905 = sbr.rel (%p903) target = $region48
      $region47: #{ddit_block.4} parent=39 // pred_region
        %v906 = vld [vmem:[#allocation4] sm:$0xff]
        %v907 = vld [vmem:[#allocation4 + $0x8] sm:$0xff]
        %v908 = vrcp.pop %v906
        %v909 = vrcp.pop %v907
        %v910 = vld [vmem:[#allocation5] sm:$0xff]
        %v911 = vld [vmem:[#allocation5 + $0x8] sm:$0xff]
        %913 = vset.pattern.permute.xlu0 0
        %914 = vperm.xlu0 %913, %v908
        %v915 = vpop.permute.xlu0 %914
        %918 = vset.pattern.permute.xlu0 0
        %919 = vperm.xlu0 %918, %v909
        %v920 = vpop.permute.xlu0 %919
        %v922 = vmul.f32 %v910, %v915
        %v923 = vmul.f32 %v911, %v920
        %924 = vset.pattern.permute.xlu0 1
        %925 = vperm.xlu0 %924, %v908
        %v926 = vpop.permute.xlu0 %925
        %928 = vset.pattern.permute.xlu0 1
        %929 = vperm.xlu0 %928, %v909
        %v930 = vpop.permute.xlu0 %929
        %v932 = vmul.f32 %v910, %v926
        %v933 = vmul.f32 %v911, %v930
        %v934 = vsel %vm520, %v922, %v932
        %v935 = vsel %vm520, %v923, %v933
        %v936 = vpack.c.bf16 %v935, %v934
        %v938 = vunpack.c.l.b16 %v936
        %v939 = vunpack.c.h.b16 %v936
        %v940 = vpack.c.b16 %v938, %v938
        %v941 = vpack.c.b16 %v939, %v939
        %944 = vst [vmem:[%s385] sm:$0xf] %v940
        %945 = vst [vmem:[%s385 + $0x4] sm:$0xf] %v941
      $region48: #{ddit_block.4} parent=39 // pred_fallthru
        _
      %s946 = smul.u32 2, %s22
      %p947 = scmp.lt.s32.totalorder %s21, 1
      %s948 = scalar_select %p947, %s21, 1
      %p949 = scmp.lt.s32.totalorder %s946, 1
      %s950 = scalar_select %p949, %s946, 1
      %s951 = smul.addr %s948, 2
      %s952 = sadd.s32 %s950, %s951
      %s953 = smul.addr %s952, 4
      %s954 = scalar_lea.vmem %s5, %s953
      // Predicated region
      $region49: #{ddit_block.4} parent=39 // pred_check
        %p955 = pneg %p191
      $region50: #{ddit_block.4} parent=39 // pred_check_branch
        %957 = sbr.rel (%p955) target = $region52
      $region51: #{ddit_block.4} parent=39 // pred_region
        %s958 = smul.u32 2, %s22
      $region52: #{ddit_block.4} parent=39 // pred_fallthru
        _
    $region40: #{ddit_block.4} parent=5 // pred_fallthru
      _
    %p959 = scmp.le.s32.totalorder 2, %s11
    // Predicated region
    $region53: #{ddit_block.4} parent=5 // pred_check
      %p960 = pneg %p959
    $region54: #{ddit_block.4} parent=5 // pred_check_branch
      %962 = sbr.rel (%p960) target = $region56
    $region55: #{ddit_block.4} parent=5 // pred_region
      %s963 = ssub.s32 %s11, 2
      // Predicated region
      $region57: #{ddit_block.4} parent=55 // pred_check
        %p964 = pneg %p197
      $region58: #{ddit_block.4} parent=55 // pred_check_branch
        %966 = sbr.rel (%p964) target = $region60
      $region59: #{ddit_block.4} parent=55 // pred_region
        %s967 = smul.u32 2, %s25
        %p968 = scmp.lt.s32.totalorder %s24, 1
        %s969 = scalar_select %p968, %s24, 1
        %p970 = scmp.lt.s32.totalorder %s967, 1
        %s971 = scalar_select %p970, %s967, 1
        %s972 = smul.addr %s969, 2
        %s973 = sadd.s32 %s971, %s972
        %s974 = smul.addr %s973, 4
        %s975 = scalar_lea.vmem %s5, %s974
      $region60: #{ddit_block.4} parent=55 // pred_fallthru
        _
    $region56: #{ddit_block.4} parent=5 // pred_fallthru
      _
  $region6: #{ddit_block.4} parent=0 // loop_footer
    %s15 = sadd.s32 1, %s11
  $region7: #{ddit_block.4} parent=0 // loop_footer_branch
    %10 = sbr.rel target = $region3
  $region8: #{ddit_block.4} parent=0 // loop_exit
    _

// kernel: ddit_block.5
$region0: #{ddit_block.5}
  #allocation0 [shape = 'u32[]', space=smem, size = 0x4, offset = 0x4, fixed_abs, tag = 'smem constant byte address 0x4 - core index']
  #allocation1 [shape = 'u32[144,128]{1,0:T(1,128)}', space=vmem, size = 0x12000, scoped, tag = 'internal scratch']
  %s0 = inlined_call_operand.vmem [shape: bf16[2,16,128], index: 0, kind: input, shape index: {}]
  %s1 = inlined_call_operand.vmem [shape: f32[2,16,128], index: 1, kind: input, shape index: {}]
  %s2 = inlined_call_operand.vmem [shape: f32[2,4,128], index: 2, kind: input, shape index: {}]
  %s3 = inlined_call_operand.vmem [shape: bf16[128,128], index: 3, kind: input, shape index: {}]
  %s4 = inlined_call_operand.vmem [shape: bf16[128,512], index: 4, kind: input, shape index: {}]
  %s5 = inlined_call_operand.vmem [shape: f32[1,512], index: 5, kind: input, shape index: {}]
  %s6 = inlined_call_operand.vmem [shape: bf16[512,128], index: 6, kind: input, shape index: {}]
  %s7 = inlined_call_operand.vmem [shape: f32[1,128], index: 7, kind: input, shape index: {}]
  %s8 = inlined_call_operand.hbm [shape: f32[2,16,128], index: 8, kind: output, shape index: {}]
  %s9 = sld [smem:[#allocation0]]
  $region65: #{ddit_block.5} parent=0
    _
  %s11 = ssub.s32 1, %s9
  %s12 = scalar_select 0, %s11, %s9
  $region1: #{ddit_block.5} parent=0
    #allocation2 [shape = 'u8[16384]{0}', space=vmem, size = 0x4000, scoped, tag = 'output window, operand 0']
    #allocation3 [shape = 's32[2]{0}', space=sflag, size = 0x8, scoped, tag = 'scoped memory for ddit_block.5']
    %13 = vsyncpa [#allocation3], 0
    %s14 = scalar_lea.sflag [#allocation3], 1
    %15 = vsyncpa %s14, 0
    loop: start=0, step=1, limit=4
    $region2: #{ddit_block.5} parent=1 // loop_pre_header
      _
    $region3: #{ddit_block.5} parent=1 // loop_header
      %s17 = sphi 0, %s21
      %p18 = scmp.ge.s32.totalorder %s17, 4
      %s24 = sphi 0, %s36
      %s25 = sphi 0, %s32
      %s26 = sphi 0, %s24
      %s27 = sphi 0, %s25
      %s28 = sphi 0, %s26
      %s29 = sphi 0, %s27
      %s41 = sphi 0, %s43
      %s44 = sphi 0, %s41
      %s45 = sphi 0, %s44
      %s61 = sphi 0, %s45
      %s69 = sphi 0, %s71
      %s72 = sphi 0, %s69
      %s73 = sphi 0, %s72
      %s89 = sphi 0, %s73
      %s95 = sphi 0, %s97
      %s98 = sphi 0, %s95
      %s99 = sphi 0, %s98
      %s115 = sphi 0, %s99
      %s119 = sphi 0, %s119
      %s121 = sphi 0, %s119
      %s122 = sphi 0, %s121
      %s136 = sphi 0, %s122
      %s140 = sphi 0, %s140
      %s142 = sphi 0, %s140
      %s143 = sphi 0, %s142
      %s157 = sphi 0, %s143
      %s161 = sphi 0, %s161
      %s163 = sphi 0, %s161
      %s164 = sphi 0, %s163
      %s178 = sphi 0, %s164
      %s182 = sphi 0, %s182
      %s184 = sphi 0, %s182
      %s185 = sphi 0, %s184
      %s199 = sphi 0, %s185
      %s203 = sphi 0, %s203
      %s205 = sphi 0, %s203
      %s206 = sphi 0, %s205
      %s220 = sphi 0, %s206
      %s228 = sphi 0, %s230
      %s231 = sphi 0, %s228
      %s232 = sphi 0, %s231
      %s248 = sphi 0, %s232
    $region4: #{ddit_block.5} parent=1 // loop_header_branch
      %20 = sbr.rel (%p18) target = $region8
    $region5: #{ddit_block.5} parent=1 // loop_body
      %s22 = ssub.s32 %s17, 1
      %s23 = ssub.s32 %s17, 2
      %s30 = sadd.s32 1, %s25
      %p31 = scmp.ge.s32.totalorder %s30, 2
      %s32 = scalar_select %p31, 0, %s30
      %s33 = sadd.s32 1, %s24
      %s34 = scalar_select %p31, %s33, %s24
      %p35 = scmp.ge.s32.totalorder %s34, 1
      %s36 = scalar_select %p35, 0, %s34
      %s37 = ssub.s32 %s25, %s32
      %s38 = ssub.s32 %s24, %s36
      %s39 = sor.u32 %s37, %s38
      %p40 = scmp.eq.s32.totalorder %s39, 0
      %s42 = sadd.s32 %s41, 1
      %s43 = scalar_select %p40, %s41, %s42
      %p46 = pneg %p40
      %p47 = scmp.eq.s32.totalorder %s17, 1
      %p48 = por %p46, %p47
      %p49 = scmp.ne.s32.totalorder %s41, %s44
      %p50 = scmp.eq.s32.totalorder %s17, 0
      %p51 = por %p49, %p50
      %p52 = scmp.ne.s32.totalorder %s41, %s44
      %p53 = scmp.eq.s32.totalorder %s22, 1
      %p54 = por %p52, %p53
      %p55 = scmp.ne.s32.totalorder %s44, %s45
      %p56 = scmp.eq.s32.totalorder %s22, 0
      %p57 = por %p55, %p56
      %p58 = scmp.ne.s32.totalorder %s44, %s45
      %p59 = scmp.eq.s32.totalorder %s23, 1
      %p60 = por %p58, %p59
      %p62 = scmp.ne.s32.totalorder %s45, %s61
      %p63 = scmp.eq.s32.totalorder %s23, 0
      %p64 = por %p62, %p63
      %s65 = ssub.s32 %s25, %s32
      %s66 = ssub.s32 %s24, %s36
      %s67 = sor.u32 %s65, %s66
      %p68 = scmp.eq.s32.totalorder %s67, 0
      %s70 = sadd.s32 %s69, 1
      %s71 = scalar_select %p68, %s69, %s70
      %p74 = pneg %p68
      %p75 = scmp.eq.s32.totalorder %s17, 1
      %p76 = por %p74, %p75
      %p77 = scmp.ne.s32.totalorder %s69, %s72
      %p78 = scmp.eq.s32.totalorder %s17, 0
      %p79 = por %p77, %p78
      %p80 = scmp.ne.s32.totalorder %s69, %s72
      %p81 = scmp.eq.s32.totalorder %s22, 1
      %p82 = por %p80, %p81
      %p83 = scmp.ne.s32.totalorder %s72, %s73
      %p84 = scmp.eq.s32.totalorder %s22, 0
      %p85 = por %p83, %p84
      %p86 = scmp.ne.s32.totalorder %s72, %s73
      %p87 = scmp.eq.s32.totalorder %s23, 1
      %p88 = por %p86, %p87
      %p90 = scmp.ne.s32.totalorder %s73, %s89
      %p91 = scmp.eq.s32.totalorder %s23, 0
      %p92 = por %p90, %p91
      %s93 = ssub.s32 %s25, %s32
      %p94 = scmp.eq.s32.totalorder %s93, 0
      %s96 = sadd.s32 %s95, 1
      %s97 = scalar_select %p94, %s95, %s96
      %p100 = pneg %p94
      %p101 = scmp.eq.s32.totalorder %s17, 1
      %p102 = por %p100, %p101
      %p103 = scmp.ne.s32.totalorder %s95, %s98
      %p104 = scmp.eq.s32.totalorder %s17, 0
      %p105 = por %p103, %p104
      %p106 = scmp.ne.s32.totalorder %s95, %s98
      %p107 = scmp.eq.s32.totalorder %s22, 1
      %p108 = por %p106, %p107
      %p109 = scmp.ne.s32.totalorder %s98, %s99
      %p110 = scmp.eq.s32.totalorder %s22, 0
      %p111 = por %p109, %p110
      %p112 = scmp.ne.s32.totalorder %s98, %s99
      %p113 = scmp.eq.s32.totalorder %s23, 1
      %p114 = por %p112, %p113
      %p116 = scmp.ne.s32.totalorder %s99, %s115
      %p117 = scmp.eq.s32.totalorder %s23, 0
      %p118 = por %p116, %p117
      %s120 = sadd.s32 %s119, 1
      %p123 = scmp.eq.s32.totalorder %s17, 1
      %p124 = scmp.ne.s32.totalorder %s119, %s121
      %p125 = scmp.eq.s32.totalorder %s17, 0
      %p126 = por %p124, %p125
      %p127 = scmp.ne.s32.totalorder %s119, %s121
      %p128 = scmp.eq.s32.totalorder %s22, 1
      %p129 = por %p127, %p128
      %p130 = scmp.ne.s32.totalorder %s121, %s122
      %p131 = scmp.eq.s32.totalorder %s22, 0
      %p132 = por %p130, %p131
      %p133 = scmp.ne.s32.totalorder %s121, %s122
      %p134 = scmp.eq.s32.totalorder %s23, 1
      %p135 = por %p133, %p134
      %p137 = scmp.ne.s32.totalorder %s122, %s136
      %p138 = scmp.eq.s32.totalorder %s23, 0
      %p139 = por %p137, %p138
      %s141 = sadd.s32 %s140, 1
      %p144 = scmp.eq.s32.totalorder %s17, 1
      %p145 = scmp.ne.s32.totalorder %s140, %s142
      %p146 = scmp.eq.s32.totalorder %s17, 0
      %p147 = por %p145, %p146
      %p148 = scmp.ne.s32.totalorder %s140, %s142
      %p149 = scmp.eq.s32.totalorder %s22, 1
      %p150 = por %p148, %p149
      %p151 = scmp.ne.s32.totalorder %s142, %s143
      %p152 = scmp.eq.s32.totalorder %s22, 0
      %p153 = por %p151, %p152
      %p154 = scmp.ne.s32.totalorder %s142, %s143
      %p155 = scmp.eq.s32.totalorder %s23, 1
      %p156 = por %p154, %p155
      %p158 = scmp.ne.s32.totalorder %s143, %s157
      %p159 = scmp.eq.s32.totalorder %s23, 0
      %p160 = por %p158, %p159
      %s162 = sadd.s32 %s161, 1
      %p165 = scmp.eq.s32.totalorder %s17, 1
      %p166 = scmp.ne.s32.totalorder %s161, %s163
      %p167 = scmp.eq.s32.totalorder %s17, 0
      %p168 = por %p166, %p167
      %p169 = scmp.ne.s32.totalorder %s161, %s163
      %p170 = scmp.eq.s32.totalorder %s22, 1
      %p171 = por %p169, %p170
      %p172 = scmp.ne.s32.totalorder %s163, %s164
      %p173 = scmp.eq.s32.totalorder %s22, 0
      %p174 = por %p172, %p173
      %p175 = scmp.ne.s32.totalorder %s163, %s164
      %p176 = scmp.eq.s32.totalorder %s23, 1
      %p177 = por %p175, %p176
      %p179 = scmp.ne.s32.totalorder %s164, %s178
      %p180 = scmp.eq.s32.totalorder %s23, 0
      %p181 = por %p179, %p180
      %s183 = sadd.s32 %s182, 1
      %p186 = scmp.eq.s32.totalorder %s17, 1
      %p187 = scmp.ne.s32.totalorder %s182, %s184
      %p188 = scmp.eq.s32.totalorder %s17, 0
      %p189 = por %p187, %p188
      %p190 = scmp.ne.s32.totalorder %s182, %s184
      %p191 = scmp.eq.s32.totalorder %s22, 1
      %p192 = por %p190, %p191
      %p193 = scmp.ne.s32.totalorder %s184, %s185
      %p194 = scmp.eq.s32.totalorder %s22, 0
      %p195 = por %p193, %p194
      %p196 = scmp.ne.s32.totalorder %s184, %s185
      %p197 = scmp.eq.s32.totalorder %s23, 1
      %p198 = por %p196, %p197
      %p200 = scmp.ne.s32.totalorder %s185, %s199
      %p201 = scmp.eq.s32.totalorder %s23, 0
      %p202 = por %p200, %p201
      %s204 = sadd.s32 %s203, 1
      %p207 = scmp.eq.s32.totalorder %s17, 1
      %p208 = scmp.ne.s32.totalorder %s203, %s205
      %p209 = scmp.eq.s32.totalorder %s17, 0
      %p210 = por %p208, %p209
      %p211 = scmp.ne.s32.totalorder %s203, %s205
      %p212 = scmp.eq.s32.totalorder %s22, 1
      %p213 = por %p211, %p212
      %p214 = scmp.ne.s32.totalorder %s205, %s206
      %p215 = scmp.eq.s32.totalorder %s22, 0
      %p216 = por %p214, %p215
      %p217 = scmp.ne.s32.totalorder %s205, %s206
      %p218 = scmp.eq.s32.totalorder %s23, 1
      %p219 = por %p217, %p218
      %p221 = scmp.ne.s32.totalorder %s206, %s220
      %p222 = scmp.eq.s32.totalorder %s23, 0
      %p223 = por %p221, %p222
      %s224 = ssub.s32 %s25, %s32
      %s225 = ssub.s32 %s24, %s36
      %s226 = sor.u32 %s224, %s225
      %p227 = scmp.eq.s32.totalorder %s226, 0
      %s229 = sadd.s32 %s228, 1
      %s230 = scalar_select %p227, %s228, %s229
      %p233 = pneg %p227
      %p234 = scmp.eq.s32.totalorder %s17, 1
      %p235 = por %p233, %p234
      %p236 = scmp.ne.s32.totalorder %s228, %s231
      %p237 = scmp.eq.s32.totalorder %s17, 0
      %p238 = por %p236, %p237
      %p239 = scmp.ne.s32.totalorder %s228, %s231
      %p240 = scmp.eq.s32.totalorder %s22, 1
      %p241 = por %p239, %p240
      %p242 = scmp.ne.s32.totalorder %s231, %s232
      %p243 = scmp.eq.s32.totalorder %s22, 0
      %p244 = por %p242, %p243
      %p245 = scmp.ne.s32.totalorder %s231, %s232
      %p246 = scmp.eq.s32.totalorder %s23, 1
      %p247 = por %p245, %p246
      %p249 = scmp.ne.s32.totalorder %s232, %s248
      %p250 = scmp.eq.s32.totalorder %s23, 0
      %p251 = por %p249, %p250
      %p252 = scmp.le.s32.totalorder 1, %s17
      %p253 = scmp.lt.s32.totalorder %s17, 3
      %p254 = pnand %p252, %p253
      %p255 = pneg %p254
      // Predicated region
      $region9: #{ddit_block.5} parent=5 // pred_check
        _
      $region10: #{ddit_block.5} parent=5 // pred_check_branch
        %257 = sbr.rel (%p254) target = $region12
      $region11: #{ddit_block.5} parent=5 // pred_region
        %s258 = ssub.s32 %s17, 1
        // Predicated region
        $region13: #{ddit_block.5} parent=11 // pred_check
          %p259 = pneg %p132
        $region14: #{ddit_block.5} parent=11 // pred_check_branch
          %261 = sbr.rel (%p259) target = $region16
        $region15: #{ddit_block.5} parent=11 // pred_region
          _
        $region16: #{ddit_block.5} parent=11 // pred_fallthru
          _
        // Predicated region
        $region17: #{ddit_block.5} parent=11 // pred_check
          %p262 = pneg %p153
        $region18: #{ddit_block.5} parent=11 // pred_check_branch
          %264 = sbr.rel (%p262) target = $region20
        $region19: #{ddit_block.5} parent=11 // pred_region
          _
        $region20: #{ddit_block.5} parent=11 // pred_fallthru
          _
        // Predicated region
        $region21: #{ddit_block.5} parent=11 // pred_check
          %p265 = pneg %p174
        $region22: #{ddit_block.5} parent=11 // pred_check_branch
          %267 = sbr.rel (%p265) target = $region24
        $region23: #{ddit_block.5} parent=11 // pred_region
          _
        $region24: #{ddit_block.5} parent=11 // pred_fallthru
          _
        // Predicated region
        $region25: #{ddit_block.5} parent=11 // pred_check
          %p268 = pneg %p195
        $region26: #{ddit_block.5} parent=11 // pred_check_branch
          %270 = sbr.rel (%p268) target = $region28
        $region27: #{ddit_block.5} parent=11 // pred_region
          _
        $region28: #{ddit_block.5} parent=11 // pred_fallthru
          _
        // Predicated region
        $region29: #{ddit_block.5} parent=11 // pred_check
          %p271 = pneg %p216
        $region30: #{ddit_block.5} parent=11 // pred_check_branch
          %273 = sbr.rel (%p271) target = $region32
        $region31: #{ddit_block.5} parent=11 // pred_region
          _
        $region32: #{ddit_block.5} parent=11 // pred_fallthru
          _
      $region12: #{ddit_block.5} parent=5 // pred_fallthru
        _
      %p274 = scmp.lt.s32.totalorder %s17, 2
      // Predicated region
      $region33: #{ddit_block.5} parent=5 // pred_check
        %p275 = pneg %p274
      $region34: #{ddit_block.5} parent=5 // pred_check_branch
        %277 = sbr.rel (%p275) target = $region36
      $region35: #{ddit_block.5} parent=5 // pred_region
        // Predicated region
        $region37: #{ddit_block.5} parent=35 // pred_check
          %p278 = pneg %p51
        $region38: #{ddit_block.5} parent=35 // pred_check_branch
          %280 = sbr.rel (%p278) target = $region40
        $region39: #{ddit_block.5} parent=35 // pred_region
          %s281 = smul.u32 2, %s24
          %p282 = scmp.lt.s32.totalorder %s25, 1
          %s283 = scalar_select %p282, %s25, 1
          %p284 = scmp.lt.s32.totalorder %s281, 1
          %s285 = scalar_select %p284, %s281, 1
          %s286 = smul.addr %s283, 2
          %s287 = sadd.s32 %s285, %s286
          %s288 = smul.addr %s287, 4
          %s289 = scalar_lea.vmem %s0, %s288
          %s290 = smul.u32 2, %s24
        $region40: #{ddit_block.5} parent=35 // pred_fallthru
          _
        // Predicated region
        $region41: #{ddit_block.5} parent=35 // pred_check
          %p291 = pneg %p79
        $region42: #{ddit_block.5} parent=35 // pred_check_branch
          %293 = sbr.rel (%p291) target = $region44
        $region43: #{ddit_block.5} parent=35 // pred_region
          %s294 = smul.u32 2, %s24
          %p295 = scmp.lt.s32.totalorder %s25, 1
          %s296 = scalar_select %p295, %s25, 1
          %p297 = scmp.lt.s32.totalorder %s294, 1
          %s298 = scalar_select %p297, %s294, 1
          %s299 = smul.addr %s296, 2
          %s300 = sadd.s32 %s298, %s299
          %s301 = smul.addr %s300, 8
          %s302 = scalar_lea.vmem %s1, %s301
          %s303 = smul.u32 2, %s24
        $region44: #{ddit_block.5} parent=35 // pred_fallthru
          _
        // Predicated region
        $region45: #{ddit_block.5} parent=35 // pred_check
          %p304 = pneg %p105
        $region46: #{ddit_block.5} parent=35 // pred_check_branch
          %306 = sbr.rel (%p304) target = $region48
        $region47: #{ddit_block.5} parent=35 // pred_region
          %p307 = scmp.lt.s32.totalorder %s25, 1
          %s308 = scalar_select %p307, %s25, 1
          %s309 = smul.addr %s308, 4
          %s310 = scalar_lea.vmem %s2, %s309
        $region48: #{ddit_block.5} parent=35 // pred_fallthru
          _
      $region36: #{ddit_block.5} parent=5 // pred_fallthru
        _
      %p311 = scmp.le.s32.totalorder 1, %s17
      %p312 = scmp.lt.s32.totalorder %s17, 3
      %p313 = pnand %p311, %p312
      %p314 = pneg %p313
      // Predicated region
      $region49: #{ddit_block.5} parent=5 // pred_check
        _
      $region50: #{ddit_block.5} parent=5 // pred_check_branch
        %316 = sbr.rel (%p313) target = $region52
      $region51: #{ddit_block.5} parent=5 // pred_region
        %s317 = ssub.s32 %s17, 1
        %s318 = smul.u32 2, %s26
        %p319 = scmp.lt.s32.totalorder %s27, 1
        %s320 = scalar_select %p319, %s27, 1
        %p321 = scmp.lt.s32.totalorder %s318, 1
        %s322 = scalar_select %p321, %s318, 1
        %s323 = smul.addr %s320, 2
        %s324 = sadd.s32 %s322, %s323
        %s325 = smul.addr %s324, 4
        %s326 = scalar_lea.vmem %s0, %s325
        %p327 = pneg %p57
        %p328 = pneg %p54
        %s329 = smul.u32 2, %s26
        %p330 = scmp.lt.s32.totalorder %s27, 1
        %s331 = scalar_select %p330, %s27, 1
        %p332 = scmp.lt.s32.totalorder %s329, 1
        %s333 = scalar_select %p332, %s329, 1
        %s334 = smul.addr %s331, 2
        %s335 = sadd.s32 %s333, %s334
        %s336 = smul.addr %s335, 8
        %s337 = scalar_lea.vmem %s1, %s336
        %p338 = pneg %p85
        %p339 = pneg %p82
        %p340 = scmp.lt.s32.totalorder %s27, 1
        %s341 = scalar_select %p340, %s27, 1
        %s342 = smul.addr %s341, 4
        %s343 = scalar_lea.vmem %s2, %s342
        %p344 = pneg %p111
        %p345 = pneg %p108
        %p346 = pneg %p132
        %p347 = pneg %p129
        %p348 = pneg %p153
        %p349 = pneg %p150
        %p350 = pneg %p174
        %p351 = pneg %p171
        %p352 = pneg %p195
        %p353 = pneg %p192
        %p354 = pneg %p216
        %p355 = pneg %p213
        %p356 = pneg %p244
        %p357 = pneg %p241
        %s358 = sand.u32 %s231, 1
        %s359 = scalar_lea.sflag [#allocation3], %s358
        %s360 = sand.u32 %s231, 1
        %s361 = smul.addr %s360, 16
        %s362 = scalar_lea.vmem [#allocation2], %s361
        %s363 = smul.u32 2, %s26
        %p364 = scmp.lt.s32.totalorder %s27, 1
        %s365 = scalar_select %p364, %s27, 1
        %p366 = scmp.lt.s32.totalorder %s363, 1
        %s367 = scalar_select %p366, %s363, 1
        %s368 = smul.addr %s365, 2
        %s369 = sadd.s32 %s367, %s368
        %s370 = smul.addr %s369, 4
        %s371 = scalar_lea.vmem %s0, %s370
        %s372 = smul.u32 2, %s26
        %s373 = smul.u32 2, %s26
        %p374 = scmp.lt.s32.totalorder %s27, 1
        %s375 = scalar_select %p374, %s27, 1
        %p376 = scmp.lt.s32.totalorder %s373, 1
        %s377 = scalar_select %p376, %s373, 1
        %s378 = smul.addr %s375, 2
        %s379 = sadd.s32 %s377, %s378
        %s380 = smul.addr %s379, 8
        %s381 = scalar_lea.vmem %s1, %s380
        %s382 = smul.u32 2, %s26
        %p383 = scmp.lt.s32.totalorder %s27, 1
        %s384 = scalar_select %p383, %s27, 1
        %s385 = smul.addr %s384, 4
        %s386 = scalar_lea.vmem %s2, %s385
        %s387 = smul.u32 2, %s26
        %v389 = vld [vmem:[%s371] sm:$0xf]
        %v390 = vld [vmem:[%s371 + $0x4] sm:$0xf]
        %v391 = vld [vmem:[%s3] sm:$0xf]
        %v392 = vld [vmem:[%s3 + $0x4] sm:$0xf]
        %v393 = vld [vmem:[%s3 + $0x8] sm:$0xf]
        %v394 = vld [vmem:[%s3 + $0xc] sm:$0xf]
        %v395 = vld [vmem:[%s3 + $0x10] sm:$0xf]
        %v396 = vld [vmem:[%s3 + $0x14] sm:$0xf]
        %v397 = vld [vmem:[%s3 + $0x18] sm:$0xf]
        %v398 = vld [vmem:[%s3 + $0x1c] sm:$0xf]
        %v399 = vld [vmem:[%s3 + $0x20] sm:$0xf]
        %v400 = vld [vmem:[%s3 + $0x24] sm:$0xf]
        %v401 = vld [vmem:[%s3 + $0x28] sm:$0xf]
        %v402 = vld [vmem:[%s3 + $0x2c] sm:$0xf]
        %v403 = vld [vmem:[%s3 + $0x30] sm:$0xf]
        %v404 = vld [vmem:[%s3 + $0x34] sm:$0xf]
        %v405 = vld [vmem:[%s3 + $0x38] sm:$0xf]
        %v406 = vld [vmem:[%s3 + $0x3c] sm:$0xf]
        %v409 = vunpack.c.l.b16 %v389
        %v410 = vunpack.c.l.b16 %v390
        %v411 = vpack.c.b16 %v410, %v409
        %v429 = vunpack.c.l.b16 %v391
        %v430 = vunpack.c.l.b16 %v392
        %v431 = vunpack.c.l.b16 %v393
        %v432 = vunpack.c.l.b16 %v394
        %v433 = vunpack.c.l.b16 %v395
        %v434 = vunpack.c.l.b16 %v396
        %v435 = vunpack.c.l.b16 %v397
        %v436 = vunpack.c.l.b16 %v398
        %v437 = vunpack.c.l.b16 %v399
        %v438 = vunpack.c.l.b16 %v400
        %v439 = vunpack.c.l.b16 %v401
        %v440 = vunpack.c.l.b16 %v402
        %v441 = vunpack.c.l.b16 %v403
        %v442 = vunpack.c.l.b16 %v404
        %v443 = vunpack.c.l.b16 %v405
        %v444 = vunpack.c.l.b16 %v406
        %v445 = vpack.c.b16 %v430, %v429
        %v446 = vpack.c.b16 %v432, %v431
        %v447 = vpack.c.b16 %v434, %v433
        %v448 = vpack.c.b16 %v436, %v435
        %v449 = vpack.c.b16 %v438, %v437
        %v450 = vpack.c.b16 %v440, %v439
        %v451 = vpack.c.b16 %v442, %v441
        %v452 = vpack.c.b16 %v444, %v443
        %461 = vmatprep.subr.bf16.mxu0 0
        %462 = vmatpush1.bf16.msra.mxu0 %v445
        %463 = vmatprep.subr.bf16.mxu0 0
        %464 = vmatpush1.bf16.msra.mxu0 %v446
        %465 = vmatprep.subr.bf16.mxu0 0
        %466 = vmatpush1.bf16.msra.mxu0 %v447
        %467 = vmatprep.subr.bf16.mxu0 0
        %468 = vmatpush1.bf16.msra.mxu0 %v448
        %469 = vmatprep.subr.bf16.mxu0 0
        %470 = vmatpush1.bf16.msra.mxu0 %v449
        %471 = vmatprep.subr.bf16.mxu0 0
        %472 = vmatpush1.bf16.msra.mxu0 %v450
        %473 = vmatprep.subr.bf16.mxu0 0
        %474 = vmatpush1.bf16.msra.mxu0 %v451
        %475 = vmatprep.subr.bf16.mxu0 0
        %476 = vmatpush1.bf16.msra.mxu0 %v452
        %477 = vmatprep.subr.bf16.mxu0 0
        %478 = vmatpush1.bf16.msra.mxu0 0
        %479 = vmatprep.subr.bf16.mxu0 0
        %480 = vmatpush1.bf16.msra.mxu0 0
        %481 = vmatprep.subr.bf16.mxu0 0
        %482 = vmatpush1.bf16.msra.mxu0 0
        %483 = vmatprep.subr.bf16.mxu0 0
        %484 = vmatpush1.bf16.msra.mxu0 0
        %485 = vmatprep.subr.bf16.mxu0 0
        %486 = vmatpush1.bf16.msra.mxu0 0
        %487 = vmatprep.subr.bf16.mxu0 0
        %488 = vmatpush1.bf16.msra.mxu0 0
        %489 = vmatprep.subr.bf16.mxu0 0
        %490 = vmatpush1.bf16.msra.mxu0 0
        %491 = vmatprep.subr.bf16.mxu0 0
        %492 = vmatpush1.bf16.msra.mxu0 0
        %493 = vmatprep.mubr.bf16.mxu0 0
        %494 = vmatmul.mubr.bf16.gmra.mrb[0].mxu0 %v411
        %v495 = vpop.f32.mrb[0].mxu0
        %v496 = vadd.f32 0.0, %v495
        %v497 = vpop.f32.mrb[0].mxu0
        %v498 = vpop.f32.mrb[0].mxu0
        %v499 = vadd.f32 0.0, %v498
        %v500 = vpop.f32.mrb[0].mxu0
        %501 = vdwg.mxu0
        %v502 = vld [vmem:[%s386] sm:$0x1]
        %v503 = vlaneseq
        %v504 = vshrl.u32 %v503, 7
        %v505 = vsub.s32 0, %v504
        %v506 = vrot.slane %v502, %v505
        %v507 = vmul.f32 %v496, %v506
        %v508 = vmul.f32 %v499, %v506
        %v509 = vld [vmem:[%s381] sm:$0xff]
        %v510 = vld [vmem:[%s381 + $0x8] sm:$0xff]
        %v511 = vadd.f32 %v507, %v509
        %v512 = vadd.f32 %v508, %v510
        %513 = vadd.xlane.f32.xlu0 %v511
        %v514 = vpop.xlane.xlu0 %513
        %515 = vadd.xlane.f32.xlu0 %v512
        %v516 = vpop.xlane.xlu0 %515
        %v517 = vrcp.pop 128.0
        %v518 = vmul.f32 %v514, %v517
        %v519 = vmul.f32 %v516, %v517
        %v520 = vsub.f32 %v511, %v518
        %v521 = vsub.f32 %v512, %v519
        %v522 = vmul.f32 %v520, %v520
        %v523 = vmul.f32 %v521, %v521
        %524 = vadd.xlane.f32.xlu0 %v522
        %v525 = vpop.xlane.xlu0 %524
        %526 = vadd.xlane.f32.xlu0 %v523
        %v527 = vpop.xlane.xlu0 %526
        %v528 = vmul.f32 %v525, %v517
        %v529 = vmul.f32 %v527, %v517
        %v530 = vadd.f32 %v528, 1e-05
        %v531 = vadd.f32 %v529, 1e-05
        %v532 = vrsqrt.pop %v530
        %v533 = vrsqrt.pop %v531
        %v534 = vmul.f32 %v520, %v532
        %v535 = vmul.f32 %v521, %v533
        %v536 = vld [vmem:[%s386 + $0x1] sm:$0x1]
        %v537 = vlaneseq
        %v538 = vshrl.u32 %v537, 7
        %v539 = vsub.s32 0, %v538
        %v540 = vrot.slane %v536, %v539
        %v541 = vmul.f32 %v534, %v540
        %v542 = vmul.f32 %v535, %v540
        %v543 = vld [vmem:[%s386 + $0x2] sm:$0x1]
        %v544 = vlaneseq
        %v545 = vshrl.u32 %v544, 7
        %v546 = vsub.s32 0, %v545
        %v547 = vrot.slane %v543, %v546
        %v548 = vadd.f32 %v541, %v547
        %v549 = vadd.f32 %v542, %v547
        %v550 = vpack.c.bf16 %v549, %v548
        %v551 = vld [vmem:[%s4] sm:$0xff]
        %v552 = vld [vmem:[%s4 + $0x8] sm:$0xff]
        %v553 = vld [vmem:[%s4 + $0x10] sm:$0xff]
        %v554 = vld [vmem:[%s4 + $0x18] sm:$0xff]
        %v555 = vld [vmem:[%s4 + $0x20] sm:$0xff]
        %v556 = vld [vmem:[%s4 + $0x28] sm:$0xff]
        %v557 = vld [vmem:[%s4 + $0x30] sm:$0xff]
        %v558 = vld [vmem:[%s4 + $0x38] sm:$0xff]
        %v559 = vld [vmem:[%s4 + $0x40] sm:$0xff]
        %v560 = vld [vmem:[%s4 + $0x48] sm:$0xff]
        %v561 = vld [vmem:[%s4 + $0x50] sm:$0xff]
        %v562 = vld [vmem:[%s4 + $0x58] sm:$0xff]
        %v563 = vld [vmem:[%s4 + $0x60] sm:$0xff]
        %v564 = vld [vmem:[%s4 + $0x68] sm:$0xff]
        %v565 = vld [vmem:[%s4 + $0x70] sm:$0xff]
        %v566 = vld [vmem:[%s4 + $0x78] sm:$0xff]
        %v567 = vld [vmem:[%s4 + $0x80] sm:$0xff]
        %v568 = vld [vmem:[%s4 + $0x88] sm:$0xff]
        %v569 = vld [vmem:[%s4 + $0x90] sm:$0xff]
        %v570 = vld [vmem:[%s4 + $0x98] sm:$0xff]
        %v571 = vld [vmem:[%s4 + $0xa0] sm:$0xff]
        %v572 = vld [vmem:[%s4 + $0xa8] sm:$0xff]
        %v573 = vld [vmem:[%s4 + $0xb0] sm:$0xff]
        %v574 = vld [vmem:[%s4 + $0xb8] sm:$0xff]
        %v575 = vld [vmem:[%s4 + $0xc0] sm:$0xff]
        %v576 = vld [vmem:[%s4 + $0xc8] sm:$0xff]
        %v577 = vld [vmem:[%s4 + $0xd0] sm:$0xff]
        %v578 = vld [vmem:[%s4 + $0xd8] sm:$0xff]
        %v579 = vld [vmem:[%s4 + $0xe0] sm:$0xff]
        %v580 = vld [vmem:[%s4 + $0xe8] sm:$0xff]
        %v581 = vld [vmem:[%s4 + $0xf0] sm:$0xff]
        %v582 = vld [vmem:[%s4 + $0xf8] sm:$0xff]
        %v583 = vld [vmem:[%s5] sm:$0xf]
        %v585 = vlaneseq
        %v586 = vshrl.u32 %v585, 7
        %v587 = vsub.s32 0, %v586
        %v588 = vrot.slane %v583, %v587
        %v589 = vlaneseq
        %v590 = vshrl.u32 %v589, 7
        %v591 = vsub.s32 1, %v590
        %v592 = vrot.slane %v583, %v591
        %v593 = vlaneseq
        %v594 = vshrl.u32 %v593, 7
        %v595 = vsub.s32 2, %v594
        %v596 = vrot.slane %v583, %v595
        %v597 = vlaneseq
        %v598 = vshrl.u32 %v597, 7
        %v599 = vsub.s32 3, %v598
        %v600 = vrot.slane %v583, %v599
        %v637 = vunpack.c.l.b16 %v551
        %v638 = vunpack.c.h.b16 %v551
        %v639 = vunpack.c.l.b16 %v552
        %v640 = vunpack.c.h.b16 %v552
        %v641 = vunpack.c.l.b16 %v553
        %v642 = vunpack.c.h.b16 %v553
        %v643 = vunpack.c.l.b16 %v554
        %v644 = vunpack.c.h.b16 %v554
        %v645 = vunpack.c.l.b16 %v555
        %v646 = vunpack.c.h.b16 %v555
        %v647 = vunpack.c.l.b16 %v556
        %v648 = vunpack.c.h.b16 %v556
        %v649 = vunpack.c.l.b16 %v557
        %v650 = vunpack.c.h.b16 %v557
        %v651 = vunpack.c.l.b16 %v558
        %v652 = vunpack.c.h.b16 %v558
        %v653 = vunpack.c.l.b16 %v559
        %v654 = vunpack.c.h.b16 %v559
        %v655 = vunpack.c.l.b16 %v560
        %v656 = vunpack.c.h.b16 %v560
        %v657 = vunpack.c.l.b16 %v561
        %v658 = vunpack.c.h.b16 %v561
        %v659 = vunpack.c.l.b16 %v562
        %v660 = vunpack.c.h.b16 %v562
        %v661 = vunpack.c.l.b16 %v563
        %v662 = vunpack.c.h.b16 %v563
        %v663 = vunpack.c.l.b16 %v564
        %v664 = vunpack.c.h.b16 %v564
        %v665 = vunpack.c.l.b16 %v565
        %v666 = vunpack.c.h.b16 %v565
        %v667 = vunpack.c.l.b16 %v566
        %v668 = vunpack.c.h.b16 %v566
        %v669 = vunpack.c.l.b16 %v567
        %v670 = vunpack.c.h.b16 %v567
        %v671 = vunpack.c.l.b16 %v568
        %v672 = vunpack.c.h.b16 %v568
        %v673 = vunpack.c.l.b16 %v569
        %v674 = vunpack.c.h.b16 %v569
        %v675 = vunpack.c.l.b16 %v570
        %v676 = vunpack.c.h.b16 %v570
        %v677 = vunpack.c.l.b16 %v571
        %v678 = vunpack.c.h.b16 %v571
        %v679 = vunpack.c.l.b16 %v572
        %v680 = vunpack.c.h.b16 %v572
        %v681 = vunpack.c.l.b16 %v573
        %v682 = vunpack.c.h.b16 %v573
        %v683 = vunpack.c.l.b16 %v574
        %v684 = vunpack.c.h.b16 %v574
        %v685 = vunpack.c.l.b16 %v575
        %v686 = vunpack.c.h.b16 %v575
        %v687 = vunpack.c.l.b16 %v576
        %v688 = vunpack.c.h.b16 %v576
        %v689 = vunpack.c.l.b16 %v577
        %v690 = vunpack.c.h.b16 %v577
        %v691 = vunpack.c.l.b16 %v578
        %v692 = vunpack.c.h.b16 %v578
        %v693 = vunpack.c.l.b16 %v579
        %v694 = vunpack.c.h.b16 %v579
        %v695 = vunpack.c.l.b16 %v580
        %v696 = vunpack.c.h.b16 %v580
        %v697 = vunpack.c.l.b16 %v581
        %v698 = vunpack.c.h.b16 %v581
        %v699 = vunpack.c.l.b16 %v582
        %v700 = vunpack.c.h.b16 %v582
        %v701 = vpack.c.b16 %v641, %v637
        %v702 = vpack.c.b16 %v642, %v638
        %v703 = vpack.c.b16 %v643, %v639
        %v704 = vpack.c.b16 %v644, %v640
        %v705 = vpack.c.b16 %v649, %v645
        %v706 = vpack.c.b16 %v650, %v646
        %v707 = vpack.c.b16 %v651, %v647
        %v708 = vpack.c.b16 %v652, %v648
        %v709 = vpack.c.b16 %v657, %v653
        %v710 = vpack.c.b16 %v658, %v654
        %v711 = vpack.c.b16 %v659, %v655
        %v712 = vpack.c.b16 %v660, %v656
        %v713 = vpack.c.b16 %v665, %v661
        %v714 = vpack.c.b16 %v666, %v662
        %v715 = vpack.c.b16 %v667, %v663
        %v716 = vpack.c.b16 %v668, %v664
        %v717 = vpack.c.b16 %v673, %v669
        %v718 = vpack.c.b16 %v674, %v670
        %v719 = vpack.c.b16 %v675, %v671
        %v720 = vpack.c.b16 %v676, %v672
        %v721 = vpack.c.b16 %v681, %v677
        %v722 = vpack.c.b16 %v682, %v678
        %v723 = vpack.c.b16 %v683, %v679
        %v724 = vpack.c.b16 %v684, %v680
        %v725 = vpack.c.b16 %v689, %v685
        %v726 = vpack.c.b16 %v690, %v686
        %v727 = vpack.c.b16 %v691, %v687
        %v728 = vpack.c.b16 %v692, %v688
        %v729 = vpack.c.b16 %v697, %v693
        %v730 = vpack.c.b16 %v698, %v694
        %v731 = vpack.c.b16 %v699, %v695
        %v732 = vpack.c.b16 %v700, %v696
        %765 = vmatprep.subr.bf16.mxu0 %v702
        %766 = vmatpush1.bf16.msra.mxu0 %v701
        %767 = vmatprep.subr.bf16.mxu0 %v706
        %768 = vmatpush1.bf16.msra.mxu0 %v705
        %769 = vmatprep.subr.bf16.mxu0 %v710
        %770 = vmatpush1.bf16.msra.mxu0 %v709
        %771 = vmatprep.subr.bf16.mxu0 %v714
        %772 = vmatpush1.bf16.msra.mxu0 %v713
        %773 = vmatprep.subr.bf16.mxu0 %v718
        %774 = vmatpush1.bf16.msra.mxu0 %v717
        %775 = vmatprep.subr.bf16.mxu0 %v722
        %776 = vmatpush1.bf16.msra.mxu0 %v721
        %777 = vmatprep.subr.bf16.mxu0 %v726
        %778 = vmatpush1.bf16.msra.mxu0 %v725
        %779 = vmatprep.subr.bf16.mxu0 %v730
        %780 = vmatpush1.bf16.msra.mxu0 %v729
        %781 = vmatprep.subr.bf16.mxu0 0
        %782 = vmatpush1.bf16.msra.mxu0 0
        %783 = vmatprep.subr.bf16.mxu0 0
        %784 = vmatpush1.bf16.msra.mxu0 0
        %785 = vmatprep.subr.bf16.mxu0 0
        %786 = vmatpush1.bf16.msra.mxu0 0
        %787 = vmatprep.subr.bf16.mxu0 0
        %788 = vmatpush1.bf16.msra.mxu0 0
        %789 = vmatprep.subr.bf16.mxu0 0
        %790 = vmatpush1.bf16.msra.mxu0 0
        %791 = vmatprep.subr.bf16.mxu0 0
        %792 = vmatpush1.bf16.msra.mxu0 0
        %793 = vmatprep.subr.bf16.mxu0 0
        %794 = vmatpush1.bf16.msra.mxu0 0
        %795 = vmatprep.subr.bf16.mxu0 0
        %796 = vmatpush1.bf16.msra.mxu0 0
        %797 = vmatprep.mubr.bf16.mxu0 0
        %798 = vmatmul.mubr.bf16.gmra.mrb[0].mxu0 %v550
        %v799 = vpop.f32.mrb[0].mxu0
        %v800 = vadd.f32 %v588, %v799
        %v801 = vpop.f32.mrb[0].mxu0
        %v802 = vadd.f32 %v592, %v801
        %v803 = vpop.f32.mrb[0].mxu0
        %v804 = vadd.f32 %v588, %v803
        %v805 = vpop.f32.mrb[0].mxu0
        %v806 = vadd.f32 %v592, %v805
        %807 = vdwg.mxu0
        %808 = vmatprep.subr.bf16.mxu0 %v704
        %809 = vmatpush1.bf16.msra.mxu0 %v703
        %810 = vmatprep.subr.bf16.mxu0 %v708
        %811 = vmatpush1.bf16.msra.mxu0 %v707
        %812 = vmatprep.subr.bf16.mxu0 %v712
        %813 = vmatpush1.bf16.msra.mxu0 %v711
        %814 = vmatprep.subr.bf16.mxu0 %v716
        %815 = vmatpush1.bf16.msra.mxu0 %v715
        %816 = vmatprep.subr.bf16.mxu0 %v720
        %817 = vmatpush1.bf16.msra.mxu0 %v719
        %818 = vmatprep.subr.bf16.mxu0 %v724
        %819 = vmatpush1.bf16.msra.mxu0 %v723
        %820 = vmatprep.subr.bf16.mxu0 %v728
        %821 = vmatpush1.bf16.msra.mxu0 %v727
        %822 = vmatprep.subr.bf16.mxu0 %v732
        %823 = vmatpush1.bf16.msra.mxu0 %v731
        %824 = vmatprep.subr.bf16.mxu0 0
        %825 = vmatpush1.bf16.msra.mxu0 0
        %826 = vmatprep.subr.bf16.mxu0 0
        %827 = vmatpush1.bf16.msra.mxu0 0
        %828 = vmatprep.subr.bf16.mxu0 0
        %829 = vmatpush1.bf16.msra.mxu0 0
        %830 = vmatprep.subr.bf16.mxu0 0
        %831 = vmatpush1.bf16.msra.mxu0 0
        %832 = vmatprep.subr.bf16.mxu0 0
        %833 = vmatpush1.bf16.msra.mxu0 0
        %834 = vmatprep.subr.bf16.mxu0 0
        %835 = vmatpush1.bf16.msra.mxu0 0
        %836 = vmatprep.subr.bf16.mxu0 0
        %837 = vmatpush1.bf16.msra.mxu0 0
        %838 = vmatprep.subr.bf16.mxu0 0
        %839 = vmatpush1.bf16.msra.mxu0 0
        %840 = vmatprep.mubr.bf16.mxu0 0
        %841 = vmatmul.mubr.bf16.gmra.mrb[0].mxu0 %v550
        %v842 = vpop.f32.mrb[0].mxu0
        %v843 = vadd.f32 %v596, %v842
        %v844 = vpop.f32.mrb[0].mxu0
        %v845 = vadd.f32 %v600, %v844
        %v846 = vpop.f32.mrb[0].mxu0
        %v847 = vadd.f32 %v596, %v846
        %v848 = vpop.f32.mrb[0].mxu0
        %v849 = vadd.f32 %v600, %v848
        %850 = vdwg.mxu0
        %v851 = vmul.f32 %v800, 0.5
        %v852 = vmul.f32 %v802, 0.5
        %v853 = vmul.f32 %v843, 0.5
        %v854 = vmul.f32 %v845, 0.5
        %v855 = vmul.f32 %v804, 0.5
        %v856 = vmul.f32 %v806, 0.5
        %v857 = vmul.f32 %v847, 0.5
        %v858 = vmul.f32 %v849, 0.5
        %v859 = vmul.f32 %v800, 0.044715
        %v860 = vmul.f32 %v802, 0.044715
        %v861 = vmul.f32 %v843, 0.044715
        %v862 = vmul.f32 %v845, 0.044715
        %v863 = vmul.f32 %v804, 0.044715
        %v864 = vmul.f32 %v806, 0.044715
        %v865 = vmul.f32 %v847, 0.044715
        %v866 = vmul.f32 %v849, 0.044715
        %v867 = vmul.f32 %v859, %v800
        %v868 = vmul.f32 %v860, %v802
        %v869 = vmul.f32 %v861, %v843
        %v870 = vmul.f32 %v862, %v845
        %v871 = vmul.f32 %v863, %v804
        %v872 = vmul.f32 %v864, %v806
        %v873 = vmul.f32 %v865, %v847
        %v874 = vmul.f32 %v866, %v849
        %v875 = vmul.f32 %v867, %v800
        %v876 = vmul.f32 %v868, %v802
        %v877 = vmul.f32 %v869, %v843
        %v878 = vmul.f32 %v870, %v845
        %v879 = vmul.f32 %v871, %v804
        %v880 = vmul.f32 %v872, %v806
        %v881 = vmul.f32 %v873, %v847
        %v882 = vmul.f32 %v874, %v849
        %v883 = vadd.f32 %v800, %v875
        %v884 = vadd.f32 %v802, %v876
        %v885 = vadd.f32 %v843, %v877
        %v886 = vadd.f32 %v845, %v878
        %v887 = vadd.f32 %v804, %v879
        %v888 = vadd.f32 %v806, %v880
        %v889 = vadd.f32 %v847, %v881
        %v890 = vadd.f32 %v849, %v882
        %v891 = vmul.f32 %v883, 0.7978846
        %v892 = vmul.f32 %v884, 0.7978846
        %v893 = vmul.f32 %v885, 0.7978846
        %v894 = vmul.f32 %v886, 0.7978846
        %v895 = vmul.f32 %v887, 0.7978846
        %v896 = vmul.f32 %v888, 0.7978846
        %v897 = vmul.f32 %v889, 0.7978846
        %v898 = vmul.f32 %v890, 0.7978846
        %v899 = vtanh.pop %v891
        %v900 = vtanh.pop %v892
        %v901 = vtanh.pop %v893
        %v902 = vtanh.pop %v894
        %v903 = vtanh.pop %v895
        %v904 = vtanh.pop %v896
        %v905 = vtanh.pop %v897
        %v906 = vtanh.pop %v898
        %v907 = vadd.f32 %v899, 1.0
        %v908 = vadd.f32 %v900, 1.0
        %v909 = vadd.f32 %v901, 1.0
        %v910 = vadd.f32 %v902, 1.0
        %v911 = vadd.f32 %v903, 1.0
        %v912 = vadd.f32 %v904, 1.0
        %v913 = vadd.f32 %v905, 1.0
        %v914 = vadd.f32 %v906, 1.0
        %v915 = vmul.f32 %v851, %v907
        %v916 = vmul.f32 %v852, %v908
        %v917 = vmul.f32 %v853, %v909
        %v918 = vmul.f32 %v854, %v910
        %v919 = vmul.f32 %v855, %v911
        %v920 = vmul.f32 %v856, %v912
        %v921 = vmul.f32 %v857, %v913
        %v922 = vmul.f32 %v858, %v914
        %v923 = vpack.c.bf16 %v919, %v915
        %v924 = vpack.c.bf16 %v920, %v916
        %v925 = vpack.c.bf16 %v921, %v917
        %v926 = vpack.c.bf16 %v922, %v918
        %v927 = vld [vmem:[%s6] sm:$0xf]
        %v928 = vld [vmem:[%s6 + $0x4] sm:$0xf]
        %v929 = vld [vmem:[%s6 + $0x8] sm:$0xf]
        %v930 = vld [vmem:[%s6 + $0xc] sm:$0xf]
        %v931 = vld [vmem:[%s6 + $0x10] sm:$0xf]
        %v932 = vld [vmem:[%s6 + $0x14] sm:$0xf]
        %v933 = vld [vmem:[%s6 + $0x18] sm:$0xf]
        %v934 = vld [vmem:[%s6 + $0x1c] sm:$0xf]
        %v935 = vld [vmem:[%s6 + $0x20] sm:$0xf]
        %v936 = vld [vmem:[%s6 + $0x24] sm:$0xf]
        %v937 = vld [vmem:[%s6 + $0x28] sm:$0xf]
        %v938 = vld [vmem:[%s6 + $0x2c] sm:$0xf]
        %v939 = vld [vmem:[%s6 + $0x30] sm:$0xf]
        %v940 = vld [vmem:[%s6 + $0x34] sm:$0xf]
        %v941 = vld [vmem:[%s6 + $0x38] sm:$0xf]
        %v942 = vld [vmem:[%s6 + $0x3c] sm:$0xf]
        %v943 = vld [vmem:[%s6 + $0x40] sm:$0xf]
        %v944 = vld [vmem:[%s6 + $0x44] sm:$0xf]
        %v945 = vld [vmem:[%s6 + $0x48] sm:$0xf]
        %v946 = vld [vmem:[%s6 + $0x4c] sm:$0xf]
        %v947 = vld [vmem:[%s6 + $0x50] sm:$0xf]
        %v948 = vld [vmem:[%s6 + $0x54] sm:$0xf]
        %v949 = vld [vmem:[%s6 + $0x58] sm:$0xf]
        %v950 = vld [vmem:[%s6 + $0x5c] sm:$0xf]
        %v951 = vld [vmem:[%s6 + $0x60] sm:$0xf]
        %v952 = vld [vmem:[%s6 + $0x64] sm:$0xf]
        %v953 = vld [vmem:[%s6 + $0x68] sm:$0xf]
        %v954 = vld [vmem:[%s6 + $0x6c] sm:$0xf]
        %v955 = vld [vmem:[%s6 + $0x70] sm:$0xf]
        %v956 = vld [vmem:[%s6 + $0x74] sm:$0xf]
        %v957 = vld [vmem:[%s6 + $0x78] sm:$0xf]
        %v958 = vld [vmem:[%s6 + $0x7c] sm:$0xf]
        %v959 = vld [vmem:[%s6 + $0x80] sm:$0xf]
        %v960 = vld [vmem:[%s6 + $0x84] sm:$0xf]
        %v961 = vld [vmem:[%s6 + $0x88] sm:$0xf]
        %v962 = vld [vmem:[%s6 + $0x8c] sm:$0xf]
        %v963 = vld [vmem:[%s6 + $0x90] sm:$0xf]
        %v964 = vld [vmem:[%s6 + $0x94] sm:$0xf]
        %v965 = vld [vmem:[%s6 + $0x98] sm:$0xf]
        %v966 = vld [vmem:[%s6 + $0x9c] sm:$0xf]
        %v967 = vld [vmem:[%s6 + $0xa0] sm:$0xf]
        %v968 = vld [vmem:[%s6 + $0xa4] sm:$0xf]
        %v969 = vld [vmem:[%s6 + $0xa8] sm:$0xf]
        %v970 = vld [vmem:[%s6 + $0xac] sm:$0xf]
        %v971 = vld [vmem:[%s6 + $0xb0] sm:$0xf]
        %v972 = vld [vmem:[%s6 + $0xb4] sm:$0xf]
        %v973 = vld [vmem:[%s6 + $0xb8] sm:$0xf]
        %v974 = vld [vmem:[%s6 + $0xbc] sm:$0xf]
        %v975 = vld [vmem:[%s6 + $0xc0] sm:$0xf]
        %v976 = vld [vmem:[%s6 + $0xc4] sm:$0xf]
        %v977 = vld [vmem:[%s6 + $0xc8] sm:$0xf]
        %v978 = vld [vmem:[%s6 + $0xcc] sm:$0xf]
        %v979 = vld [vmem:[%s6 + $0xd0] sm:$0xf]
        %v980 = vld [vmem:[%s6 + $0xd4] sm:$0xf]
        %v981 = vld [vmem:[%s6 + $0xd8] sm:$0xf]
        %v982 = vld [vmem:[%s6 + $0xdc] sm:$0xf]
        %v983 = vld [vmem:[%s6 + $0xe0] sm:$0xf]
        %v984 = vld [vmem:[%s6 + $0xe4] sm:$0xf]
        %v985 = vld [vmem:[%s6 + $0xe8] sm:$0xf]
        %v986 = vld [vmem:[%s6 + $0xec] sm:$0xf]
        %v987 = vld [vmem:[%s6 + $0xf0] sm:$0xf]
        %v988 = vld [vmem:[%s6 + $0xf4] sm:$0xf]
        %v989 = vld [vmem:[%s6 + $0xf8] sm:$0xf]
        %v990 = vld [vmem:[%s6 + $0xfc] sm:$0xf]
        %v991 = vld [vmem:[%s7] sm:$0x1]
        %v993 = vlaneseq
        %v994 = vshrl.u32 %v993, 7
        %v995 = vsub.s32 0, %v994
        %v996 = vrot.slane %v991, %v995
        %v1062 = vunpack.c.l.b16 %v927
        %v1063 = vunpack.c.l.b16 %v928
        %v1064 = vunpack.c.l.b16 %v929
        %v1065 = vunpack.c.l.b16 %v930
        %v1066 = vunpack.c.l.b16 %v931
        %v1067 = vunpack.c.l.b16 %v932
        %v1068 = vunpack.c.l.b16 %v933
        %v1069 = vunpack.c.l.b16 %v934
        %v1070 = vunpack.c.l.b16 %v935
        %v1071 = vunpack.c.l.b16 %v936
        %v1072 = vunpack.c.l.b16 %v937
        %v1073 = vunpack.c.l.b16 %v938
        %v1074 = vunpack.c.l.b16 %v939
        %v1075 = vunpack.c.l.b16 %v940
        %v1076 = vunpack.c.l.b16 %v941
        %v1077 = vunpack.c.l.b16 %v942
        %v1078 = vunpack.c.l.b16 %v943
        %v1079 = vunpack.c.l.b16 %v944
        %v1080 = vunpack.c.l.b16 %v945
        %v1081 = vunpack.c.l.b16 %v946
        %v1082 = vunpack.c.l.b16 %v947
        %v1083 = vunpack.c.l.b16 %v948
        %v1084 = vunpack.c.l.b16 %v949
        %v1085 = vunpack.c.l.b16 %v950
        %v1086 = vunpack.c.l.b16 %v951
        %v1087 = vunpack.c.l.b16 %v952
        %v1088 = vunpack.c.l.b16 %v953
        %v1089 = vunpack.c.l.b16 %v954
        %v1090 = vunpack.c.l.b16 %v955
        %v1091 = vunpack.c.l.b16 %v956
        %v1092 = vunpack.c.l.b16 %v957
        %v1093 = vunpack.c.l.b16 %v958
        %v1094 = vunpack.c.l.b16 %v959
        %v1095 = vunpack.c.l.b16 %v960
        %v1096 = vunpack.c.l.b16 %v961
        %v1097 = vunpack.c.l.b16 %v962
        %v1098 = vunpack.c.l.b16 %v963
        %v1099 = vunpack.c.l.b16 %v964
        %v1100 = vunpack.c.l.b16 %v965
        %v1101 = vunpack.c.l.b16 %v966
        %v1102 = vunpack.c.l.b16 %v967
        %v1103 = vunpack.c.l.b16 %v968
        %v1104 = vunpack.c.l.b16 %v969
        %v1105 = vunpack.c.l.b16 %v970
        %v1106 = vunpack.c.l.b16 %v971
        %v1107 = vunpack.c.l.b16 %v972
        %v1108 = vunpack.c.l.b16 %v973
        %v1109 = vunpack.c.l.b16 %v974
        %v1110 = vunpack.c.l.b16 %v975
        %v1111 = vunpack.c.l.b16 %v976
        %v1112 = vunpack.c.l.b16 %v977
        %v1113 = vunpack.c.l.b16 %v978
        %v1114 = vunpack.c.l.b16 %v979
        %v1115 = vunpack.c.l.b16 %v980
        %v1116 = vunpack.c.l.b16 %v981
        %v1117 = vunpack.c.l.b16 %v982
        %v1118 = vunpack.c.l.b16 %v983
        %v1119 = vunpack.c.l.b16 %v984
        %v1120 = vunpack.c.l.b16 %v985
        %v1121 = vunpack.c.l.b16 %v986
        %v1122 = vunpack.c.l.b16 %v987
        %v1123 = vunpack.c.l.b16 %v988
        %v1124 = vunpack.c.l.b16 %v989
        %v1125 = vunpack.c.l.b16 %v990
        %v1126 = vpack.c.b16 %v1063, %v1062
        %v1127 = vpack.c.b16 %v1065, %v1064
        %v1128 = vpack.c.b16 %v1067, %v1066
        %v1129 = vpack.c.b16 %v1069, %v1068
        %v1130 = vpack.c.b16 %v1071, %v1070
        %v1131 = vpack.c.b16 %v1073, %v1072
        %v1132 = vpack.c.b16 %v1075, %v1074
        %v1133 = vpack.c.b16 %v1077, %v1076
        %v1134 = vpack.c.b16 %v1079, %v1078
        %v1135 = vpack.c.b16 %v1081, %v1080
        %v1136 = vpack.c.b16 %v1083, %v1082
        %v1137 = vpack.c.b16 %v1085, %v1084
        %v1138 = vpack.c.b16 %v1087, %v1086
        %v1139 = vpack.c.b16 %v1089, %v1088
        %v1140 = vpack.c.b16 %v1091, %v1090
        %v1141 = vpack.c.b16 %v1093, %v1092
        %v1142 = vpack.c.b16 %v1095, %v1094
        %v1143 = vpack.c.b16 %v1097, %v1096
        %v1144 = vpack.c.b16 %v1099, %v1098
        %v1145 = vpack.c.b16 %v1101, %v1100
        %v1146 = vpack.c.b16 %v1103, %v1102
        %v1147 = vpack.c.b16 %v1105, %v1104
        %v1148 = vpack.c.b16 %v1107, %v1106
        %v1149 = vpack.c.b16 %v1109, %v1108
        %v1150 = vpack.c.b16 %v1111, %v1110
        %v1151 = vpack.c.b16 %v1113, %v1112
        %v1152 = vpack.c.b16 %v1115, %v1114
        %v1153 = vpack.c.b16 %v1117, %v1116
        %v1154 = vpack.c.b16 %v1119, %v1118
        %v1155 = vpack.c.b16 %v1121, %v1120
        %v1156 = vpack.c.b16 %v1123, %v1122
        %v1157 = vpack.c.b16 %v1125, %v1124
        %1190 = vmatprep.subr.bf16.mxu0 0
        %1191 = vmatpush1.bf16.msra.mxu0 %v1126
        %1192 = vmatprep.subr.bf16.mxu0 0
        %1193 = vmatpush1.bf16.msra.mxu0 %v1127
        %1194 = vmatprep.subr.bf16.mxu0 0
        %1195 = vmatpush1.bf16.msra.mxu0 %v1128
        %1196 = vmatprep.subr.bf16.mxu0 0
        %1197 = vmatpush1.bf16.msra.mxu0 %v1129
        %1198 = vmatprep.subr.bf16.mxu0 0
        %1199 = vmatpush1.bf16.msra.mxu0 %v1130
        %1200 = vmatprep.subr.bf16.mxu0 0
        %1201 = vmatpush1.bf16.msra.mxu0 %v1131
        %1202 = vmatprep.subr.bf16.mxu0 0
        %1203 = vmatpush1.bf16.msra.mxu0 %v1132
        %1204 = vmatprep.subr.bf16.mxu0 0
        %1205 = vmatpush1.bf16.msra.mxu0 %v1133
        %1206 = vmatprep.subr.bf16.mxu0 0
        %1207 = vmatpush1.bf16.msra.mxu0 %v1134
        %1208 = vmatprep.subr.bf16.mxu0 0
        %1209 = vmatpush1.bf16.msra.mxu0 %v1135
        %1210 = vmatprep.subr.bf16.mxu0 0
        %1211 = vmatpush1.bf16.msra.mxu0 %v1136
        %1212 = vmatprep.subr.bf16.mxu0 0
        %1213 = vmatpush1.bf16.msra.mxu0 %v1137
        %1214 = vmatprep.subr.bf16.mxu0 0
        %1215 = vmatpush1.bf16.msra.mxu0 %v1138
        %1216 = vmatprep.subr.bf16.mxu0 0
        %1217 = vmatpush1.bf16.msra.mxu0 %v1139
        %1218 = vmatprep.subr.bf16.mxu0 0
        %1219 = vmatpush1.bf16.msra.mxu0 %v1140
        %1220 = vmatprep.subr.bf16.mxu0 0
        %1221 = vmatpush1.bf16.msra.mxu0 %v1141
        %1222 = vmatprep.mubr.bf16.mxu0 %v924
        %1223 = vmatmul.mubr.bf16.gmra.mrb[0].mxu0 %v923
        %v1224 = vpop.f32.mrb[0].mxu0
        %v1225 = vadd.f32 %v996, %v1224
        %v1226 = vpop.f32.mrb[0].mxu0
        %v1227 = vpop.f32.mrb[0].mxu0
        %v1228 = vadd.f32 %v996, %v1227
        %v1229 = vpop.f32.mrb[0].mxu0
        %1230 = vdwg.mxu0
        %1231 = vmatprep.subr.bf16.mxu0 0
        %1232 = vmatpush1.bf16.msra.mxu0 %v1142
        %1233 = vmatprep.subr.bf16.mxu0 0
        %1234 = vmatpush1.bf16.msra.mxu0 %v1143
        %1235 = vmatprep.subr.bf16.mxu0 0
        %1236 = vmatpush1.bf16.msra.mxu0 %v1144
        %1237 = vmatprep.subr.bf16.mxu0 0
        %1238 = vmatpush1.bf16.msra.mxu0 %v1145
        %1239 = vmatprep.subr.bf16.mxu0 0
        %1240 = vmatpush1.bf16.msra.mxu0 %v1146
        %1241 = vmatprep.subr.bf16.mxu0 0
        %1242 = vmatpush1.bf16.msra.mxu0 %v1147
        %1243 = vmatprep.subr.bf16.mxu0 0
        %1244 = vmatpush1.bf16.msra.mxu0 %v1148
        %1245 = vmatprep.subr.bf16.mxu0 0
        %1246 = vmatpush1.bf16.msra.mxu0 %v1149
        %1247 = vmatprep.subr.bf16.mxu0 0
        %1248 = vmatpush1.bf16.msra.mxu0 %v1150
        %1249 = vmatprep.subr.bf16.mxu0 0
        %1250 = vmatpush1.bf16.msra.mxu0 %v1151
        %1251 = vmatprep.subr.bf16.mxu0 0
        %1252 = vmatpush1.bf16.msra.mxu0 %v1152
        %1253 = vmatprep.subr.bf16.mxu0 0
        %1254 = vmatpush1.bf16.msra.mxu0 %v1153
        %1255 = vmatprep.subr.bf16.mxu0 0
        %1256 = vmatpush1.bf16.msra.mxu0 %v1154
        %1257 = vmatprep.subr.bf16.mxu0 0
        %1258 = vmatpush1.bf16.msra.mxu0 %v1155
        %1259 = vmatprep.subr.bf16.mxu0 0
        %1260 = vmatpush1.bf16.msra.mxu0 %v1156
        %1261 = vmatprep.subr.bf16.mxu0 0
        %1262 = vmatpush1.bf16.msra.mxu0 %v1157
        %1263 = vmatprep.mubr.bf16.mxu0 %v926
        %1264 = vmatmul.mubr.bf16.gmra.mrb[0].mxu0 %v925
        %v1265 = vpop.f32.mrb[0].mxu0
        %v1266 = vadd.f32 %v1225, %v1265
        %v1267 = vpop.f32.mrb[0].mxu0
        %v1268 = vpop.f32.mrb[0].mxu0
        %v1269 = vadd.f32 %v1228, %v1268
        %v1270 = vpop.f32.mrb[0].mxu0
        %1271 = vdwg.mxu0
        %v1272 = vld [vmem:[%s386 + $0x3] sm:$0x1]
        %v1273 = vlaneseq
        %v1274 = vshrl.u32 %v1273, 7
        %v1275 = vsub.s32 0, %v1274
        %v1276 = vrot.slane %v1272, %v1275
        %v1277 = vmul.f32 %v1266, %v1276
        %v1278 = vmul.f32 %v1269, %v1276
        %v1279 = vadd.f32 %v1277, %v511
        %v1280 = vadd.f32 %v1278, %v512
        %1281 = vst [vmem:[%s362] sm:$0xff] %v1279
        %1282 = vst [vmem:[%s362 + $0x8] sm:$0xff] %v1280
        %s1283 = sand.u32 %s231, 1
        %s1284 = scalar_lea.sflag [#allocation3], %s1283
        %s1285 = sand.u32 %s231, 1
        %s1286 = smul.addr %s1285, 16
        %s1287 = scalar_lea.vmem [#allocation2], %s1286
        // Predicated region
        $region53: #{ddit_block.5} parent=51 // pred_check
          %p1288 = pneg %p241
        $region54: #{ddit_block.5} parent=51 // pred_check_branch
          %1290 = sbr.rel (%p1288) target = $region56
        $region55: #{ddit_block.5} parent=51 // pred_region
          %s1291 = smul.u32 2, %s26
          %s1293 = ssub.s32 256, 256
          %1294 = vsyncadd %s1284, %s1293
          %s1295 = smul.addr %s27, 2
          %s1296 = sadd.s32 %s1291, %s1295
          %s1297 = smul.addr %s1296, 128
          %s1298 = scalar_lea.hbm %s8, %s1297
          %s1299 = sshll.u32 %s1287, 4
          %s1300 = int_to_ptr.vmem [resolvable:$true] %s1299
          %1305 = dma.vmem_to_hbm [thread:$0]  %s1300, 256, %s1298, %s1284, 128, 128, 8
        $region56: #{ddit_block.5} parent=51 // pred_fallthru
          _
      $region52: #{ddit_block.5} parent=5 // pred_fallthru
        _
      %p1306 = scmp.le.s32.totalorder 2, %s17
      // Predicated region
      $region57: #{ddit_block.5} parent=5 // pred_check
        %p1307 = pneg %p1306
      $region58: #{ddit_block.5} parent=5 // pred_check_branch
        %1309 = sbr.rel (%p1307) target = $region60
      $region59: #{ddit_block.5} parent=5 // pred_region
        %s1310 = ssub.s32 %s17, 2
        // Predicated region
        $region61: #{ddit_block.5} parent=59 // pred_check
          %p1311 = pneg %p247
        $region62: #{ddit_block.5} parent=59 // pred_check_branch
          %1313 = sbr.rel (%p1311) target = $region64
        $region63: #{ddit_block.5} parent=59 // pred_region
          %s1314 = sand.u32 %s232, 1
          %s1315 = scalar_lea.sflag [#allocation3], %s1314
          %s1316 = sand.u32 %s232, 1
          %s1317 = smul.addr %s1316, 16
          %s1318 = scalar_lea.vmem [#allocation2], %s1317
          %1319 = dma.done %s1315, 256
        $region64: #{ddit_block.5} parent=59 // pred_fallthru
          _
      $region60: #{ddit_block.5} parent=5 // pred_fallthru
        _
    $region6: #{ddit_block.5} parent=1 // loop_footer
      %s21 = sadd.s32 1, %s17
    $region7: #{ddit_block.5} parent=1 // loop_footer_branch
      %16 = sbr.rel target = $region3
    $region8: #{ddit_block.5} parent=1 // loop_exit
      _
    %1320 = vsyncpa [#allocation3], 1
    %s1321 = scalar_lea.sflag [#allocation3], 1
    %1322 = vsyncpa %s1321, 1

</llo_original>
